<compile_context>
chip_gen: v7x
topology: tpu7x:2x2x1
jax: 0.10.0
libtpu: 0.0.40
codegen_flags: <defaults>
</compile_context>

<pallas_src>
import functools

import jax
import jax.numpy as jnp
from jax.experimental import pallas as pl
from jax.experimental.pallas import tpu as pltpu

EPS = 1e-5


def _bn_relu(yv, gamma, beta):
    """Training-mode BatchNorm1d (biased var, eps=1e-5) + ReLU for one view."""
    mean = jnp.mean(yv, axis=0, keepdims=True)
    yc = yv - mean                                    # reused for the variance
    var = jnp.mean(yc * yc, axis=0, keepdims=True)
    scale = jax.lax.rsqrt(var + EPS) * gamma          # rsqrt -> EUP slot
    return jnp.maximum(yc * scale + beta, 0.0)        # folded affine: 2 VPU ops


def simsiam_kernel(n, dims,
                   x1_ref, x2_ref,
                   we_ref, pw1_ref, pw2_ref, qw1_ref, qw2_ref, vec_ref,
                   p_ref, z_ref, h_scr):
    enc_dim, hidden, proj = dims

    # --- unpack the single packed f32 parameter row (static lane slices) ----
    off = 0

    def take(width):
        nonlocal off
        v = vec_ref[:, off:off + width]
        off += width
        return v

    be = take(enc_dim)                                # encoder bias
    pg, pbt, pb2 = take(hidden), take(hidden), take(proj)   # projector BN + fc2 bias
    qg, qbt, qb2 = take(hidden), take(hidden), take(proj)   # predictor BN + fc2 bias

    # --- stack the two views in VMEM (no HBM round trip), cast for the MXU --
    # (At production in_dim this copy would be avoided by gridding over views
    #  or running the encoder matmul per view; trivial at these sizes.)
    x = jnp.concatenate([x1_ref[...], x2_ref[...]], axis=0).astype(jnp.bfloat16)

    # Encoder backbone (deterministic linear): one M = 2N matmul.
    feat = jnp.dot(x, we_ref[...], preferred_element_type=jnp.float32) + be

    def mlp_head(inp_f32, w1_ref, w2_ref, gamma, beta, b2, out_ref):
        # Linear (no bias: pre-BN bias is mathematically dead), bf16 MXU
        # operands, f32 accumulation.
        y = jnp.dot(inp_f32.astype(jnp.bfloat16), w1_ref[...],
                    preferred_element_type=jnp.float32)
        # Per-view BatchNorm1d + ReLU, written into the bf16 VMEM scratch
        # (no in-kernel concatenate).
        for v in range(2):
            h = _bn_relu(y[v * n:(v + 1) * n], gamma, beta)
            h_scr[v * n:(v + 1) * n, :] = h.astype(jnp.bfloat16)
        # Linear on the full stacked M = 2N block.
        out = jnp.dot(h_scr[...], w2_ref[...],
                      preferred_element_type=jnp.float32) + b2
        out_ref[...] = out
        return out

    # Projector MLPHead -> z (rows [0:N) = z1, [N:2N) = z2).
    z = mlp_head(feat, pw1_ref, pw2_ref, pg, pbt, pb2, z_ref)
    # Predictor MLPHead -> p.
    mlp_head(z, qw1_ref, qw2_ref, qg, qbt, qb2, p_ref)


def simsiam_forward(x1, x2, params):
    n = x1.shape[0]
    # Flatten only (layout-preserving reshape => no HBM copy, no wrapper cast).
    x1f = x1.reshape(n, -1)
    x2f = x2.reshape(n, -1)

    we, pw1, pw2, qw1, qw2, vec = params              # weights already bf16
    in_dim, enc_dim = we.shape
    hidden = pw1.shape[1]
    proj = pw2.shape[1]
    m = 2 * n

    flops = 2 * m * (in_dim * enc_dim
                     + enc_dim * hidden + hidden * proj      # projector
                     + proj * hidden + hidden * proj)        # predictor
    weight_elems = (in_dim * enc_dim + enc_dim * hidden + hidden * proj
                    + proj * hidden + hidden * proj)
    bytes_accessed = (4 * 2 * n * in_dim                     # f32 inputs
                      + 2 * weight_elems                     # bf16 weights
                      + 4 * vec.size                         # packed f32 vec
                      + 4 * 2 * m * proj)                    # f32 p and z out
    cost = pl.CostEstimate(flops=flops,
                           transcendentals=4 * hidden,       # rsqrt / BN feat
                           bytes_accessed=bytes_accessed)

    vmem = pl.BlockSpec(memory_space=pltpu.MemorySpace.VMEM)
    p, z = pl.pallas_call(
        functools.partial(simsiam_kernel, n, (enc_dim, hidden, proj)),
        out_shape=(jax.ShapeDtypeStruct((m, proj), jnp.float32),   # p stacked
                   jax.ShapeDtypeStruct((m, proj), jnp.float32)),  # z stacked
        in_specs=[vmem] * 8,
        out_specs=(vmem, vmem),
        scratch_shapes=[pltpu.VMEM((m, hidden), jnp.bfloat16)],    # BN+ReLU buf
        compiler_params=pltpu.CompilerParams(
            vmem_limit_bytes=32 * 1024 * 1024),
        cost_estimate=cost,
    )(x1f, x2f, we, pw1, pw2, qw1, qw2, vec)

    p1, p2 = p[:n], p[n:]
    z1, z2 = z[:n], z[n:]
    # .detach() -> stop_gradient (forward values unchanged)
    return p1, p2, jax.lax.stop_gradient(z1), jax.lax.stop_gradient(z2)


def init_params(key, in_dim, enc_dim, hidden_dim, proj_dim):
    """PyTorch-style init; MXU weights stored persistently in bf16, small
    vectors packed into a single f32 row (pre-BN fc1 biases dropped: dead)."""
    def linear(k, din, dout, with_bias=True):
        kw, kb = jax.random.split(k)
        bound = 1.0 / (din ** 0.5)
        w = jax.random.uniform(kw, (din, dout), jnp.float32, -bound, bound)
        b = (jax.random.uniform(kb, (dout,), jnp.float32, -bound, bound)
             if with_bias else None)
        return w, b

    keys = jax.random.split(key, 5)
    we, be = linear(keys[0], in_dim, enc_dim)                  # encoder backbone
    pw1, _ = linear(keys[1], enc_dim, hidden_dim, False)       # projector fc1
    pw2, pb2 = linear(keys[2], hidden_dim, proj_dim)           # projector fc2
    qw1, _ = linear(keys[3], proj_dim, hidden_dim, False)      # predictor fc1
    qw2, qb2 = linear(keys[4], hidden_dim, proj_dim)           # predictor fc2

    pg = jnp.ones((hidden_dim,), jnp.float32)                  # projector BN
    pbt = jnp.zeros((hidden_dim,), jnp.float32)
    qg = jnp.ones((hidden_dim,), jnp.float32)                  # predictor BN
    qbt = jnp.zeros((hidden_dim,), jnp.float32)

    vec = jnp.concatenate([be, pg, pbt, pb2, qg, qbt, qb2])[None, :]
    bf = lambda w: w.astype(jnp.bfloat16)
    return (bf(we), bf(pw1), bf(pw2), bf(qw1), bf(qw2),
            vec.astype(jnp.float32))


if __name__ == "__main__":
    # Small, TPU-friendly shapes: N=32 per view (stacked M=64, multiple of the
    # bf16 sublane tile 16); head dims match the PyTorch module defaults
    # (hidden=512, proj=256), all feature dims multiples of 128 (proj/hidden
    # multiples of 256 for the v6e/v7x MXU N-dim).
    N, C, H, W = 32, 4, 8, 8          # NCHW images -> flattened in_dim = 256
    ENC_DIM = 256                     # encoder.output_dim
    HIDDEN_DIM = 512                  # MLPHead hidden_dim (module default)
    PROJ_DIM = 256                    # projection_dim   (module default)

    key = jax.random.PRNGKey(0)
    kx1, kx2, kp = jax.random.split(key, 3)
    x1 = jax.random.normal(kx1, (N, C, H, W), jnp.float32)
    x2 = jax.random.normal(kx2, (N, C, H, W), jnp.float32)
    params = init_params(kp, C * H * W, ENC_DIM, HIDDEN_DIM, PROJ_DIM)

    p1, p2, z1, z2 = jax.jit(simsiam_forward)(x1, x2, params)
    jax.block_until_ready((p1, p2, z1, z2))

    assert p1.shape == (N, PROJ_DIM) and p2.shape == (N, PROJ_DIM)
    assert z1.shape == (N, PROJ_DIM) and z2.shape == (N, PROJ_DIM)
    print("KERNEL_OK")
</pallas_src>

<mosaic_0001>
module attributes {stable_mosaic.version = 11 : i64} {
  func.func @simsiam_kernel(%arg0: memref<32x256xf32, #tpu.memory_space<vmem>>, %arg1: memref<32x256xf32, #tpu.memory_space<vmem>>, %arg2: memref<256x256xbf16, #tpu.memory_space<vmem>>, %arg3: memref<256x512xbf16, #tpu.memory_space<vmem>>, %arg4: memref<512x256xbf16, #tpu.memory_space<vmem>>, %arg5: memref<256x512xbf16, #tpu.memory_space<vmem>>, %arg6: memref<512x256xbf16, #tpu.memory_space<vmem>>, %arg7: memref<1x2816xf32, #tpu.memory_space<vmem>>, %arg8: memref<64x256xf32, #tpu.memory_space<vmem>>, %arg9: memref<64x256xf32, #tpu.memory_space<vmem>>, %arg10: memref<64x512xbf16, #tpu.memory_space<vmem>>) attributes {dimension_semantics = [], scalar_prefetch = 0 : i64, scratch_operands = 1 : i64, tpu.core_type = #tpu.core_type<tc>} {
    %c0 = arith.constant 0 : index
    %c0_0 = arith.constant 0 : index
    %0 = vector.load %arg7[%c0, %c0_0] : memref<1x2816xf32, #tpu.memory_space<vmem>>, vector<1x256xf32>
    %c0_1 = arith.constant 0 : index
    %c256 = arith.constant 256 : index
    %1 = vector.load %arg7[%c0_1, %c256] : memref<1x2816xf32, #tpu.memory_space<vmem>>, vector<1x512xf32>
    %c0_2 = arith.constant 0 : index
    %c768 = arith.constant 768 : index
    %2 = vector.load %arg7[%c0_2, %c768] : memref<1x2816xf32, #tpu.memory_space<vmem>>, vector<1x512xf32>
    %c0_3 = arith.constant 0 : index
    %c1280 = arith.constant 1280 : index
    %3 = vector.load %arg7[%c0_3, %c1280] : memref<1x2816xf32, #tpu.memory_space<vmem>>, vector<1x256xf32>
    %c0_4 = arith.constant 0 : index
    %c1536 = arith.constant 1536 : index
    %4 = vector.load %arg7[%c0_4, %c1536] : memref<1x2816xf32, #tpu.memory_space<vmem>>, vector<1x512xf32>
    %c0_5 = arith.constant 0 : index
    %c2048 = arith.constant 2048 : index
    %5 = vector.load %arg7[%c0_5, %c2048] : memref<1x2816xf32, #tpu.memory_space<vmem>>, vector<1x512xf32>
    %c0_6 = arith.constant 0 : index
    %c2560 = arith.constant 2560 : index
    %6 = vector.load %arg7[%c0_6, %c2560] : memref<1x2816xf32, #tpu.memory_space<vmem>>, vector<1x256xf32>
    %c0_7 = arith.constant 0 : index
    %c0_8 = arith.constant 0 : index
    %7 = vector.load %arg0[%c0_7, %c0_8] : memref<32x256xf32, #tpu.memory_space<vmem>>, vector<32x256xf32>
    %c0_9 = arith.constant 0 : index
    %c0_10 = arith.constant 0 : index
    %8 = vector.load %arg1[%c0_9, %c0_10] : memref<32x256xf32, #tpu.memory_space<vmem>>, vector<32x256xf32>
    %9 = tpu.concatenate %7, %8 in 0 : vector<32x256xf32>, vector<32x256xf32> -> vector<64x256xf32>
    %10 = arith.truncf %9 : vector<64x256xf32> to vector<64x256xbf16>
    %c0_11 = arith.constant 0 : index
    %c0_12 = arith.constant 0 : index
    %11 = vector.load %arg2[%c0_11, %c0_12] : memref<256x256xbf16, #tpu.memory_space<vmem>>, vector<256x256xbf16>
    %cst = arith.constant dense<0.000000e+00> : vector<64x256xf32>
    %12 = tpu.matmul %10, %11, %cst {dimension_numbers = #tpu.dot_dimension_numbers<[1], [0], [0], [1], [0, 0, 1, 1], [], []>} : vector<64x256xbf16>, vector<256x256xbf16>, vector<64x256xf32> -> vector<64x256xf32>
    %13 = vector.broadcast %0 : vector<1x256xf32> to vector<64x256xf32>
    %14 = arith.addf %12, %13 : vector<64x256xf32>
    %15 = arith.truncf %14 : vector<64x256xf32> to vector<64x256xbf16>
    %c0_13 = arith.constant 0 : index
    %c0_14 = arith.constant 0 : index
    %16 = vector.load %arg3[%c0_13, %c0_14] : memref<256x512xbf16, #tpu.memory_space<vmem>>, vector<256x512xbf16>
    %cst_15 = arith.constant dense<0.000000e+00> : vector<64x512xf32>
    %17 = tpu.matmul %15, %16, %cst_15 {dimension_numbers = #tpu.dot_dimension_numbers<[1], [0], [0], [1], [0, 0, 1, 1], [], []>} : vector<64x256xbf16>, vector<256x512xbf16>, vector<64x512xf32> -> vector<64x512xf32>
    %18 = vector.extract_strided_slice %17 {offsets = [0, 0], sizes = [32, 512], strides = [1, 1]} : vector<64x512xf32> to vector<32x512xf32>
    %cst_16 = arith.constant dense<0.000000e+00> : vector<512xf32>
    %19 = vector.multi_reduction <add>, %18, %cst_16 [0] : vector<32x512xf32> to vector<512xf32>
    %20 = vector.shape_cast %19 : vector<512xf32> to vector<1x512xf32>
    %cst_17 = arith.constant 3.200000e+01 : f32
    %21 = vector.broadcast %cst_17 : f32 to vector<1x512xf32>
    %22 = arith.divf %20, %21 : vector<1x512xf32>
    %23 = vector.broadcast %22 : vector<1x512xf32> to vector<32x512xf32>
    %24 = arith.subf %18, %23 : vector<32x512xf32>
    %25 = arith.mulf %24, %24 : vector<32x512xf32>
    %cst_18 = arith.constant dense<0.000000e+00> : vector<512xf32>
    %26 = vector.multi_reduction <add>, %25, %cst_18 [0] : vector<32x512xf32> to vector<512xf32>
    %27 = vector.shape_cast %26 : vector<512xf32> to vector<1x512xf32>
    %cst_19 = arith.constant 3.200000e+01 : f32
    %28 = vector.broadcast %cst_19 : f32 to vector<1x512xf32>
    %29 = arith.divf %27, %28 : vector<1x512xf32>
    %cst_20 = arith.constant 9.99999974E-6 : f32
    %30 = vector.broadcast %cst_20 : f32 to vector<1x512xf32>
    %31 = arith.addf %29, %30 : vector<1x512xf32>
    %32 = math.rsqrt %31 : vector<1x512xf32>
    %33 = arith.mulf %32, %1 : vector<1x512xf32>
    %34 = vector.broadcast %33 : vector<1x512xf32> to vector<32x512xf32>
    %35 = arith.mulf %24, %34 : vector<32x512xf32>
    %36 = vector.broadcast %2 : vector<1x512xf32> to vector<32x512xf32>
    %37 = arith.addf %35, %36 : vector<32x512xf32>
    %cst_21 = arith.constant 0.000000e+00 : f32
    %38 = vector.broadcast %cst_21 : f32 to vector<32x512xf32>
    %39 = arith.maximumf %37, %38 : vector<32x512xf32>
    %40 = arith.truncf %39 : vector<32x512xf32> to vector<32x512xbf16>
    %c0_22 = arith.constant 0 : index
    %c0_23 = arith.constant 0 : index
    %41 = vector.load %arg10[%c0_22, %c0_23] : memref<64x512xbf16, #tpu.memory_space<vmem>>, vector<32x512xbf16>
    tpu.vector_store %arg10[%c0_22, %c0_23], %40 {strides = array<i32>} : memref<64x512xbf16, #tpu.memory_space<vmem>>, vector<32x512xbf16>,
    %42 = vector.extract_strided_slice %17 {offsets = [32, 0], sizes = [32, 512], strides = [1, 1]} : vector<64x512xf32> to vector<32x512xf32>
    %cst_24 = arith.constant dense<0.000000e+00> : vector<512xf32>
    %43 = vector.multi_reduction <add>, %42, %cst_24 [0] : vector<32x512xf32> to vector<512xf32>
    %44 = vector.shape_cast %43 : vector<512xf32> to vector<1x512xf32>
    %cst_25 = arith.constant 3.200000e+01 : f32
    %45 = vector.broadcast %cst_25 : f32 to vector<1x512xf32>
    %46 = arith.divf %44, %45 : vector<1x512xf32>
    %47 = vector.broadcast %46 : vector<1x512xf32> to vector<32x512xf32>
    %48 = arith.subf %42, %47 : vector<32x512xf32>
    %49 = arith.mulf %48, %48 : vector<32x512xf32>
    %cst_26 = arith.constant dense<0.000000e+00> : vector<512xf32>
    %50 = vector.multi_reduction <add>, %49, %cst_26 [0] : vector<32x512xf32> to vector<512xf32>
    %51 = vector.shape_cast %50 : vector<512xf32> to vector<1x512xf32>
    %cst_27 = arith.constant 3.200000e+01 : f32
    %52 = vector.broadcast %cst_27 : f32 to vector<1x512xf32>
    %53 = arith.divf %51, %52 : vector<1x512xf32>
    %cst_28 = arith.constant 9.99999974E-6 : f32
    %54 = vector.broadcast %cst_28 : f32 to vector<1x512xf32>
    %55 = arith.addf %53, %54 : vector<1x512xf32>
    %56 = math.rsqrt %55 : vector<1x512xf32>
    %57 = arith.mulf %56, %1 : vector<1x512xf32>
    %58 = vector.broadcast %57 : vector<1x512xf32> to vector<32x512xf32>
    %59 = arith.mulf %48, %58 : vector<32x512xf32>
    %60 = vector.broadcast %2 : vector<1x512xf32> to vector<32x512xf32>
    %61 = arith.addf %59, %60 : vector<32x512xf32>
    %cst_29 = arith.constant 0.000000e+00 : f32
    %62 = vector.broadcast %cst_29 : f32 to vector<32x512xf32>
    %63 = arith.maximumf %61, %62 : vector<32x512xf32>
    %64 = arith.truncf %63 : vector<32x512xf32> to vector<32x512xbf16>
    %c32 = arith.constant 32 : index
    %c0_30 = arith.constant 0 : index
    %65 = vector.load %arg10[%c32, %c0_30] : memref<64x512xbf16, #tpu.memory_space<vmem>>, vector<32x512xbf16>
    tpu.vector_store %arg10[%c32, %c0_30], %64 {strides = array<i32>} : memref<64x512xbf16, #tpu.memory_space<vmem>>, vector<32x512xbf16>,
    %c0_31 = arith.constant 0 : index
    %c0_32 = arith.constant 0 : index
    %66 = vector.load %arg10[%c0_31, %c0_32] : memref<64x512xbf16, #tpu.memory_space<vmem>>, vector<64x512xbf16>
    %c0_33 = arith.constant 0 : index
    %c0_34 = arith.constant 0 : index
    %67 = vector.load %arg4[%c0_33, %c0_34] : memref<512x256xbf16, #tpu.memory_space<vmem>>, vector<512x256xbf16>
    %cst_35 = arith.constant dense<0.000000e+00> : vector<64x256xf32>
    %68 = tpu.matmul %66, %67, %cst_35 {dimension_numbers = #tpu.dot_dimension_numbers<[1], [0], [0], [1], [0, 0, 1, 1], [], []>} : vector<64x512xbf16>, vector<512x256xbf16>, vector<64x256xf32> -> vector<64x256xf32>
    %69 = vector.broadcast %3 : vector<1x256xf32> to vector<64x256xf32>
    %70 = arith.addf %68, %69 : vector<64x256xf32>
    %c0_36 = arith.constant 0 : index
    %c0_37 = arith.constant 0 : index
    %71 = vector.load %arg9[%c0_36, %c0_37] : memref<64x256xf32, #tpu.memory_space<vmem>>, vector<64x256xf32>
    tpu.vector_store %arg9[%c0_36, %c0_37], %70 {strides = array<i32>} : memref<64x256xf32, #tpu.memory_space<vmem>>, vector<64x256xf32>,
    %72 = arith.truncf %70 : vector<64x256xf32> to vector<64x256xbf16>
    %c0_38 = arith.constant 0 : index
    %c0_39 = arith.constant 0 : index
    %73 = vector.load %arg5[%c0_38, %c0_39] : memref<256x512xbf16, #tpu.memory_space<vmem>>, vector<256x512xbf16>
    %cst_40 = arith.constant dense<0.000000e+00> : vector<64x512xf32>
    %74 = tpu.matmul %72, %73, %cst_40 {dimension_numbers = #tpu.dot_dimension_numbers<[1], [0], [0], [1], [0, 0, 1, 1], [], []>} : vector<64x256xbf16>, vector<256x512xbf16>, vector<64x512xf32> -> vector<64x512xf32>
    %75 = vector.extract_strided_slice %74 {offsets = [0, 0], sizes = [32, 512], strides = [1, 1]} : vector<64x512xf32> to vector<32x512xf32>
    %cst_41 = arith.constant dense<0.000000e+00> : vector<512xf32>
    %76 = vector.multi_reduction <add>, %75, %cst_41 [0] : vector<32x512xf32> to vector<512xf32>
    %77 = vector.shape_cast %76 : vector<512xf32> to vector<1x512xf32>
    %cst_42 = arith.constant 3.200000e+01 : f32
    %78 = vector.broadcast %cst_42 : f32 to vector<1x512xf32>
    %79 = arith.divf %77, %78 : vector<1x512xf32>
    %80 = vector.broadcast %79 : vector<1x512xf32> to vector<32x512xf32>
    %81 = arith.subf %75, %80 : vector<32x512xf32>
    %82 = arith.mulf %81, %81 : vector<32x512xf32>
    %cst_43 = arith.constant dense<0.000000e+00> : vector<512xf32>
    %83 = vector.multi_reduction <add>, %82, %cst_43 [0] : vector<32x512xf32> to vector<512xf32>
    %84 = vector.shape_cast %83 : vector<512xf32> to vector<1x512xf32>
    %cst_44 = arith.constant 3.200000e+01 : f32
    %85 = vector.broadcast %cst_44 : f32 to vector<1x512xf32>
    %86 = arith.divf %84, %85 : vector<1x512xf32>
    %cst_45 = arith.constant 9.99999974E-6 : f32
    %87 = vector.broadcast %cst_45 : f32 to vector<1x512xf32>
    %88 = arith.addf %86, %87 : vector<1x512xf32>
    %89 = math.rsqrt %88 : vector<1x512xf32>
    %90 = arith.mulf %89, %4 : vector<1x512xf32>
    %91 = vector.broadcast %90 : vector<1x512xf32> to vector<32x512xf32>
    %92 = arith.mulf %81, %91 : vector<32x512xf32>
    %93 = vector.broadcast %5 : vector<1x512xf32> to vector<32x512xf32>
    %94 = arith.addf %92, %93 : vector<32x512xf32>
    %cst_46 = arith.constant 0.000000e+00 : f32
    %95 = vector.broadcast %cst_46 : f32 to vector<32x512xf32>
    %96 = arith.maximumf %94, %95 : vector<32x512xf32>
    %97 = arith.truncf %96 : vector<32x512xf32> to vector<32x512xbf16>
    %c0_47 = arith.constant 0 : index
    %c0_48 = arith.constant 0 : index
    %98 = vector.load %arg10[%c0_47, %c0_48] : memref<64x512xbf16, #tpu.memory_space<vmem>>, vector<32x512xbf16>
    tpu.vector_store %arg10[%c0_47, %c0_48], %97 {strides = array<i32>} : memref<64x512xbf16, #tpu.memory_space<vmem>>, vector<32x512xbf16>,
    %99 = vector.extract_strided_slice %74 {offsets = [32, 0], sizes = [32, 512], strides = [1, 1]} : vector<64x512xf32> to vector<32x512xf32>
    %cst_49 = arith.constant dense<0.000000e+00> : vector<512xf32>
    %100 = vector.multi_reduction <add>, %99, %cst_49 [0] : vector<32x512xf32> to vector<512xf32>
    %101 = vector.shape_cast %100 : vector<512xf32> to vector<1x512xf32>
    %cst_50 = arith.constant 3.200000e+01 : f32
    %102 = vector.broadcast %cst_50 : f32 to vector<1x512xf32>
    %103 = arith.divf %101, %102 : vector<1x512xf32>
    %104 = vector.broadcast %103 : vector<1x512xf32> to vector<32x512xf32>
    %105 = arith.subf %99, %104 : vector<32x512xf32>
    %106 = arith.mulf %105, %105 : vector<32x512xf32>
    %cst_51 = arith.constant dense<0.000000e+00> : vector<512xf32>
    %107 = vector.multi_reduction <add>, %106, %cst_51 [0] : vector<32x512xf32> to vector<512xf32>
    %108 = vector.shape_cast %107 : vector<512xf32> to vector<1x512xf32>
    %cst_52 = arith.constant 3.200000e+01 : f32
    %109 = vector.broadcast %cst_52 : f32 to vector<1x512xf32>
    %110 = arith.divf %108, %109 : vector<1x512xf32>
    %cst_53 = arith.constant 9.99999974E-6 : f32
    %111 = vector.broadcast %cst_53 : f32 to vector<1x512xf32>
    %112 = arith.addf %110, %111 : vector<1x512xf32>
    %113 = math.rsqrt %112 : vector<1x512xf32>
    %114 = arith.mulf %113, %4 : vector<1x512xf32>
    %115 = vector.broadcast %114 : vector<1x512xf32> to vector<32x512xf32>
    %116 = arith.mulf %105, %115 : vector<32x512xf32>
    %117 = vector.broadcast %5 : vector<1x512xf32> to vector<32x512xf32>
    %118 = arith.addf %116, %117 : vector<32x512xf32>
    %cst_54 = arith.constant 0.000000e+00 : f32
    %119 = vector.broadcast %cst_54 : f32 to vector<32x512xf32>
    %120 = arith.maximumf %118, %119 : vector<32x512xf32>
    %121 = arith.truncf %120 : vector<32x512xf32> to vector<32x512xbf16>
    %c32_55 = arith.constant 32 : index
    %c0_56 = arith.constant 0 : index
    %122 = vector.load %arg10[%c32_55, %c0_56] : memref<64x512xbf16, #tpu.memory_space<vmem>>, vector<32x512xbf16>
    tpu.vector_store %arg10[%c32_55, %c0_56], %121 {strides = array<i32>} : memref<64x512xbf16, #tpu.memory_space<vmem>>, vector<32x512xbf16>,
    %c0_57 = arith.constant 0 : index
    %c0_58 = arith.constant 0 : index
    %123 = vector.load %arg10[%c0_57, %c0_58] : memref<64x512xbf16, #tpu.memory_space<vmem>>, vector<64x512xbf16>
    %c0_59 = arith.constant 0 : index
    %c0_60 = arith.constant 0 : index
    %124 = vector.load %arg6[%c0_59, %c0_60] : memref<512x256xbf16, #tpu.memory_space<vmem>>, vector<512x256xbf16>
    %cst_61 = arith.constant dense<0.000000e+00> : vector<64x256xf32>
    %125 = tpu.matmul %123, %124, %cst_61 {dimension_numbers = #tpu.dot_dimension_numbers<[1], [0], [0], [1], [0, 0, 1, 1], [], []>} : vector<64x512xbf16>, vector<512x256xbf16>, vector<64x256xf32> -> vector<64x256xf32>
    %126 = vector.broadcast %6 : vector<1x256xf32> to vector<64x256xf32>
    %127 = arith.addf %125, %126 : vector<64x256xf32>
    %c0_62 = arith.constant 0 : index
    %c0_63 = arith.constant 0 : index
    %128 = vector.load %arg8[%c0_62, %c0_63] : memref<64x256xf32, #tpu.memory_space<vmem>>, vector<64x256xf32>
    tpu.vector_store %arg8[%c0_62, %c0_63], %127 {strides = array<i32>} : memref<64x256xf32, #tpu.memory_space<vmem>>, vector<64x256xf32>,
    return
  }
}

</mosaic_0001>

<llo_original>
// kernel: simsiam_forward.1
$region0: #{simsiam_forward.1}
  #allocation0 [shape = 'u32[]', space=smem, size = 0x4, offset = 0x4, fixed_abs, tag = 'smem constant byte address 0x4 - core index']
  #allocation1 [shape = 'u32[144,128]{1,0:T(1,128)}', space=vmem, size = 0x12000, scoped, tag = 'internal scratch']
  #allocation2 [shape = 'bf16[64,512]{1,0:T(16,128)(2,1)}', space=vmem, size = 0x10000, scoped, tag = 'scratch operand']
  %s0 = inlined_call_operand.vmem [shape: f32[32,256], index: 0, kind: input, shape index: {}]
  %s1 = inlined_call_operand.vmem [shape: f32[32,256], index: 1, kind: input, shape index: {}]
  %s2 = inlined_call_operand.hbm [shape: bf16[256,256], index: 2, kind: input, shape index: {}]
  %s3 = inlined_call_operand.vmem [shape: bf16[256,512], index: 3, kind: input, shape index: {}]
  %s4 = inlined_call_operand.hbm [shape: bf16[512,256], index: 4, kind: input, shape index: {}]
  %s5 = inlined_call_operand.hbm [shape: bf16[256,512], index: 5, kind: input, shape index: {}]
  %s6 = inlined_call_operand.hbm [shape: bf16[512,256], index: 6, kind: input, shape index: {}]
  %s7 = inlined_call_operand.vmem [shape: f32[1,2816], index: 7, kind: input, shape index: {}]
  %s8 = inlined_call_operand.vmem [shape: f32[64,256], index: 8, kind: output, shape index: {0}]
  %s9 = inlined_call_operand.vmem [shape: f32[64,256], index: 9, kind: output, shape index: {1}]
  %10 = xla_tuple %s8, %s9
  %s11 = sld [smem:[#allocation0]]
  $region66: #{simsiam_forward.1} parent=0
    _
  %s13 = ssub.s32 1, %s11
  %s14 = scalar_select 0, %s13, %s11
  $region1: #{simsiam_forward.1} parent=0
    #allocation3 [shape = 'u8[131072]{0}', space=vmem, size = 0x20000, scoped, tag = 'input window, operand 2, single buffered']
    #allocation4 [shape = 's32[1]{0}', space=sflag, size = 0x4, scoped, tag = 'scoped memory for simsiam_forward.1']
    #allocation5 [shape = 'u8[262144]{0}', space=vmem, size = 0x40000, scoped, tag = 'input window, operand 4, single buffered']
    #allocation6 [shape = 's32[1]{0}', space=sflag, size = 0x4, scoped, tag = 'scoped memory for simsiam_forward.1']
    #allocation7 [shape = 'u8[262144]{0}', space=vmem, size = 0x40000, scoped, tag = 'input window, operand 5, single buffered']
    #allocation8 [shape = 'u8[262144]{0}', space=vmem, size = 0x40000, scoped, tag = 'input window, operand 6, single buffered']
    #allocation9 [shape = 's32[1]{0}', space=sflag, size = 0x4, scoped, tag = 'scoped memory for simsiam_forward.1']
    %15 = vsyncpa [#allocation4], 0
    %16 = vsyncpa [#allocation6], 0
    %17 = vsyncpa [#allocation9], 0
    // Predicated region
    $region2: #{simsiam_forward.1} parent=1 // pred_check
      _
    $region3: #{simsiam_forward.1} parent=1 // pred_check_branch
      %19 = sbr.rel (0) target = $region5
    $region4: #{simsiam_forward.1} parent=1 // pred_region
      _
    $region5: #{simsiam_forward.1} parent=1 // pred_fallthru
      _
    // Predicated region
    $region6: #{simsiam_forward.1} parent=1 // pred_check
      _
    $region7: #{simsiam_forward.1} parent=1 // pred_check_branch
      %21 = sbr.rel (0) target = $region9
    $region8: #{simsiam_forward.1} parent=1 // pred_region
      _
    $region9: #{simsiam_forward.1} parent=1 // pred_fallthru
      _
    // Predicated region
    $region10: #{simsiam_forward.1} parent=1 // pred_check
      _
    $region11: #{simsiam_forward.1} parent=1 // pred_check_branch
      %23 = sbr.rel (0) target = $region13
    $region12: #{simsiam_forward.1} parent=1 // pred_region
      %s25 = ssub.s32 4096, 4096
      %26 = vsyncadd [#allocation4], %s25
      %s27 = sshll.u32 [#allocation3], 4
      %s28 = int_to_ptr.vmem [resolvable:$true] %s27
      %33 = dma.hbm_to_vmem [thread:$0]  %s2, 4096, %s28, [#allocation4], 128, 128, 8
    $region13: #{simsiam_forward.1} parent=1 // pred_fallthru
      _
    // Predicated region
    $region14: #{simsiam_forward.1} parent=1 // pred_check
      _
    $region15: #{simsiam_forward.1} parent=1 // pred_check_branch
      %35 = sbr.rel (0) target = $region17
    $region16: #{simsiam_forward.1} parent=1 // pred_region
      _
    $region17: #{simsiam_forward.1} parent=1 // pred_fallthru
      _
    // Predicated region
    $region18: #{simsiam_forward.1} parent=1 // pred_check
      _
    $region19: #{simsiam_forward.1} parent=1 // pred_check_branch
      %37 = sbr.rel (0) target = $region21
    $region20: #{simsiam_forward.1} parent=1 // pred_region
      %s39 = ssub.s32 8192, 8192
      %40 = vsyncadd [#allocation6], %s39
      %s41 = sshll.u32 [#allocation5], 4
      %s42 = int_to_ptr.vmem [resolvable:$true] %s41
      %47 = dma.hbm_to_vmem [thread:$0]  %s4, 8192, %s42, [#allocation6], 128, 128, 8
    $region21: #{simsiam_forward.1} parent=1 // pred_fallthru
      _
    // Predicated region
    $region22: #{simsiam_forward.1} parent=1 // pred_check
      _
    $region23: #{simsiam_forward.1} parent=1 // pred_check_branch
      %49 = sbr.rel (0) target = $region25
    $region24: #{simsiam_forward.1} parent=1 // pred_region
      %s51 = ssub.s32 8192, 8192
      %52 = vsyncadd [#allocation6], %s51
      %s53 = sshll.u32 [#allocation7], 4
      %s54 = int_to_ptr.vmem [resolvable:$true] %s53
      %59 = dma.hbm_to_vmem [thread:$0]  %s5, 8192, %s54, [#allocation6], 256, 256, 16
    $region25: #{simsiam_forward.1} parent=1 // pred_fallthru
      _
    // Predicated region
    $region26: #{simsiam_forward.1} parent=1 // pred_check
      _
    $region27: #{simsiam_forward.1} parent=1 // pred_check_branch
      %61 = sbr.rel (0) target = $region29
    $region28: #{simsiam_forward.1} parent=1 // pred_region
      %s63 = ssub.s32 8192, 8192
      %64 = vsyncadd [#allocation9], %s63
      %s65 = sshll.u32 [#allocation8], 4
      %s66 = int_to_ptr.vmem [resolvable:$true] %s65
      %71 = dma.hbm_to_vmem [thread:$0]  %s6, 8192, %s66, [#allocation9], 128, 128, 8
    $region29: #{simsiam_forward.1} parent=1 // pred_fallthru
      _
    // Predicated region
    $region30: #{simsiam_forward.1} parent=1 // pred_check
      _
    $region31: #{simsiam_forward.1} parent=1 // pred_check_branch
      %73 = sbr.rel (0) target = $region33
    $region32: #{simsiam_forward.1} parent=1 // pred_region
      _
    $region33: #{simsiam_forward.1} parent=1 // pred_fallthru
      _
    // Predicated region
    $region34: #{simsiam_forward.1} parent=1 // pred_check
      _
    $region35: #{simsiam_forward.1} parent=1 // pred_check_branch
      %75 = sbr.rel (0) target = $region37
    $region36: #{simsiam_forward.1} parent=1 // pred_region
      %76 = dma.done [#allocation4], 4096
    $region37: #{simsiam_forward.1} parent=1 // pred_fallthru
      _
    // Predicated region
    $region38: #{simsiam_forward.1} parent=1 // pred_check
      _
    $region39: #{simsiam_forward.1} parent=1 // pred_check_branch
      %78 = sbr.rel (0) target = $region41
    $region40: #{simsiam_forward.1} parent=1 // pred_region
      %79 = dma.done [#allocation6], 8192
    $region41: #{simsiam_forward.1} parent=1 // pred_fallthru
      _
    // Predicated region
    $region42: #{simsiam_forward.1} parent=1 // pred_check
      _
    $region43: #{simsiam_forward.1} parent=1 // pred_check_branch
      %81 = sbr.rel (0) target = $region45
    $region44: #{simsiam_forward.1} parent=1 // pred_region
      %82 = dma.done [#allocation6], 8192
    $region45: #{simsiam_forward.1} parent=1 // pred_fallthru
      _
    // Predicated region
    $region46: #{simsiam_forward.1} parent=1 // pred_check
      _
    $region47: #{simsiam_forward.1} parent=1 // pred_check_branch
      %84 = sbr.rel (0) target = $region49
    $region48: #{simsiam_forward.1} parent=1 // pred_region
      %85 = dma.done [#allocation9], 8192
    $region49: #{simsiam_forward.1} parent=1 // pred_fallthru
      _
    %v86 = vld [vmem:[%s7] sm:$0x3]
    %v87 = vld [vmem:[%s7 + $0x2] sm:$0xf]
    %v88 = vld [vmem:[%s7 + $0x6] sm:$0xf]
    %v89 = vld [vmem:[%s7 + $0xa] sm:$0x3]
    %v90 = vld [vmem:[%s7 + $0xc] sm:$0xf]
    %v91 = vld [vmem:[%s7 + $0x10] sm:$0xf]
    %v92 = vld [vmem:[%s7 + $0x14] sm:$0x3]
    %v93 = vld [vmem:[%s0] sm:$0xff]
    %v94 = vld [vmem:[%s0 + $0x8] sm:$0xff]
    %v95 = vld [vmem:[%s0 + $0x10] sm:$0xff]
    %v96 = vld [vmem:[%s0 + $0x18] sm:$0xff]
    %v97 = vld [vmem:[%s0 + $0x20] sm:$0xff]
    %v98 = vld [vmem:[%s0 + $0x28] sm:$0xff]
    %v99 = vld [vmem:[%s0 + $0x30] sm:$0xff]
    %v100 = vld [vmem:[%s0 + $0x38] sm:$0xff]
    %v101 = vld [vmem:[%s1] sm:$0xff]
    %v102 = vld [vmem:[%s1 + $0x8] sm:$0xff]
    %v103 = vld [vmem:[%s1 + $0x10] sm:$0xff]
    %v104 = vld [vmem:[%s1 + $0x18] sm:$0xff]
    %v105 = vld [vmem:[%s1 + $0x20] sm:$0xff]
    %v106 = vld [vmem:[%s1 + $0x28] sm:$0xff]
    %v107 = vld [vmem:[%s1 + $0x30] sm:$0xff]
    %v108 = vld [vmem:[%s1 + $0x38] sm:$0xff]
    %v109 = vpack.c.bf16 %v95, %v93
    %v110 = vpack.c.bf16 %v96, %v94
    %v111 = vpack.c.bf16 %v99, %v97
    %v112 = vpack.c.bf16 %v100, %v98
    %v113 = vpack.c.bf16 %v103, %v101
    %v114 = vpack.c.bf16 %v104, %v102
    %v115 = vpack.c.bf16 %v107, %v105
    %v116 = vpack.c.bf16 %v108, %v106
    %v117 = vld [vmem:[#allocation3] sm:$0xff]
    %v118 = vld [vmem:[#allocation3 + $0x8] sm:$0xff]
    %v119 = vld [vmem:[#allocation3 + $0x10] sm:$0xff]
    %v120 = vld [vmem:[#allocation3 + $0x18] sm:$0xff]
    %v121 = vld [vmem:[#allocation3 + $0x20] sm:$0xff]
    %v122 = vld [vmem:[#allocation3 + $0x28] sm:$0xff]
    %v123 = vld [vmem:[#allocation3 + $0x30] sm:$0xff]
    %v124 = vld [vmem:[#allocation3 + $0x38] sm:$0xff]
    %v125 = vld [vmem:[#allocation3 + $0x40] sm:$0xff]
    %v126 = vld [vmem:[#allocation3 + $0x48] sm:$0xff]
    %v127 = vld [vmem:[#allocation3 + $0x50] sm:$0xff]
    %v128 = vld [vmem:[#allocation3 + $0x58] sm:$0xff]
    %v129 = vld [vmem:[#allocation3 + $0x60] sm:$0xff]
    %v130 = vld [vmem:[#allocation3 + $0x68] sm:$0xff]
    %v131 = vld [vmem:[#allocation3 + $0x70] sm:$0xff]
    %v132 = vld [vmem:[#allocation3 + $0x78] sm:$0xff]
    %v133 = vld [vmem:[#allocation3 + $0x80] sm:$0xff]
    %v134 = vld [vmem:[#allocation3 + $0x88] sm:$0xff]
    %v135 = vld [vmem:[#allocation3 + $0x90] sm:$0xff]
    %v136 = vld [vmem:[#allocation3 + $0x98] sm:$0xff]
    %v137 = vld [vmem:[#allocation3 + $0xa0] sm:$0xff]
    %v138 = vld [vmem:[#allocation3 + $0xa8] sm:$0xff]
    %v139 = vld [vmem:[#allocation3 + $0xb0] sm:$0xff]
    %v140 = vld [vmem:[#allocation3 + $0xb8] sm:$0xff]
    %v141 = vld [vmem:[#allocation3 + $0xc0] sm:$0xff]
    %v142 = vld [vmem:[#allocation3 + $0xc8] sm:$0xff]
    %v143 = vld [vmem:[#allocation3 + $0xd0] sm:$0xff]
    %v144 = vld [vmem:[#allocation3 + $0xd8] sm:$0xff]
    %v145 = vld [vmem:[#allocation3 + $0xe0] sm:$0xff]
    %v146 = vld [vmem:[#allocation3 + $0xe8] sm:$0xff]
    %v147 = vld [vmem:[#allocation3 + $0xf0] sm:$0xff]
    %v148 = vld [vmem:[#allocation3 + $0xf8] sm:$0xff]
    %v150 = vlaneseq
    %v151 = vshrl.u32 %v150, 7
    %v152 = vsub.s32 0, %v151
    %v153 = vrot.slane %v86, %v152
    %v154 = vlaneseq
    %v155 = vshrl.u32 %v154, 7
    %v156 = vsub.s32 1, %v155
    %v157 = vrot.slane %v86, %v156
    %v192 = vunpack.c.l.b16 %v117
    %v193 = vunpack.c.h.b16 %v117
    %v194 = vunpack.c.l.b16 %v118
    %v195 = vunpack.c.h.b16 %v118
    %v196 = vunpack.c.l.b16 %v119
    %v197 = vunpack.c.h.b16 %v119
    %v198 = vunpack.c.l.b16 %v120
    %v199 = vunpack.c.h.b16 %v120
    %v200 = vunpack.c.l.b16 %v121
    %v201 = vunpack.c.h.b16 %v121
    %v202 = vunpack.c.l.b16 %v122
    %v203 = vunpack.c.h.b16 %v122
    %v204 = vunpack.c.l.b16 %v123
    %v205 = vunpack.c.h.b16 %v123
    %v206 = vunpack.c.l.b16 %v124
    %v207 = vunpack.c.h.b16 %v124
    %v208 = vunpack.c.l.b16 %v125
    %v209 = vunpack.c.h.b16 %v125
    %v210 = vunpack.c.l.b16 %v126
    %v211 = vunpack.c.h.b16 %v126
    %v212 = vunpack.c.l.b16 %v127
    %v213 = vunpack.c.h.b16 %v127
    %v214 = vunpack.c.l.b16 %v128
    %v215 = vunpack.c.h.b16 %v128
    %v216 = vunpack.c.l.b16 %v129
    %v217 = vunpack.c.h.b16 %v129
    %v218 = vunpack.c.l.b16 %v130
    %v219 = vunpack.c.h.b16 %v130
    %v220 = vunpack.c.l.b16 %v131
    %v221 = vunpack.c.h.b16 %v131
    %v222 = vunpack.c.l.b16 %v132
    %v223 = vunpack.c.h.b16 %v132
    %v224 = vunpack.c.l.b16 %v133
    %v225 = vunpack.c.h.b16 %v133
    %v226 = vunpack.c.l.b16 %v134
    %v227 = vunpack.c.h.b16 %v134
    %v228 = vunpack.c.l.b16 %v135
    %v229 = vunpack.c.h.b16 %v135
    %v230 = vunpack.c.l.b16 %v136
    %v231 = vunpack.c.h.b16 %v136
    %v232 = vunpack.c.l.b16 %v137
    %v233 = vunpack.c.h.b16 %v137
    %v234 = vunpack.c.l.b16 %v138
    %v235 = vunpack.c.h.b16 %v138
    %v236 = vunpack.c.l.b16 %v139
    %v237 = vunpack.c.h.b16 %v139
    %v238 = vunpack.c.l.b16 %v140
    %v239 = vunpack.c.h.b16 %v140
    %v240 = vunpack.c.l.b16 %v141
    %v241 = vunpack.c.h.b16 %v141
    %v242 = vunpack.c.l.b16 %v142
    %v243 = vunpack.c.h.b16 %v142
    %v244 = vunpack.c.l.b16 %v143
    %v245 = vunpack.c.h.b16 %v143
    %v246 = vunpack.c.l.b16 %v144
    %v247 = vunpack.c.h.b16 %v144
    %v248 = vunpack.c.l.b16 %v145
    %v249 = vunpack.c.h.b16 %v145
    %v250 = vunpack.c.l.b16 %v146
    %v251 = vunpack.c.h.b16 %v146
    %v252 = vunpack.c.l.b16 %v147
    %v253 = vunpack.c.h.b16 %v147
    %v254 = vunpack.c.l.b16 %v148
    %v255 = vunpack.c.h.b16 %v148
    %v256 = vpack.c.b16 %v194, %v192
    %v257 = vpack.c.b16 %v195, %v193
    %v258 = vpack.c.b16 %v198, %v196
    %v259 = vpack.c.b16 %v199, %v197
    %v260 = vpack.c.b16 %v202, %v200
    %v261 = vpack.c.b16 %v203, %v201
    %v262 = vpack.c.b16 %v206, %v204
    %v263 = vpack.c.b16 %v207, %v205
    %v264 = vpack.c.b16 %v210, %v208
    %v265 = vpack.c.b16 %v211, %v209
    %v266 = vpack.c.b16 %v214, %v212
    %v267 = vpack.c.b16 %v215, %v213
    %v268 = vpack.c.b16 %v218, %v216
    %v269 = vpack.c.b16 %v219, %v217
    %v270 = vpack.c.b16 %v222, %v220
    %v271 = vpack.c.b16 %v223, %v221
    %v272 = vpack.c.b16 %v226, %v224
    %v273 = vpack.c.b16 %v227, %v225
    %v274 = vpack.c.b16 %v230, %v228
    %v275 = vpack.c.b16 %v231, %v229
    %v276 = vpack.c.b16 %v234, %v232
    %v277 = vpack.c.b16 %v235, %v233
    %v278 = vpack.c.b16 %v238, %v236
    %v279 = vpack.c.b16 %v239, %v237
    %v280 = vpack.c.b16 %v242, %v240
    %v281 = vpack.c.b16 %v243, %v241
    %v282 = vpack.c.b16 %v246, %v244
    %v283 = vpack.c.b16 %v247, %v245
    %v284 = vpack.c.b16 %v250, %v248
    %v285 = vpack.c.b16 %v251, %v249
    %v286 = vpack.c.b16 %v254, %v252
    %v287 = vpack.c.b16 %v255, %v253
    %320 = vmatprep.subr.bf16.mxu0 %v257
    %321 = vmatpush1.bf16.msra.mxu0 %v256
    %322 = vmatprep.subr.bf16.mxu0 %v259
    %323 = vmatpush1.bf16.msra.mxu0 %v258
    %324 = vmatprep.subr.bf16.mxu0 %v261
    %325 = vmatpush1.bf16.msra.mxu0 %v260
    %326 = vmatprep.subr.bf16.mxu0 %v263
    %327 = vmatpush1.bf16.msra.mxu0 %v262
    %328 = vmatprep.subr.bf16.mxu0 %v265
    %329 = vmatpush1.bf16.msra.mxu0 %v264
    %330 = vmatprep.subr.bf16.mxu0 %v267
    %331 = vmatpush1.bf16.msra.mxu0 %v266
    %332 = vmatprep.subr.bf16.mxu0 %v269
    %333 = vmatpush1.bf16.msra.mxu0 %v268
    %334 = vmatprep.subr.bf16.mxu0 %v271
    %335 = vmatpush1.bf16.msra.mxu0 %v270
    %336 = vmatprep.subr.bf16.mxu0 %v273
    %337 = vmatpush1.bf16.msra.mxu0 %v272
    %338 = vmatprep.subr.bf16.mxu0 %v275
    %339 = vmatpush1.bf16.msra.mxu0 %v274
    %340 = vmatprep.subr.bf16.mxu0 %v277
    %341 = vmatpush1.bf16.msra.mxu0 %v276
    %342 = vmatprep.subr.bf16.mxu0 %v279
    %343 = vmatpush1.bf16.msra.mxu0 %v278
    %344 = vmatprep.subr.bf16.mxu0 %v281
    %345 = vmatpush1.bf16.msra.mxu0 %v280
    %346 = vmatprep.subr.bf16.mxu0 %v283
    %347 = vmatpush1.bf16.msra.mxu0 %v282
    %348 = vmatprep.subr.bf16.mxu0 %v285
    %349 = vmatpush1.bf16.msra.mxu0 %v284
    %350 = vmatprep.subr.bf16.mxu0 %v287
    %351 = vmatpush1.bf16.msra.mxu0 %v286
    %352 = vmatprep.mubr.bf16.mxu0 %v110
    %353 = vmatmul.mubr.bf16.gmra.mrb[0].mxu0 %v109
    %v354 = vpop.f32.mrb[0].mxu0
    %v355 = vadd.f32 %v153, %v354
    %v356 = vpop.f32.mrb[0].mxu0
    %v357 = vadd.f32 %v157, %v356
    %v358 = vpop.f32.mrb[0].mxu0
    %v359 = vadd.f32 %v153, %v358
    %v360 = vpop.f32.mrb[0].mxu0
    %v361 = vadd.f32 %v157, %v360
    %362 = vmatprep.mubr.bf16.mxu0 %v112
    %363 = vmatmul.mubr.bf16.gmra.mrb[0].mxu0 %v111
    %v364 = vpop.f32.mrb[0].mxu0
    %v365 = vadd.f32 %v153, %v364
    %v366 = vpop.f32.mrb[0].mxu0
    %v367 = vadd.f32 %v157, %v366
    %v368 = vpop.f32.mrb[0].mxu0
    %v369 = vadd.f32 %v153, %v368
    %v370 = vpop.f32.mrb[0].mxu0
    %v371 = vadd.f32 %v157, %v370
    %372 = vmatprep.mubr.bf16.mxu0 %v114
    %373 = vmatmul.mubr.bf16.gmra.mrb[0].mxu0 %v113
    %v374 = vpop.f32.mrb[0].mxu0
    %v375 = vadd.f32 %v153, %v374
    %v376 = vpop.f32.mrb[0].mxu0
    %v377 = vadd.f32 %v157, %v376
    %v378 = vpop.f32.mrb[0].mxu0
    %v379 = vadd.f32 %v153, %v378
    %v380 = vpop.f32.mrb[0].mxu0
    %v381 = vadd.f32 %v157, %v380
    %382 = vmatprep.mubr.bf16.mxu0 %v116
    %383 = vmatmul.mubr.bf16.gmra.mrb[0].mxu0 %v115
    %v384 = vpop.f32.mrb[0].mxu0
    %v385 = vadd.f32 %v153, %v384
    %v386 = vpop.f32.mrb[0].mxu0
    %v387 = vadd.f32 %v157, %v386
    %v388 = vpop.f32.mrb[0].mxu0
    %v389 = vadd.f32 %v153, %v388
    %v390 = vpop.f32.mrb[0].mxu0
    %v391 = vadd.f32 %v157, %v390
    %392 = vdwg.mxu0
    %v393 = vpack.c.bf16 %v359, %v355
    %v394 = vpack.c.bf16 %v361, %v357
    %v395 = vpack.c.bf16 %v369, %v365
    %v396 = vpack.c.bf16 %v371, %v367
    %v397 = vpack.c.bf16 %v379, %v375
    %v398 = vpack.c.bf16 %v381, %v377
    %v399 = vpack.c.bf16 %v389, %v385
    %v400 = vpack.c.bf16 %v391, %v387
    %v401 = vld [vmem:[%s3] sm:$0xff]
    %v402 = vld [vmem:[%s3 + $0x8] sm:$0xff]
    %v403 = vld [vmem:[%s3 + $0x10] sm:$0xff]
    %v404 = vld [vmem:[%s3 + $0x18] sm:$0xff]
    %v405 = vld [vmem:[%s3 + $0x20] sm:$0xff]
    %v406 = vld [vmem:[%s3 + $0x28] sm:$0xff]
    %v407 = vld [vmem:[%s3 + $0x30] sm:$0xff]
    %v408 = vld [vmem:[%s3 + $0x38] sm:$0xff]
    %v409 = vld [vmem:[%s3 + $0x40] sm:$0xff]
    %v410 = vld [vmem:[%s3 + $0x48] sm:$0xff]
    %v411 = vld [vmem:[%s3 + $0x50] sm:$0xff]
    %v412 = vld [vmem:[%s3 + $0x58] sm:$0xff]
    %v413 = vld [vmem:[%s3 + $0x60] sm:$0xff]
    %v414 = vld [vmem:[%s3 + $0x68] sm:$0xff]
    %v415 = vld [vmem:[%s3 + $0x70] sm:$0xff]
    %v416 = vld [vmem:[%s3 + $0x78] sm:$0xff]
    %v417 = vld [vmem:[%s3 + $0x80] sm:$0xff]
    %v418 = vld [vmem:[%s3 + $0x88] sm:$0xff]
    %v419 = vld [vmem:[%s3 + $0x90] sm:$0xff]
    %v420 = vld [vmem:[%s3 + $0x98] sm:$0xff]
    %v421 = vld [vmem:[%s3 + $0xa0] sm:$0xff]
    %v422 = vld [vmem:[%s3 + $0xa8] sm:$0xff]
    %v423 = vld [vmem:[%s3 + $0xb0] sm:$0xff]
    %v424 = vld [vmem:[%s3 + $0xb8] sm:$0xff]
    %v425 = vld [vmem:[%s3 + $0xc0] sm:$0xff]
    %v426 = vld [vmem:[%s3 + $0xc8] sm:$0xff]
    %v427 = vld [vmem:[%s3 + $0xd0] sm:$0xff]
    %v428 = vld [vmem:[%s3 + $0xd8] sm:$0xff]
    %v429 = vld [vmem:[%s3 + $0xe0] sm:$0xff]
    %v430 = vld [vmem:[%s3 + $0xe8] sm:$0xff]
    %v431 = vld [vmem:[%s3 + $0xf0] sm:$0xff]
    %v432 = vld [vmem:[%s3 + $0xf8] sm:$0xff]
    %v433 = vld [vmem:[%s3 + $0x100] sm:$0xff]
    %v434 = vld [vmem:[%s3 + $0x108] sm:$0xff]
    %v435 = vld [vmem:[%s3 + $0x110] sm:$0xff]
    %v436 = vld [vmem:[%s3 + $0x118] sm:$0xff]
    %v437 = vld [vmem:[%s3 + $0x120] sm:$0xff]
    %v438 = vld [vmem:[%s3 + $0x128] sm:$0xff]
    %v439 = vld [vmem:[%s3 + $0x130] sm:$0xff]
    %v440 = vld [vmem:[%s3 + $0x138] sm:$0xff]
    %v441 = vld [vmem:[%s3 + $0x140] sm:$0xff]
    %v442 = vld [vmem:[%s3 + $0x148] sm:$0xff]
    %v443 = vld [vmem:[%s3 + $0x150] sm:$0xff]
    %v444 = vld [vmem:[%s3 + $0x158] sm:$0xff]
    %v445 = vld [vmem:[%s3 + $0x160] sm:$0xff]
    %v446 = vld [vmem:[%s3 + $0x168] sm:$0xff]
    %v447 = vld [vmem:[%s3 + $0x170] sm:$0xff]
    %v448 = vld [vmem:[%s3 + $0x178] sm:$0xff]
    %v449 = vld [vmem:[%s3 + $0x180] sm:$0xff]
    %v450 = vld [vmem:[%s3 + $0x188] sm:$0xff]
    %v451 = vld [vmem:[%s3 + $0x190] sm:$0xff]
    %v452 = vld [vmem:[%s3 + $0x198] sm:$0xff]
    %v453 = vld [vmem:[%s3 + $0x1a0] sm:$0xff]
    %v454 = vld [vmem:[%s3 + $0x1a8] sm:$0xff]
    %v455 = vld [vmem:[%s3 + $0x1b0] sm:$0xff]
    %v456 = vld [vmem:[%s3 + $0x1b8] sm:$0xff]
    %v457 = vld [vmem:[%s3 + $0x1c0] sm:$0xff]
    %v458 = vld [vmem:[%s3 + $0x1c8] sm:$0xff]
    %v459 = vld [vmem:[%s3 + $0x1d0] sm:$0xff]
    %v460 = vld [vmem:[%s3 + $0x1d8] sm:$0xff]
    %v461 = vld [vmem:[%s3 + $0x1e0] sm:$0xff]
    %v462 = vld [vmem:[%s3 + $0x1e8] sm:$0xff]
    %v463 = vld [vmem:[%s3 + $0x1f0] sm:$0xff]
    %v464 = vld [vmem:[%s3 + $0x1f8] sm:$0xff]
    %v529 = vunpack.c.l.b16 %v401
    %v530 = vunpack.c.h.b16 %v401
    %v531 = vunpack.c.l.b16 %v402
    %v532 = vunpack.c.h.b16 %v402
    %v533 = vunpack.c.l.b16 %v403
    %v534 = vunpack.c.h.b16 %v403
    %v535 = vunpack.c.l.b16 %v404
    %v536 = vunpack.c.h.b16 %v404
    %v537 = vunpack.c.l.b16 %v405
    %v538 = vunpack.c.h.b16 %v405
    %v539 = vunpack.c.l.b16 %v406
    %v540 = vunpack.c.h.b16 %v406
    %v541 = vunpack.c.l.b16 %v407
    %v542 = vunpack.c.h.b16 %v407
    %v543 = vunpack.c.l.b16 %v408
    %v544 = vunpack.c.h.b16 %v408
    %v545 = vunpack.c.l.b16 %v409
    %v546 = vunpack.c.h.b16 %v409
    %v547 = vunpack.c.l.b16 %v410
    %v548 = vunpack.c.h.b16 %v410
    %v549 = vunpack.c.l.b16 %v411
    %v550 = vunpack.c.h.b16 %v411
    %v551 = vunpack.c.l.b16 %v412
    %v552 = vunpack.c.h.b16 %v412
    %v553 = vunpack.c.l.b16 %v413
    %v554 = vunpack.c.h.b16 %v413
    %v555 = vunpack.c.l.b16 %v414
    %v556 = vunpack.c.h.b16 %v414
    %v557 = vunpack.c.l.b16 %v415
    %v558 = vunpack.c.h.b16 %v415
    %v559 = vunpack.c.l.b16 %v416
    %v560 = vunpack.c.h.b16 %v416
    %v561 = vunpack.c.l.b16 %v417
    %v562 = vunpack.c.h.b16 %v417
    %v563 = vunpack.c.l.b16 %v418
    %v564 = vunpack.c.h.b16 %v418
    %v565 = vunpack.c.l.b16 %v419
    %v566 = vunpack.c.h.b16 %v419
    %v567 = vunpack.c.l.b16 %v420
    %v568 = vunpack.c.h.b16 %v420
    %v569 = vunpack.c.l.b16 %v421
    %v570 = vunpack.c.h.b16 %v421
    %v571 = vunpack.c.l.b16 %v422
    %v572 = vunpack.c.h.b16 %v422
    %v573 = vunpack.c.l.b16 %v423
    %v574 = vunpack.c.h.b16 %v423
    %v575 = vunpack.c.l.b16 %v424
    %v576 = vunpack.c.h.b16 %v424
    %v577 = vunpack.c.l.b16 %v425
    %v578 = vunpack.c.h.b16 %v425
    %v579 = vunpack.c.l.b16 %v426
    %v580 = vunpack.c.h.b16 %v426
    %v581 = vunpack.c.l.b16 %v427
    %v582 = vunpack.c.h.b16 %v427
    %v583 = vunpack.c.l.b16 %v428
    %v584 = vunpack.c.h.b16 %v428
    %v585 = vunpack.c.l.b16 %v429
    %v586 = vunpack.c.h.b16 %v429
    %v587 = vunpack.c.l.b16 %v430
    %v588 = vunpack.c.h.b16 %v430
    %v589 = vunpack.c.l.b16 %v431
    %v590 = vunpack.c.h.b16 %v431
    %v591 = vunpack.c.l.b16 %v432
    %v592 = vunpack.c.h.b16 %v432
    %v593 = vunpack.c.l.b16 %v433
    %v594 = vunpack.c.h.b16 %v433
    %v595 = vunpack.c.l.b16 %v434
    %v596 = vunpack.c.h.b16 %v434
    %v597 = vunpack.c.l.b16 %v435
    %v598 = vunpack.c.h.b16 %v435
    %v599 = vunpack.c.l.b16 %v436
    %v600 = vunpack.c.h.b16 %v436
    %v601 = vunpack.c.l.b16 %v437
    %v602 = vunpack.c.h.b16 %v437
    %v603 = vunpack.c.l.b16 %v438
    %v604 = vunpack.c.h.b16 %v438
    %v605 = vunpack.c.l.b16 %v439
    %v606 = vunpack.c.h.b16 %v439
    %v607 = vunpack.c.l.b16 %v440
    %v608 = vunpack.c.h.b16 %v440
    %v609 = vunpack.c.l.b16 %v441
    %v610 = vunpack.c.h.b16 %v441
    %v611 = vunpack.c.l.b16 %v442
    %v612 = vunpack.c.h.b16 %v442
    %v613 = vunpack.c.l.b16 %v443
    %v614 = vunpack.c.h.b16 %v443
    %v615 = vunpack.c.l.b16 %v444
    %v616 = vunpack.c.h.b16 %v444
    %v617 = vunpack.c.l.b16 %v445
    %v618 = vunpack.c.h.b16 %v445
    %v619 = vunpack.c.l.b16 %v446
    %v620 = vunpack.c.h.b16 %v446
    %v621 = vunpack.c.l.b16 %v447
    %v622 = vunpack.c.h.b16 %v447
    %v623 = vunpack.c.l.b16 %v448
    %v624 = vunpack.c.h.b16 %v448
    %v625 = vunpack.c.l.b16 %v449
    %v626 = vunpack.c.h.b16 %v449
    %v627 = vunpack.c.l.b16 %v450
    %v628 = vunpack.c.h.b16 %v450
    %v629 = vunpack.c.l.b16 %v451
    %v630 = vunpack.c.h.b16 %v451
    %v631 = vunpack.c.l.b16 %v452
    %v632 = vunpack.c.h.b16 %v452
    %v633 = vunpack.c.l.b16 %v453
    %v634 = vunpack.c.h.b16 %v453
    %v635 = vunpack.c.l.b16 %v454
    %v636 = vunpack.c.h.b16 %v454
    %v637 = vunpack.c.l.b16 %v455
    %v638 = vunpack.c.h.b16 %v455
    %v639 = vunpack.c.l.b16 %v456
    %v640 = vunpack.c.h.b16 %v456
    %v641 = vunpack.c.l.b16 %v457
    %v642 = vunpack.c.h.b16 %v457
    %v643 = vunpack.c.l.b16 %v458
    %v644 = vunpack.c.h.b16 %v458
    %v645 = vunpack.c.l.b16 %v459
    %v646 = vunpack.c.h.b16 %v459
    %v647 = vunpack.c.l.b16 %v460
    %v648 = vunpack.c.h.b16 %v460
    %v649 = vunpack.c.l.b16 %v461
    %v650 = vunpack.c.h.b16 %v461
    %v651 = vunpack.c.l.b16 %v462
    %v652 = vunpack.c.h.b16 %v462
    %v653 = vunpack.c.l.b16 %v463
    %v654 = vunpack.c.h.b16 %v463
    %v655 = vunpack.c.l.b16 %v464
    %v656 = vunpack.c.h.b16 %v464
    %v657 = vpack.c.b16 %v533, %v529
    %v658 = vpack.c.b16 %v534, %v530
    %v659 = vpack.c.b16 %v535, %v531
    %v660 = vpack.c.b16 %v536, %v532
    %v661 = vpack.c.b16 %v541, %v537
    %v662 = vpack.c.b16 %v542, %v538
    %v663 = vpack.c.b16 %v543, %v539
    %v664 = vpack.c.b16 %v544, %v540
    %v665 = vpack.c.b16 %v549, %v545
    %v666 = vpack.c.b16 %v550, %v546
    %v667 = vpack.c.b16 %v551, %v547
    %v668 = vpack.c.b16 %v552, %v548
    %v669 = vpack.c.b16 %v557, %v553
    %v670 = vpack.c.b16 %v558, %v554
    %v671 = vpack.c.b16 %v559, %v555
    %v672 = vpack.c.b16 %v560, %v556
    %v673 = vpack.c.b16 %v565, %v561
    %v674 = vpack.c.b16 %v566, %v562
    %v675 = vpack.c.b16 %v567, %v563
    %v676 = vpack.c.b16 %v568, %v564
    %v677 = vpack.c.b16 %v573, %v569
    %v678 = vpack.c.b16 %v574, %v570
    %v679 = vpack.c.b16 %v575, %v571
    %v680 = vpack.c.b16 %v576, %v572
    %v681 = vpack.c.b16 %v581, %v577
    %v682 = vpack.c.b16 %v582, %v578
    %v683 = vpack.c.b16 %v583, %v579
    %v684 = vpack.c.b16 %v584, %v580
    %v685 = vpack.c.b16 %v589, %v585
    %v686 = vpack.c.b16 %v590, %v586
    %v687 = vpack.c.b16 %v591, %v587
    %v688 = vpack.c.b16 %v592, %v588
    %v689 = vpack.c.b16 %v597, %v593
    %v690 = vpack.c.b16 %v598, %v594
    %v691 = vpack.c.b16 %v599, %v595
    %v692 = vpack.c.b16 %v600, %v596
    %v693 = vpack.c.b16 %v605, %v601
    %v694 = vpack.c.b16 %v606, %v602
    %v695 = vpack.c.b16 %v607, %v603
    %v696 = vpack.c.b16 %v608, %v604
    %v697 = vpack.c.b16 %v613, %v609
    %v698 = vpack.c.b16 %v614, %v610
    %v699 = vpack.c.b16 %v615, %v611
    %v700 = vpack.c.b16 %v616, %v612
    %v701 = vpack.c.b16 %v621, %v617
    %v702 = vpack.c.b16 %v622, %v618
    %v703 = vpack.c.b16 %v623, %v619
    %v704 = vpack.c.b16 %v624, %v620
    %v705 = vpack.c.b16 %v629, %v625
    %v706 = vpack.c.b16 %v630, %v626
    %v707 = vpack.c.b16 %v631, %v627
    %v708 = vpack.c.b16 %v632, %v628
    %v709 = vpack.c.b16 %v637, %v633
    %v710 = vpack.c.b16 %v638, %v634
    %v711 = vpack.c.b16 %v639, %v635
    %v712 = vpack.c.b16 %v640, %v636
    %v713 = vpack.c.b16 %v645, %v641
    %v714 = vpack.c.b16 %v646, %v642
    %v715 = vpack.c.b16 %v647, %v643
    %v716 = vpack.c.b16 %v648, %v644
    %v717 = vpack.c.b16 %v653, %v649
    %v718 = vpack.c.b16 %v654, %v650
    %v719 = vpack.c.b16 %v655, %v651
    %v720 = vpack.c.b16 %v656, %v652
    %785 = vmatprep.subr.bf16.mxu0 %v658
    %786 = vmatpush1.bf16.msra.mxu0 %v657
    %787 = vmatprep.subr.bf16.mxu0 %v662
    %788 = vmatpush1.bf16.msra.mxu0 %v661
    %789 = vmatprep.subr.bf16.mxu0 %v666
    %790 = vmatpush1.bf16.msra.mxu0 %v665
    %791 = vmatprep.subr.bf16.mxu0 %v670
    %792 = vmatpush1.bf16.msra.mxu0 %v669
    %793 = vmatprep.subr.bf16.mxu0 %v674
    %794 = vmatpush1.bf16.msra.mxu0 %v673
    %795 = vmatprep.subr.bf16.mxu0 %v678
    %796 = vmatpush1.bf16.msra.mxu0 %v677
    %797 = vmatprep.subr.bf16.mxu0 %v682
    %798 = vmatpush1.bf16.msra.mxu0 %v681
    %799 = vmatprep.subr.bf16.mxu0 %v686
    %800 = vmatpush1.bf16.msra.mxu0 %v685
    %801 = vmatprep.subr.bf16.mxu0 %v690
    %802 = vmatpush1.bf16.msra.mxu0 %v689
    %803 = vmatprep.subr.bf16.mxu0 %v694
    %804 = vmatpush1.bf16.msra.mxu0 %v693
    %805 = vmatprep.subr.bf16.mxu0 %v698
    %806 = vmatpush1.bf16.msra.mxu0 %v697
    %807 = vmatprep.subr.bf16.mxu0 %v702
    %808 = vmatpush1.bf16.msra.mxu0 %v701
    %809 = vmatprep.subr.bf16.mxu0 %v706
    %810 = vmatpush1.bf16.msra.mxu0 %v705
    %811 = vmatprep.subr.bf16.mxu0 %v710
    %812 = vmatpush1.bf16.msra.mxu0 %v709
    %813 = vmatprep.subr.bf16.mxu0 %v714
    %814 = vmatpush1.bf16.msra.mxu0 %v713
    %815 = vmatprep.subr.bf16.mxu0 %v718
    %816 = vmatpush1.bf16.msra.mxu0 %v717
    %817 = vmatprep.mubr.bf16.mxu0 %v394
    %818 = vmatmul.mubr.bf16.gmra.mrb[0].mxu0 %v393
    %v819 = vpop.f32.mrb[0].mxu0
    %v820 = vadd.f32 0.0, %v819
    %v821 = vpop.f32.mrb[0].mxu0
    %v822 = vadd.f32 0.0, %v821
    %v823 = vpop.f32.mrb[0].mxu0
    %v824 = vadd.f32 0.0, %v823
    %v825 = vpop.f32.mrb[0].mxu0
    %v826 = vadd.f32 0.0, %v825
    %827 = vmatprep.mubr.bf16.mxu0 %v396
    %828 = vmatmul.mubr.bf16.gmra.mrb[0].mxu0 %v395
    %v829 = vpop.f32.mrb[0].mxu0
    %v830 = vadd.f32 0.0, %v829
    %v831 = vpop.f32.mrb[0].mxu0
    %v832 = vadd.f32 0.0, %v831
    %v833 = vpop.f32.mrb[0].mxu0
    %v834 = vadd.f32 0.0, %v833
    %v835 = vpop.f32.mrb[0].mxu0
    %v836 = vadd.f32 0.0, %v835
    %837 = vmatprep.mubr.bf16.mxu0 %v398
    %838 = vmatmul.mubr.bf16.gmra.mrb[0].mxu0 %v397
    %v839 = vpop.f32.mrb[0].mxu0
    %v840 = vadd.f32 0.0, %v839
    %v841 = vpop.f32.mrb[0].mxu0
    %v842 = vadd.f32 0.0, %v841
    %v843 = vpop.f32.mrb[0].mxu0
    %v844 = vadd.f32 0.0, %v843
    %v845 = vpop.f32.mrb[0].mxu0
    %v846 = vadd.f32 0.0, %v845
    %847 = vmatprep.mubr.bf16.mxu0 %v400
    %848 = vmatmul.mubr.bf16.gmra.mrb[0].mxu0 %v399
    %v849 = vpop.f32.mrb[0].mxu0
    %v850 = vadd.f32 0.0, %v849
    %v851 = vpop.f32.mrb[0].mxu0
    %v852 = vadd.f32 0.0, %v851
    %v853 = vpop.f32.mrb[0].mxu0
    %v854 = vadd.f32 0.0, %v853
    %v855 = vpop.f32.mrb[0].mxu0
    %v856 = vadd.f32 0.0, %v855
    %857 = vdwg.mxu0
    %858 = vmatprep.subr.bf16.mxu0 %v660
    %859 = vmatpush1.bf16.msra.mxu0 %v659
    %860 = vmatprep.subr.bf16.mxu0 %v664
    %861 = vmatpush1.bf16.msra.mxu0 %v663
    %862 = vmatprep.subr.bf16.mxu0 %v668
    %863 = vmatpush1.bf16.msra.mxu0 %v667
    %864 = vmatprep.subr.bf16.mxu0 %v672
    %865 = vmatpush1.bf16.msra.mxu0 %v671
    %866 = vmatprep.subr.bf16.mxu0 %v676
    %867 = vmatpush1.bf16.msra.mxu0 %v675
    %868 = vmatprep.subr.bf16.mxu0 %v680
    %869 = vmatpush1.bf16.msra.mxu0 %v679
    %870 = vmatprep.subr.bf16.mxu0 %v684
    %871 = vmatpush1.bf16.msra.mxu0 %v683
    %872 = vmatprep.subr.bf16.mxu0 %v688
    %873 = vmatpush1.bf16.msra.mxu0 %v687
    %874 = vmatprep.subr.bf16.mxu0 %v692
    %875 = vmatpush1.bf16.msra.mxu0 %v691
    %876 = vmatprep.subr.bf16.mxu0 %v696
    %877 = vmatpush1.bf16.msra.mxu0 %v695
    %878 = vmatprep.subr.bf16.mxu0 %v700
    %879 = vmatpush1.bf16.msra.mxu0 %v699
    %880 = vmatprep.subr.bf16.mxu0 %v704
    %881 = vmatpush1.bf16.msra.mxu0 %v703
    %882 = vmatprep.subr.bf16.mxu0 %v708
    %883 = vmatpush1.bf16.msra.mxu0 %v707
    %884 = vmatprep.subr.bf16.mxu0 %v712
    %885 = vmatpush1.bf16.msra.mxu0 %v711
    %886 = vmatprep.subr.bf16.mxu0 %v716
    %887 = vmatpush1.bf16.msra.mxu0 %v715
    %888 = vmatprep.subr.bf16.mxu0 %v720
    %889 = vmatpush1.bf16.msra.mxu0 %v719
    %890 = vmatprep.mubr.bf16.mxu0 %v394
    %891 = vmatmul.mubr.bf16.gmra.mrb[0].mxu0 %v393
    %v892 = vpop.f32.mrb[0].mxu0
    %v893 = vadd.f32 0.0, %v892
    %v894 = vpop.f32.mrb[0].mxu0
    %v895 = vadd.f32 0.0, %v894
    %v896 = vpop.f32.mrb[0].mxu0
    %v897 = vadd.f32 0.0, %v896
    %v898 = vpop.f32.mrb[0].mxu0
    %v899 = vadd.f32 0.0, %v898
    %900 = vmatprep.mubr.bf16.mxu0 %v396
    %901 = vmatmul.mubr.bf16.gmra.mrb[0].mxu0 %v395
    %v902 = vpop.f32.mrb[0].mxu0
    %v903 = vadd.f32 0.0, %v902
    %v904 = vpop.f32.mrb[0].mxu0
    %v905 = vadd.f32 0.0, %v904
    %v906 = vpop.f32.mrb[0].mxu0
    %v907 = vadd.f32 0.0, %v906
    %v908 = vpop.f32.mrb[0].mxu0
    %v909 = vadd.f32 0.0, %v908
    %910 = vmatprep.mubr.bf16.mxu0 %v398
    %911 = vmatmul.mubr.bf16.gmra.mrb[0].mxu0 %v397
    %v912 = vpop.f32.mrb[0].mxu0
    %v913 = vadd.f32 0.0, %v912
    %v914 = vpop.f32.mrb[0].mxu0
    %v915 = vadd.f32 0.0, %v914
    %v916 = vpop.f32.mrb[0].mxu0
    %v917 = vadd.f32 0.0, %v916
    %v918 = vpop.f32.mrb[0].mxu0
    %v919 = vadd.f32 0.0, %v918
    %920 = vmatprep.mubr.bf16.mxu0 %v400
    %921 = vmatmul.mubr.bf16.gmra.mrb[0].mxu0 %v399
    %v922 = vpop.f32.mrb[0].mxu0
    %v923 = vadd.f32 0.0, %v922
    %v924 = vpop.f32.mrb[0].mxu0
    %v925 = vadd.f32 0.0, %v924
    %v926 = vpop.f32.mrb[0].mxu0
    %v927 = vadd.f32 0.0, %v926
    %v928 = vpop.f32.mrb[0].mxu0
    %v929 = vadd.f32 0.0, %v928
    %930 = vdwg.mxu0
    %v931 = vadd.f32 %v820, %v824
    %v932 = vadd.f32 %v931, %v830
    %v933 = vadd.f32 %v932, %v834
    %v934 = vrot.slane %v933, 4
    %v935 = vadd.f32 %v933, %v934
    %v936 = vrot.slane %v935, 2
    %v937 = vadd.f32 %v935, %v936
    %v938 = vrot.slane %v937, 1
    %v939 = vadd.f32 %v937, %v938
    %v940 = vadd.f32 %v822, %v826
    %v941 = vadd.f32 %v940, %v832
    %v942 = vadd.f32 %v941, %v836
    %v943 = vrot.slane %v942, 4
    %v944 = vadd.f32 %v942, %v943
    %v945 = vrot.slane %v944, 2
    %v946 = vadd.f32 %v944, %v945
    %v947 = vrot.slane %v946, 1
    %v948 = vadd.f32 %v946, %v947
    %v949 = vadd.f32 %v893, %v897
    %v950 = vadd.f32 %v949, %v903
    %v951 = vadd.f32 %v950, %v907
    %v952 = vrot.slane %v951, 4
    %v953 = vadd.f32 %v951, %v952
    %v954 = vrot.slane %v953, 2
    %v955 = vadd.f32 %v953, %v954
    %v956 = vrot.slane %v955, 1
    %v957 = vadd.f32 %v955, %v956
    %v958 = vadd.f32 %v895, %v899
    %v959 = vadd.f32 %v958, %v905
    %v960 = vadd.f32 %v959, %v909
    %v961 = vrot.slane %v960, 4
    %v962 = vadd.f32 %v960, %v961
    %v963 = vrot.slane %v962, 2
    %v964 = vadd.f32 %v962, %v963
    %v965 = vrot.slane %v964, 1
    %v966 = vadd.f32 %v964, %v965
    %v967 = vrcp.pop 32.0
    %v968 = vmul.f32 %v939, %v967
    %v969 = vmul.f32 %v948, %v967
    %v970 = vmul.f32 %v957, %v967
    %v971 = vmul.f32 %v966, %v967
    %v972 = vsub.f32 %v820, %v968
    %v973 = vsub.f32 %v822, %v969
    %v974 = vsub.f32 %v893, %v970
    %v975 = vsub.f32 %v895, %v971
    %v976 = vsub.f32 %v824, %v968
    %v977 = vsub.f32 %v826, %v969
    %v978 = vsub.f32 %v897, %v970
    %v979 = vsub.f32 %v899, %v971
    %v980 = vsub.f32 %v830, %v968
    %v981 = vsub.f32 %v832, %v969
    %v982 = vsub.f32 %v903, %v970
    %v983 = vsub.f32 %v905, %v971
    %v984 = vsub.f32 %v834, %v968
    %v985 = vsub.f32 %v836, %v969
    %v986 = vsub.f32 %v907, %v970
    %v987 = vsub.f32 %v909, %v971
    %v988 = vmul.f32 %v972, %v972
    %v989 = vmul.f32 %v973, %v973
    %v990 = vmul.f32 %v974, %v974
    %v991 = vmul.f32 %v975, %v975
    %v992 = vmul.f32 %v976, %v976
    %v993 = vmul.f32 %v977, %v977
    %v994 = vmul.f32 %v978, %v978
    %v995 = vmul.f32 %v979, %v979
    %v996 = vmul.f32 %v980, %v980
    %v997 = vmul.f32 %v981, %v981
    %v998 = vmul.f32 %v982, %v982
    %v999 = vmul.f32 %v983, %v983
    %v1000 = vmul.f32 %v984, %v984
    %v1001 = vmul.f32 %v985, %v985
    %v1002 = vmul.f32 %v986, %v986
    %v1003 = vmul.f32 %v987, %v987
    %v1004 = vadd.f32 %v988, %v992
    %v1005 = vadd.f32 %v1004, %v996
    %v1006 = vadd.f32 %v1005, %v1000
    %v1007 = vrot.slane %v1006, 4
    %v1008 = vadd.f32 %v1006, %v1007
    %v1009 = vrot.slane %v1008, 2
    %v1010 = vadd.f32 %v1008, %v1009
    %v1011 = vrot.slane %v1010, 1
    %v1012 = vadd.f32 %v1010, %v1011
    %v1013 = vadd.f32 %v989, %v993
    %v1014 = vadd.f32 %v1013, %v997
    %v1015 = vadd.f32 %v1014, %v1001
    %v1016 = vrot.slane %v1015, 4
    %v1017 = vadd.f32 %v1015, %v1016
    %v1018 = vrot.slane %v1017, 2
    %v1019 = vadd.f32 %v1017, %v1018
    %v1020 = vrot.slane %v1019, 1
    %v1021 = vadd.f32 %v1019, %v1020
    %v1022 = vadd.f32 %v990, %v994
    %v1023 = vadd.f32 %v1022, %v998
    %v1024 = vadd.f32 %v1023, %v1002
    %v1025 = vrot.slane %v1024, 4
    %v1026 = vadd.f32 %v1024, %v1025
    %v1027 = vrot.slane %v1026, 2
    %v1028 = vadd.f32 %v1026, %v1027
    %v1029 = vrot.slane %v1028, 1
    %v1030 = vadd.f32 %v1028, %v1029
    %v1031 = vadd.f32 %v991, %v995
    %v1032 = vadd.f32 %v1031, %v999
    %v1033 = vadd.f32 %v1032, %v1003
    %v1034 = vrot.slane %v1033, 4
    %v1035 = vadd.f32 %v1033, %v1034
    %v1036 = vrot.slane %v1035, 2
    %v1037 = vadd.f32 %v1035, %v1036
    %v1038 = vrot.slane %v1037, 1
    %v1039 = vadd.f32 %v1037, %v1038
    %v1040 = vmul.f32 %v1012, %v967
    %v1041 = vmul.f32 %v1021, %v967
    %v1042 = vmul.f32 %v1030, %v967
    %v1043 = vmul.f32 %v1039, %v967
    %v1044 = vadd.f32 %v1040, 1e-05
    %v1045 = vadd.f32 %v1041, 1e-05
    %v1046 = vadd.f32 %v1042, 1e-05
    %v1047 = vadd.f32 %v1043, 1e-05
    %v1048 = vrsqrt.pop %v1044
    %v1049 = vrsqrt.pop %v1045
    %v1050 = vrsqrt.pop %v1046
    %v1051 = vrsqrt.pop %v1047
    %v1053 = vlaneseq
    %v1054 = vshrl.u32 %v1053, 7
    %v1055 = vsub.s32 0, %v1054
    %v1056 = vrot.slane %v87, %v1055
    %v1057 = vlaneseq
    %v1058 = vshrl.u32 %v1057, 7
    %v1059 = vsub.s32 1, %v1058
    %v1060 = vrot.slane %v87, %v1059
    %v1061 = vlaneseq
    %v1062 = vshrl.u32 %v1061, 7
    %v1063 = vsub.s32 2, %v1062
    %v1064 = vrot.slane %v87, %v1063
    %v1065 = vlaneseq
    %v1066 = vshrl.u32 %v1065, 7
    %v1067 = vsub.s32 3, %v1066
    %v1068 = vrot.slane %v87, %v1067
    %v1073 = vmul.f32 %v1048, %v1056
    %v1074 = vmul.f32 %v1049, %v1060
    %v1075 = vmul.f32 %v1050, %v1064
    %v1076 = vmul.f32 %v1051, %v1068
    %v1077 = vlaneseq
    %v1078 = vshrl.u32 %v1077, 7
    %v1079 = vsub.s32 0, %v1078
    %v1080 = vrot.slane %v1073, %v1079
    %v1081 = vlaneseq
    %v1082 = vshrl.u32 %v1081, 7
    %v1083 = vsub.s32 0, %v1082
    %v1084 = vrot.slane %v1074, %v1083
    %v1085 = vlaneseq
    %v1086 = vshrl.u32 %v1085, 7
    %v1087 = vsub.s32 0, %v1086
    %v1088 = vrot.slane %v1075, %v1087
    %v1089 = vlaneseq
    %v1090 = vshrl.u32 %v1089, 7
    %v1091 = vsub.s32 0, %v1090
    %v1092 = vrot.slane %v1076, %v1091
    %v1093 = vmul.f32 %v972, %v1080
    %v1094 = vmul.f32 %v973, %v1084
    %v1095 = vmul.f32 %v974, %v1088
    %v1096 = vmul.f32 %v975, %v1092
    %v1097 = vmul.f32 %v976, %v1080
    %v1098 = vmul.f32 %v977, %v1084
    %v1099 = vmul.f32 %v978, %v1088
    %v1100 = vmul.f32 %v979, %v1092
    %v1101 = vmul.f32 %v980, %v1080
    %v1102 = vmul.f32 %v981, %v1084
    %v1103 = vmul.f32 %v982, %v1088
    %v1104 = vmul.f32 %v983, %v1092
    %v1105 = vmul.f32 %v984, %v1080
    %v1106 = vmul.f32 %v985, %v1084
    %v1107 = vmul.f32 %v986, %v1088
    %v1108 = vmul.f32 %v987, %v1092
    %v1110 = vlaneseq
    %v1111 = vshrl.u32 %v1110, 7
    %v1112 = vsub.s32 0, %v1111
    %v1113 = vrot.slane %v88, %v1112
    %v1114 = vlaneseq
    %v1115 = vshrl.u32 %v1114, 7
    %v1116 = vsub.s32 1, %v1115
    %v1117 = vrot.slane %v88, %v1116
    %v1118 = vlaneseq
    %v1119 = vshrl.u32 %v1118, 7
    %v1120 = vsub.s32 2, %v1119
    %v1121 = vrot.slane %v88, %v1120
    %v1122 = vlaneseq
    %v1123 = vshrl.u32 %v1122, 7
    %v1124 = vsub.s32 3, %v1123
    %v1125 = vrot.slane %v88, %v1124
    %v1130 = vadd.f32 %v1093, %v1113
    %v1131 = vadd.f32 %v1094, %v1117
    %v1132 = vadd.f32 %v1095, %v1121
    %v1133 = vadd.f32 %v1096, %v1125
    %v1134 = vadd.f32 %v1097, %v1113
    %v1135 = vadd.f32 %v1098, %v1117
    %v1136 = vadd.f32 %v1099, %v1121
    %v1137 = vadd.f32 %v1100, %v1125
    %v1138 = vadd.f32 %v1101, %v1113
    %v1139 = vadd.f32 %v1102, %v1117
    %v1140 = vadd.f32 %v1103, %v1121
    %v1141 = vadd.f32 %v1104, %v1125
    %v1142 = vadd.f32 %v1105, %v1113
    %v1143 = vadd.f32 %v1106, %v1117
    %v1144 = vadd.f32 %v1107, %v1121
    %v1145 = vadd.f32 %v1108, %v1125
    %v1146 = vmax.f32 %v1130, 0.0
    %v1147 = vmax.f32 %v1131, 0.0
    %v1148 = vmax.f32 %v1132, 0.0
    %v1149 = vmax.f32 %v1133, 0.0
    %v1150 = vmax.f32 %v1134, 0.0
    %v1151 = vmax.f32 %v1135, 0.0
    %v1152 = vmax.f32 %v1136, 0.0
    %v1153 = vmax.f32 %v1137, 0.0
    %v1154 = vmax.f32 %v1138, 0.0
    %v1155 = vmax.f32 %v1139, 0.0
    %v1156 = vmax.f32 %v1140, 0.0
    %v1157 = vmax.f32 %v1141, 0.0
    %v1158 = vmax.f32 %v1142, 0.0
    %v1159 = vmax.f32 %v1143, 0.0
    %v1160 = vmax.f32 %v1144, 0.0
    %v1161 = vmax.f32 %v1145, 0.0
    %v1162 = vpack.c.bf16 %v1150, %v1146
    %v1163 = vpack.c.bf16 %v1151, %v1147
    %v1164 = vpack.c.bf16 %v1152, %v1148
    %v1165 = vpack.c.bf16 %v1153, %v1149
    %v1166 = vpack.c.bf16 %v1158, %v1154
    %v1167 = vpack.c.bf16 %v1159, %v1155
    %v1168 = vpack.c.bf16 %v1160, %v1156
    %v1169 = vpack.c.bf16 %v1161, %v1157
    %1170 = vst [vmem:[#allocation2] sm:$0xff] %v1162
    %1171 = vst [vmem:[#allocation2 + $0x8] sm:$0xff] %v1163
    %1172 = vst [vmem:[#allocation2 + $0x10] sm:$0xff] %v1164
    %1173 = vst [vmem:[#allocation2 + $0x18] sm:$0xff] %v1165
    %1174 = vst [vmem:[#allocation2 + $0x20] sm:$0xff] %v1166
    %1175 = vst [vmem:[#allocation2 + $0x28] sm:$0xff] %v1167
    %1176 = vst [vmem:[#allocation2 + $0x30] sm:$0xff] %v1168
    %1177 = vst [vmem:[#allocation2 + $0x38] sm:$0xff] %v1169
    %v1178 = vadd.f32 %v840, %v844
    %v1179 = vadd.f32 %v1178, %v850
    %v1180 = vadd.f32 %v1179, %v854
    %v1181 = vrot.slane %v1180, 4
    %v1182 = vadd.f32 %v1180, %v1181
    %v1183 = vrot.slane %v1182, 2
    %v1184 = vadd.f32 %v1182, %v1183
    %v1185 = vrot.slane %v1184, 1
    %v1186 = vadd.f32 %v1184, %v1185
    %v1187 = vadd.f32 %v842, %v846
    %v1188 = vadd.f32 %v1187, %v852
    %v1189 = vadd.f32 %v1188, %v856
    %v1190 = vrot.slane %v1189, 4
    %v1191 = vadd.f32 %v1189, %v1190
    %v1192 = vrot.slane %v1191, 2
    %v1193 = vadd.f32 %v1191, %v1192
    %v1194 = vrot.slane %v1193, 1
    %v1195 = vadd.f32 %v1193, %v1194
    %v1196 = vadd.f32 %v913, %v917
    %v1197 = vadd.f32 %v1196, %v923
    %v1198 = vadd.f32 %v1197, %v927
    %v1199 = vrot.slane %v1198, 4
    %v1200 = vadd.f32 %v1198, %v1199
    %v1201 = vrot.slane %v1200, 2
    %v1202 = vadd.f32 %v1200, %v1201
    %v1203 = vrot.slane %v1202, 1
    %v1204 = vadd.f32 %v1202, %v1203
    %v1205 = vadd.f32 %v915, %v919
    %v1206 = vadd.f32 %v1205, %v925
    %v1207 = vadd.f32 %v1206, %v929
    %v1208 = vrot.slane %v1207, 4
    %v1209 = vadd.f32 %v1207, %v1208
    %v1210 = vrot.slane %v1209, 2
    %v1211 = vadd.f32 %v1209, %v1210
    %v1212 = vrot.slane %v1211, 1
    %v1213 = vadd.f32 %v1211, %v1212
    %v1214 = vmul.f32 %v1186, %v967
    %v1215 = vmul.f32 %v1195, %v967
    %v1216 = vmul.f32 %v1204, %v967
    %v1217 = vmul.f32 %v1213, %v967
    %v1218 = vsub.f32 %v840, %v1214
    %v1219 = vsub.f32 %v842, %v1215
    %v1220 = vsub.f32 %v913, %v1216
    %v1221 = vsub.f32 %v915, %v1217
    %v1222 = vsub.f32 %v844, %v1214
    %v1223 = vsub.f32 %v846, %v1215
    %v1224 = vsub.f32 %v917, %v1216
    %v1225 = vsub.f32 %v919, %v1217
    %v1226 = vsub.f32 %v850, %v1214
    %v1227 = vsub.f32 %v852, %v1215
    %v1228 = vsub.f32 %v923, %v1216
    %v1229 = vsub.f32 %v925, %v1217
    %v1230 = vsub.f32 %v854, %v1214
    %v1231 = vsub.f32 %v856, %v1215
    %v1232 = vsub.f32 %v927, %v1216
    %v1233 = vsub.f32 %v929, %v1217
    %v1234 = vmul.f32 %v1218, %v1218
    %v1235 = vmul.f32 %v1219, %v1219
    %v1236 = vmul.f32 %v1220, %v1220
    %v1237 = vmul.f32 %v1221, %v1221
    %v1238 = vmul.f32 %v1222, %v1222
    %v1239 = vmul.f32 %v1223, %v1223
    %v1240 = vmul.f32 %v1224, %v1224
    %v1241 = vmul.f32 %v1225, %v1225
    %v1242 = vmul.f32 %v1226, %v1226
    %v1243 = vmul.f32 %v1227, %v1227
    %v1244 = vmul.f32 %v1228, %v1228
    %v1245 = vmul.f32 %v1229, %v1229
    %v1246 = vmul.f32 %v1230, %v1230
    %v1247 = vmul.f32 %v1231, %v1231
    %v1248 = vmul.f32 %v1232, %v1232
    %v1249 = vmul.f32 %v1233, %v1233
    %v1250 = vadd.f32 %v1234, %v1238
    %v1251 = vadd.f32 %v1250, %v1242
    %v1252 = vadd.f32 %v1251, %v1246
    %v1253 = vrot.slane %v1252, 4
    %v1254 = vadd.f32 %v1252, %v1253
    %v1255 = vrot.slane %v1254, 2
    %v1256 = vadd.f32 %v1254, %v1255
    %v1257 = vrot.slane %v1256, 1
    %v1258 = vadd.f32 %v1256, %v1257
    %v1259 = vadd.f32 %v1235, %v1239
    %v1260 = vadd.f32 %v1259, %v1243
    %v1261 = vadd.f32 %v1260, %v1247
    %v1262 = vrot.slane %v1261, 4
    %v1263 = vadd.f32 %v1261, %v1262
    %v1264 = vrot.slane %v1263, 2
    %v1265 = vadd.f32 %v1263, %v1264
    %v1266 = vrot.slane %v1265, 1
    %v1267 = vadd.f32 %v1265, %v1266
    %v1268 = vadd.f32 %v1236, %v1240
    %v1269 = vadd.f32 %v1268, %v1244
    %v1270 = vadd.f32 %v1269, %v1248
    %v1271 = vrot.slane %v1270, 4
    %v1272 = vadd.f32 %v1270, %v1271
    %v1273 = vrot.slane %v1272, 2
    %v1274 = vadd.f32 %v1272, %v1273
    %v1275 = vrot.slane %v1274, 1
    %v1276 = vadd.f32 %v1274, %v1275
    %v1277 = vadd.f32 %v1237, %v1241
    %v1278 = vadd.f32 %v1277, %v1245
    %v1279 = vadd.f32 %v1278, %v1249
    %v1280 = vrot.slane %v1279, 4
    %v1281 = vadd.f32 %v1279, %v1280
    %v1282 = vrot.slane %v1281, 2
    %v1283 = vadd.f32 %v1281, %v1282
    %v1284 = vrot.slane %v1283, 1
    %v1285 = vadd.f32 %v1283, %v1284
    %v1286 = vmul.f32 %v1258, %v967
    %v1287 = vmul.f32 %v1267, %v967
    %v1288 = vmul.f32 %v1276, %v967
    %v1289 = vmul.f32 %v1285, %v967
    %v1290 = vadd.f32 %v1286, 1e-05
    %v1291 = vadd.f32 %v1287, 1e-05
    %v1292 = vadd.f32 %v1288, 1e-05
    %v1293 = vadd.f32 %v1289, 1e-05
    %v1294 = vrsqrt.pop %v1290
    %v1295 = vrsqrt.pop %v1291
    %v1296 = vrsqrt.pop %v1292
    %v1297 = vrsqrt.pop %v1293
    %v1298 = vmul.f32 %v1294, %v1056
    %v1299 = vmul.f32 %v1295, %v1060
    %v1300 = vmul.f32 %v1296, %v1064
    %v1301 = vmul.f32 %v1297, %v1068
    %v1302 = vlaneseq
    %v1303 = vshrl.u32 %v1302, 7
    %v1304 = vsub.s32 0, %v1303
    %v1305 = vrot.slane %v1298, %v1304
    %v1306 = vlaneseq
    %v1307 = vshrl.u32 %v1306, 7
    %v1308 = vsub.s32 0, %v1307
    %v1309 = vrot.slane %v1299, %v1308
    %v1310 = vlaneseq
    %v1311 = vshrl.u32 %v1310, 7
    %v1312 = vsub.s32 0, %v1311
    %v1313 = vrot.slane %v1300, %v1312
    %v1314 = vlaneseq
    %v1315 = vshrl.u32 %v1314, 7
    %v1316 = vsub.s32 0, %v1315
    %v1317 = vrot.slane %v1301, %v1316
    %v1318 = vmul.f32 %v1218, %v1305
    %v1319 = vmul.f32 %v1219, %v1309
    %v1320 = vmul.f32 %v1220, %v1313
    %v1321 = vmul.f32 %v1221, %v1317
    %v1322 = vmul.f32 %v1222, %v1305
    %v1323 = vmul.f32 %v1223, %v1309
    %v1324 = vmul.f32 %v1224, %v1313
    %v1325 = vmul.f32 %v1225, %v1317
    %v1326 = vmul.f32 %v1226, %v1305
    %v1327 = vmul.f32 %v1227, %v1309
    %v1328 = vmul.f32 %v1228, %v1313
    %v1329 = vmul.f32 %v1229, %v1317
    %v1330 = vmul.f32 %v1230, %v1305
    %v1331 = vmul.f32 %v1231, %v1309
    %v1332 = vmul.f32 %v1232, %v1313
    %v1333 = vmul.f32 %v1233, %v1317
    %v1334 = vadd.f32 %v1318, %v1113
    %v1335 = vadd.f32 %v1319, %v1117
    %v1336 = vadd.f32 %v1320, %v1121
    %v1337 = vadd.f32 %v1321, %v1125
    %v1338 = vadd.f32 %v1322, %v1113
    %v1339 = vadd.f32 %v1323, %v1117
    %v1340 = vadd.f32 %v1324, %v1121
    %v1341 = vadd.f32 %v1325, %v1125
    %v1342 = vadd.f32 %v1326, %v1113
    %v1343 = vadd.f32 %v1327, %v1117
    %v1344 = vadd.f32 %v1328, %v1121
    %v1345 = vadd.f32 %v1329, %v1125
    %v1346 = vadd.f32 %v1330, %v1113
    %v1347 = vadd.f32 %v1331, %v1117
    %v1348 = vadd.f32 %v1332, %v1121
    %v1349 = vadd.f32 %v1333, %v1125
    %v1350 = vmax.f32 %v1334, 0.0
    %v1351 = vmax.f32 %v1335, 0.0
    %v1352 = vmax.f32 %v1336, 0.0
    %v1353 = vmax.f32 %v1337, 0.0
    %v1354 = vmax.f32 %v1338, 0.0
    %v1355 = vmax.f32 %v1339, 0.0
    %v1356 = vmax.f32 %v1340, 0.0
    %v1357 = vmax.f32 %v1341, 0.0
    %v1358 = vmax.f32 %v1342, 0.0
    %v1359 = vmax.f32 %v1343, 0.0
    %v1360 = vmax.f32 %v1344, 0.0
    %v1361 = vmax.f32 %v1345, 0.0
    %v1362 = vmax.f32 %v1346, 0.0
    %v1363 = vmax.f32 %v1347, 0.0
    %v1364 = vmax.f32 %v1348, 0.0
    %v1365 = vmax.f32 %v1349, 0.0
    %v1366 = vpack.c.bf16 %v1354, %v1350
    %v1367 = vpack.c.bf16 %v1355, %v1351
    %v1368 = vpack.c.bf16 %v1356, %v1352
    %v1369 = vpack.c.bf16 %v1357, %v1353
    %v1370 = vpack.c.bf16 %v1362, %v1358
    %v1371 = vpack.c.bf16 %v1363, %v1359
    %v1372 = vpack.c.bf16 %v1364, %v1360
    %v1373 = vpack.c.bf16 %v1365, %v1361
    %1374 = vst [vmem:[#allocation2 + $0x40] sm:$0xff] %v1366
    %1375 = vst [vmem:[#allocation2 + $0x48] sm:$0xff] %v1367
    %1376 = vst [vmem:[#allocation2 + $0x50] sm:$0xff] %v1368
    %1377 = vst [vmem:[#allocation2 + $0x58] sm:$0xff] %v1369
    %1378 = vst [vmem:[#allocation2 + $0x60] sm:$0xff] %v1370
    %1379 = vst [vmem:[#allocation2 + $0x68] sm:$0xff] %v1371
    %1380 = vst [vmem:[#allocation2 + $0x70] sm:$0xff] %v1372
    %1381 = vst [vmem:[#allocation2 + $0x78] sm:$0xff] %v1373
    %v1382 = vld [vmem:[#allocation2] sm:$0xff]
    %v1383 = vld [vmem:[#allocation2 + $0x8] sm:$0xff]
    %v1384 = vld [vmem:[#allocation2 + $0x10] sm:$0xff]
    %v1385 = vld [vmem:[#allocation2 + $0x18] sm:$0xff]
    %v1386 = vld [vmem:[#allocation2 + $0x20] sm:$0xff]
    %v1387 = vld [vmem:[#allocation2 + $0x28] sm:$0xff]
    %v1388 = vld [vmem:[#allocation2 + $0x30] sm:$0xff]
    %v1389 = vld [vmem:[#allocation2 + $0x38] sm:$0xff]
    %v1390 = vld [vmem:[#allocation2 + $0x40] sm:$0xff]
    %v1391 = vld [vmem:[#allocation2 + $0x48] sm:$0xff]
    %v1392 = vld [vmem:[#allocation2 + $0x50] sm:$0xff]
    %v1393 = vld [vmem:[#allocation2 + $0x58] sm:$0xff]
    %v1394 = vld [vmem:[#allocation2 + $0x60] sm:$0xff]
    %v1395 = vld [vmem:[#allocation2 + $0x68] sm:$0xff]
    %v1396 = vld [vmem:[#allocation2 + $0x70] sm:$0xff]
    %v1397 = vld [vmem:[#allocation2 + $0x78] sm:$0xff]
    %v1398 = vld [vmem:[#allocation5] sm:$0xff]
    %v1399 = vld [vmem:[#allocation5 + $0x8] sm:$0xff]
    %v1400 = vld [vmem:[#allocation5 + $0x10] sm:$0xff]
    %v1401 = vld [vmem:[#allocation5 + $0x18] sm:$0xff]
    %v1402 = vld [vmem:[#allocation5 + $0x20] sm:$0xff]
    %v1403 = vld [vmem:[#allocation5 + $0x28] sm:$0xff]
    %v1404 = vld [vmem:[#allocation5 + $0x30] sm:$0xff]
    %v1405 = vld [vmem:[#allocation5 + $0x38] sm:$0xff]
    %v1406 = vld [vmem:[#allocation5 + $0x40] sm:$0xff]
    %v1407 = vld [vmem:[#allocation5 + $0x48] sm:$0xff]
    %v1408 = vld [vmem:[#allocation5 + $0x50] sm:$0xff]
    %v1409 = vld [vmem:[#allocation5 + $0x58] sm:$0xff]
    %v1410 = vld [vmem:[#allocation5 + $0x60] sm:$0xff]
    %v1411 = vld [vmem:[#allocation5 + $0x68] sm:$0xff]
    %v1412 = vld [vmem:[#allocation5 + $0x70] sm:$0xff]
    %v1413 = vld [vmem:[#allocation5 + $0x78] sm:$0xff]
    %v1414 = vld [vmem:[#allocation5 + $0x80] sm:$0xff]
    %v1415 = vld [vmem:[#allocation5 + $0x88] sm:$0xff]
    %v1416 = vld [vmem:[#allocation5 + $0x90] sm:$0xff]
    %v1417 = vld [vmem:[#allocation5 + $0x98] sm:$0xff]
    %v1418 = vld [vmem:[#allocation5 + $0xa0] sm:$0xff]
    %v1419 = vld [vmem:[#allocation5 + $0xa8] sm:$0xff]
    %v1420 = vld [vmem:[#allocation5 + $0xb0] sm:$0xff]
    %v1421 = vld [vmem:[#allocation5 + $0xb8] sm:$0xff]
    %v1422 = vld [vmem:[#allocation5 + $0xc0] sm:$0xff]
    %v1423 = vld [vmem:[#allocation5 + $0xc8] sm:$0xff]
    %v1424 = vld [vmem:[#allocation5 + $0xd0] sm:$0xff]
    %v1425 = vld [vmem:[#allocation5 + $0xd8] sm:$0xff]
    %v1426 = vld [vmem:[#allocation5 + $0xe0] sm:$0xff]
    %v1427 = vld [vmem:[#allocation5 + $0xe8] sm:$0xff]
    %v1428 = vld [vmem:[#allocation5 + $0xf0] sm:$0xff]
    %v1429 = vld [vmem:[#allocation5 + $0xf8] sm:$0xff]
    %v1430 = vld [vmem:[#allocation5 + $0x100] sm:$0xff]
    %v1431 = vld [vmem:[#allocation5 + $0x108] sm:$0xff]
    %v1432 = vld [vmem:[#allocation5 + $0x110] sm:$0xff]
    %v1433 = vld [vmem:[#allocation5 + $0x118] sm:$0xff]
    %v1434 = vld [vmem:[#allocation5 + $0x120] sm:$0xff]
    %v1435 = vld [vmem:[#allocation5 + $0x128] sm:$0xff]
    %v1436 = vld [vmem:[#allocation5 + $0x130] sm:$0xff]
    %v1437 = vld [vmem:[#allocation5 + $0x138] sm:$0xff]
    %v1438 = vld [vmem:[#allocation5 + $0x140] sm:$0xff]
    %v1439 = vld [vmem:[#allocation5 + $0x148] sm:$0xff]
    %v1440 = vld [vmem:[#allocation5 + $0x150] sm:$0xff]
    %v1441 = vld [vmem:[#allocation5 + $0x158] sm:$0xff]
    %v1442 = vld [vmem:[#allocation5 + $0x160] sm:$0xff]
    %v1443 = vld [vmem:[#allocation5 + $0x168] sm:$0xff]
    %v1444 = vld [vmem:[#allocation5 + $0x170] sm:$0xff]
    %v1445 = vld [vmem:[#allocation5 + $0x178] sm:$0xff]
    %v1446 = vld [vmem:[#allocation5 + $0x180] sm:$0xff]
    %v1447 = vld [vmem:[#allocation5 + $0x188] sm:$0xff]
    %v1448 = vld [vmem:[#allocation5 + $0x190] sm:$0xff]
    %v1449 = vld [vmem:[#allocation5 + $0x198] sm:$0xff]
    %v1450 = vld [vmem:[#allocation5 + $0x1a0] sm:$0xff]
    %v1451 = vld [vmem:[#allocation5 + $0x1a8] sm:$0xff]
    %v1452 = vld [vmem:[#allocation5 + $0x1b0] sm:$0xff]
    %v1453 = vld [vmem:[#allocation5 + $0x1b8] sm:$0xff]
    %v1454 = vld [vmem:[#allocation5 + $0x1c0] sm:$0xff]
    %v1455 = vld [vmem:[#allocation5 + $0x1c8] sm:$0xff]
    %v1456 = vld [vmem:[#allocation5 + $0x1d0] sm:$0xff]
    %v1457 = vld [vmem:[#allocation5 + $0x1d8] sm:$0xff]
    %v1458 = vld [vmem:[#allocation5 + $0x1e0] sm:$0xff]
    %v1459 = vld [vmem:[#allocation5 + $0x1e8] sm:$0xff]
    %v1460 = vld [vmem:[#allocation5 + $0x1f0] sm:$0xff]
    %v1461 = vld [vmem:[#allocation5 + $0x1f8] sm:$0xff]
    %v1463 = vlaneseq
    %v1464 = vshrl.u32 %v1463, 7
    %v1465 = vsub.s32 0, %v1464
    %v1466 = vrot.slane %v89, %v1465
    %v1467 = vlaneseq
    %v1468 = vshrl.u32 %v1467, 7
    %v1469 = vsub.s32 1, %v1468
    %v1470 = vrot.slane %v89, %v1469
    %v1537 = vunpack.c.l.b16 %v1398
    %v1538 = vunpack.c.h.b16 %v1398
    %v1539 = vunpack.c.l.b16 %v1399
    %v1540 = vunpack.c.h.b16 %v1399
    %v1541 = vunpack.c.l.b16 %v1400
    %v1542 = vunpack.c.h.b16 %v1400
    %v1543 = vunpack.c.l.b16 %v1401
    %v1544 = vunpack.c.h.b16 %v1401
    %v1545 = vunpack.c.l.b16 %v1402
    %v1546 = vunpack.c.h.b16 %v1402
    %v1547 = vunpack.c.l.b16 %v1403
    %v1548 = vunpack.c.h.b16 %v1403
    %v1549 = vunpack.c.l.b16 %v1404
    %v1550 = vunpack.c.h.b16 %v1404
    %v1551 = vunpack.c.l.b16 %v1405
    %v1552 = vunpack.c.h.b16 %v1405
    %v1553 = vunpack.c.l.b16 %v1406
    %v1554 = vunpack.c.h.b16 %v1406
    %v1555 = vunpack.c.l.b16 %v1407
    %v1556 = vunpack.c.h.b16 %v1407
    %v1557 = vunpack.c.l.b16 %v1408
    %v1558 = vunpack.c.h.b16 %v1408
    %v1559 = vunpack.c.l.b16 %v1409
    %v1560 = vunpack.c.h.b16 %v1409
    %v1561 = vunpack.c.l.b16 %v1410
    %v1562 = vunpack.c.h.b16 %v1410
    %v1563 = vunpack.c.l.b16 %v1411
    %v1564 = vunpack.c.h.b16 %v1411
    %v1565 = vunpack.c.l.b16 %v1412
    %v1566 = vunpack.c.h.b16 %v1412
    %v1567 = vunpack.c.l.b16 %v1413
    %v1568 = vunpack.c.h.b16 %v1413
    %v1569 = vunpack.c.l.b16 %v1414
    %v1570 = vunpack.c.h.b16 %v1414
    %v1571 = vunpack.c.l.b16 %v1415
    %v1572 = vunpack.c.h.b16 %v1415
    %v1573 = vunpack.c.l.b16 %v1416
    %v1574 = vunpack.c.h.b16 %v1416
    %v1575 = vunpack.c.l.b16 %v1417
    %v1576 = vunpack.c.h.b16 %v1417
    %v1577 = vunpack.c.l.b16 %v1418
    %v1578 = vunpack.c.h.b16 %v1418
    %v1579 = vunpack.c.l.b16 %v1419
    %v1580 = vunpack.c.h.b16 %v1419
    %v1581 = vunpack.c.l.b16 %v1420
    %v1582 = vunpack.c.h.b16 %v1420
    %v1583 = vunpack.c.l.b16 %v1421
    %v1584 = vunpack.c.h.b16 %v1421
    %v1585 = vunpack.c.l.b16 %v1422
    %v1586 = vunpack.c.h.b16 %v1422
    %v1587 = vunpack.c.l.b16 %v1423
    %v1588 = vunpack.c.h.b16 %v1423
    %v1589 = vunpack.c.l.b16 %v1424
    %v1590 = vunpack.c.h.b16 %v1424
    %v1591 = vunpack.c.l.b16 %v1425
    %v1592 = vunpack.c.h.b16 %v1425
    %v1593 = vunpack.c.l.b16 %v1426
    %v1594 = vunpack.c.h.b16 %v1426
    %v1595 = vunpack.c.l.b16 %v1427
    %v1596 = vunpack.c.h.b16 %v1427
    %v1597 = vunpack.c.l.b16 %v1428
    %v1598 = vunpack.c.h.b16 %v1428
    %v1599 = vunpack.c.l.b16 %v1429
    %v1600 = vunpack.c.h.b16 %v1429
    %v1601 = vunpack.c.l.b16 %v1430
    %v1602 = vunpack.c.h.b16 %v1430
    %v1603 = vunpack.c.l.b16 %v1431
    %v1604 = vunpack.c.h.b16 %v1431
    %v1605 = vunpack.c.l.b16 %v1432
    %v1606 = vunpack.c.h.b16 %v1432
    %v1607 = vunpack.c.l.b16 %v1433
    %v1608 = vunpack.c.h.b16 %v1433
    %v1609 = vunpack.c.l.b16 %v1434
    %v1610 = vunpack.c.h.b16 %v1434
    %v1611 = vunpack.c.l.b16 %v1435
    %v1612 = vunpack.c.h.b16 %v1435
    %v1613 = vunpack.c.l.b16 %v1436
    %v1614 = vunpack.c.h.b16 %v1436
    %v1615 = vunpack.c.l.b16 %v1437
    %v1616 = vunpack.c.h.b16 %v1437
    %v1617 = vunpack.c.l.b16 %v1438
    %v1618 = vunpack.c.h.b16 %v1438
    %v1619 = vunpack.c.l.b16 %v1439
    %v1620 = vunpack.c.h.b16 %v1439
    %v1621 = vunpack.c.l.b16 %v1440
    %v1622 = vunpack.c.h.b16 %v1440
    %v1623 = vunpack.c.l.b16 %v1441
    %v1624 = vunpack.c.h.b16 %v1441
    %v1625 = vunpack.c.l.b16 %v1442
    %v1626 = vunpack.c.h.b16 %v1442
    %v1627 = vunpack.c.l.b16 %v1443
    %v1628 = vunpack.c.h.b16 %v1443
    %v1629 = vunpack.c.l.b16 %v1444
    %v1630 = vunpack.c.h.b16 %v1444
    %v1631 = vunpack.c.l.b16 %v1445
    %v1632 = vunpack.c.h.b16 %v1445
    %v1633 = vunpack.c.l.b16 %v1446
    %v1634 = vunpack.c.h.b16 %v1446
    %v1635 = vunpack.c.l.b16 %v1447
    %v1636 = vunpack.c.h.b16 %v1447
    %v1637 = vunpack.c.l.b16 %v1448
    %v1638 = vunpack.c.h.b16 %v1448
    %v1639 = vunpack.c.l.b16 %v1449
    %v1640 = vunpack.c.h.b16 %v1449
    %v1641 = vunpack.c.l.b16 %v1450
    %v1642 = vunpack.c.h.b16 %v1450
    %v1643 = vunpack.c.l.b16 %v1451
    %v1644 = vunpack.c.h.b16 %v1451
    %v1645 = vunpack.c.l.b16 %v1452
    %v1646 = vunpack.c.h.b16 %v1452
    %v1647 = vunpack.c.l.b16 %v1453
    %v1648 = vunpack.c.h.b16 %v1453
    %v1649 = vunpack.c.l.b16 %v1454
    %v1650 = vunpack.c.h.b16 %v1454
    %v1651 = vunpack.c.l.b16 %v1455
    %v1652 = vunpack.c.h.b16 %v1455
    %v1653 = vunpack.c.l.b16 %v1456
    %v1654 = vunpack.c.h.b16 %v1456
    %v1655 = vunpack.c.l.b16 %v1457
    %v1656 = vunpack.c.h.b16 %v1457
    %v1657 = vunpack.c.l.b16 %v1458
    %v1658 = vunpack.c.h.b16 %v1458
    %v1659 = vunpack.c.l.b16 %v1459
    %v1660 = vunpack.c.h.b16 %v1459
    %v1661 = vunpack.c.l.b16 %v1460
    %v1662 = vunpack.c.h.b16 %v1460
    %v1663 = vunpack.c.l.b16 %v1461
    %v1664 = vunpack.c.h.b16 %v1461
    %v1665 = vpack.c.b16 %v1539, %v1537
    %v1666 = vpack.c.b16 %v1540, %v1538
    %v1667 = vpack.c.b16 %v1543, %v1541
    %v1668 = vpack.c.b16 %v1544, %v1542
    %v1669 = vpack.c.b16 %v1547, %v1545
    %v1670 = vpack.c.b16 %v1548, %v1546
    %v1671 = vpack.c.b16 %v1551, %v1549
    %v1672 = vpack.c.b16 %v1552, %v1550
    %v1673 = vpack.c.b16 %v1555, %v1553
    %v1674 = vpack.c.b16 %v1556, %v1554
    %v1675 = vpack.c.b16 %v1559, %v1557
    %v1676 = vpack.c.b16 %v1560, %v1558
    %v1677 = vpack.c.b16 %v1563, %v1561
    %v1678 = vpack.c.b16 %v1564, %v1562
    %v1679 = vpack.c.b16 %v1567, %v1565
    %v1680 = vpack.c.b16 %v1568, %v1566
    %v1681 = vpack.c.b16 %v1571, %v1569
    %v1682 = vpack.c.b16 %v1572, %v1570
    %v1683 = vpack.c.b16 %v1575, %v1573
    %v1684 = vpack.c.b16 %v1576, %v1574
    %v1685 = vpack.c.b16 %v1579, %v1577
    %v1686 = vpack.c.b16 %v1580, %v1578
    %v1687 = vpack.c.b16 %v1583, %v1581
    %v1688 = vpack.c.b16 %v1584, %v1582
    %v1689 = vpack.c.b16 %v1587, %v1585
    %v1690 = vpack.c.b16 %v1588, %v1586
    %v1691 = vpack.c.b16 %v1591, %v1589
    %v1692 = vpack.c.b16 %v1592, %v1590
    %v1693 = vpack.c.b16 %v1595, %v1593
    %v1694 = vpack.c.b16 %v1596, %v1594
    %v1695 = vpack.c.b16 %v1599, %v1597
    %v1696 = vpack.c.b16 %v1600, %v1598
    %v1697 = vpack.c.b16 %v1603, %v1601
    %v1698 = vpack.c.b16 %v1604, %v1602
    %v1699 = vpack.c.b16 %v1607, %v1605
    %v1700 = vpack.c.b16 %v1608, %v1606
    %v1701 = vpack.c.b16 %v1611, %v1609
    %v1702 = vpack.c.b16 %v1612, %v1610
    %v1703 = vpack.c.b16 %v1615, %v1613
    %v1704 = vpack.c.b16 %v1616, %v1614
    %v1705 = vpack.c.b16 %v1619, %v1617
    %v1706 = vpack.c.b16 %v1620, %v1618
    %v1707 = vpack.c.b16 %v1623, %v1621
    %v1708 = vpack.c.b16 %v1624, %v1622
    %v1709 = vpack.c.b16 %v1627, %v1625
    %v1710 = vpack.c.b16 %v1628, %v1626
    %v1711 = vpack.c.b16 %v1631, %v1629
    %v1712 = vpack.c.b16 %v1632, %v1630
    %v1713 = vpack.c.b16 %v1635, %v1633
    %v1714 = vpack.c.b16 %v1636, %v1634
    %v1715 = vpack.c.b16 %v1639, %v1637
    %v1716 = vpack.c.b16 %v1640, %v1638
    %v1717 = vpack.c.b16 %v1643, %v1641
    %v1718 = vpack.c.b16 %v1644, %v1642
    %v1719 = vpack.c.b16 %v1647, %v1645
    %v1720 = vpack.c.b16 %v1648, %v1646
    %v1721 = vpack.c.b16 %v1651, %v1649
    %v1722 = vpack.c.b16 %v1652, %v1650
    %v1723 = vpack.c.b16 %v1655, %v1653
    %v1724 = vpack.c.b16 %v1656, %v1654
    %v1725 = vpack.c.b16 %v1659, %v1657
    %v1726 = vpack.c.b16 %v1660, %v1658
    %v1727 = vpack.c.b16 %v1663, %v1661
    %v1728 = vpack.c.b16 %v1664, %v1662
    %1793 = vmatprep.subr.bf16.mxu0 %v1666
    %1794 = vmatpush1.bf16.msra.mxu0 %v1665
    %1795 = vmatprep.subr.bf16.mxu0 %v1668
    %1796 = vmatpush1.bf16.msra.mxu0 %v1667
    %1797 = vmatprep.subr.bf16.mxu0 %v1670
    %1798 = vmatpush1.bf16.msra.mxu0 %v1669
    %1799 = vmatprep.subr.bf16.mxu0 %v1672
    %1800 = vmatpush1.bf16.msra.mxu0 %v1671
    %1801 = vmatprep.subr.bf16.mxu0 %v1674
    %1802 = vmatpush1.bf16.msra.mxu0 %v1673
    %1803 = vmatprep.subr.bf16.mxu0 %v1676
    %1804 = vmatpush1.bf16.msra.mxu0 %v1675
    %1805 = vmatprep.subr.bf16.mxu0 %v1678
    %1806 = vmatpush1.bf16.msra.mxu0 %v1677
    %1807 = vmatprep.subr.bf16.mxu0 %v1680
    %1808 = vmatpush1.bf16.msra.mxu0 %v1679
    %1809 = vmatprep.subr.bf16.mxu0 %v1682
    %1810 = vmatpush1.bf16.msra.mxu0 %v1681
    %1811 = vmatprep.subr.bf16.mxu0 %v1684
    %1812 = vmatpush1.bf16.msra.mxu0 %v1683
    %1813 = vmatprep.subr.bf16.mxu0 %v1686
    %1814 = vmatpush1.bf16.msra.mxu0 %v1685
    %1815 = vmatprep.subr.bf16.mxu0 %v1688
    %1816 = vmatpush1.bf16.msra.mxu0 %v1687
    %1817 = vmatprep.subr.bf16.mxu0 %v1690
    %1818 = vmatpush1.bf16.msra.mxu0 %v1689
    %1819 = vmatprep.subr.bf16.mxu0 %v1692
    %1820 = vmatpush1.bf16.msra.mxu0 %v1691
    %1821 = vmatprep.subr.bf16.mxu0 %v1694
    %1822 = vmatpush1.bf16.msra.mxu0 %v1693
    %1823 = vmatprep.subr.bf16.mxu0 %v1696
    %1824 = vmatpush1.bf16.msra.mxu0 %v1695
    %1825 = vmatprep.mubr.bf16.mxu0 %v1383
    %1826 = vmatmul.mubr.bf16.gmra.mrb[0].mxu0 %v1382
    %v1827 = vpop.f32.mrb[0].mxu0
    %v1828 = vadd.f32 %v1466, %v1827
    %v1829 = vpop.f32.mrb[0].mxu0
    %v1830 = vadd.f32 %v1470, %v1829
    %v1831 = vpop.f32.mrb[0].mxu0
    %v1832 = vadd.f32 %v1466, %v1831
    %v1833 = vpop.f32.mrb[0].mxu0
    %v1834 = vadd.f32 %v1470, %v1833
    %1835 = vmatprep.mubr.bf16.mxu0 %v1387
    %1836 = vmatmul.mubr.bf16.gmra.mrb[0].mxu0 %v1386
    %v1837 = vpop.f32.mrb[0].mxu0
    %v1838 = vadd.f32 %v1466, %v1837
    %v1839 = vpop.f32.mrb[0].mxu0
    %v1840 = vadd.f32 %v1470, %v1839
    %v1841 = vpop.f32.mrb[0].mxu0
    %v1842 = vadd.f32 %v1466, %v1841
    %v1843 = vpop.f32.mrb[0].mxu0
    %v1844 = vadd.f32 %v1470, %v1843
    %1845 = vmatprep.mubr.bf16.mxu0 %v1391
    %1846 = vmatmul.mubr.bf16.gmra.mrb[0].mxu0 %v1390
    %v1847 = vpop.f32.mrb[0].mxu0
    %v1848 = vadd.f32 %v1466, %v1847
    %v1849 = vpop.f32.mrb[0].mxu0
    %v1850 = vadd.f32 %v1470, %v1849
    %v1851 = vpop.f32.mrb[0].mxu0
    %v1852 = vadd.f32 %v1466, %v1851
    %v1853 = vpop.f32.mrb[0].mxu0
    %v1854 = vadd.f32 %v1470, %v1853
    %1855 = vmatprep.mubr.bf16.mxu0 %v1395
    %1856 = vmatmul.mubr.bf16.gmra.mrb[0].mxu0 %v1394
    %v1857 = vpop.f32.mrb[0].mxu0
    %v1858 = vadd.f32 %v1466, %v1857
    %v1859 = vpop.f32.mrb[0].mxu0
    %v1860 = vadd.f32 %v1470, %v1859
    %v1861 = vpop.f32.mrb[0].mxu0
    %v1862 = vadd.f32 %v1466, %v1861
    %v1863 = vpop.f32.mrb[0].mxu0
    %v1864 = vadd.f32 %v1470, %v1863
    %1865 = vdwg.mxu0
    %1866 = vmatprep.subr.bf16.mxu0 %v1698
    %1867 = vmatpush1.bf16.msra.mxu0 %v1697
    %1868 = vmatprep.subr.bf16.mxu0 %v1700
    %1869 = vmatpush1.bf16.msra.mxu0 %v1699
    %1870 = vmatprep.subr.bf16.mxu0 %v1702
    %1871 = vmatpush1.bf16.msra.mxu0 %v1701
    %1872 = vmatprep.subr.bf16.mxu0 %v1704
    %1873 = vmatpush1.bf16.msra.mxu0 %v1703
    %1874 = vmatprep.subr.bf16.mxu0 %v1706
    %1875 = vmatpush1.bf16.msra.mxu0 %v1705
    %1876 = vmatprep.subr.bf16.mxu0 %v1708
    %1877 = vmatpush1.bf16.msra.mxu0 %v1707
    %1878 = vmatprep.subr.bf16.mxu0 %v1710
    %1879 = vmatpush1.bf16.msra.mxu0 %v1709
    %1880 = vmatprep.subr.bf16.mxu0 %v1712
    %1881 = vmatpush1.bf16.msra.mxu0 %v1711
    %1882 = vmatprep.subr.bf16.mxu0 %v1714
    %1883 = vmatpush1.bf16.msra.mxu0 %v1713
    %1884 = vmatprep.subr.bf16.mxu0 %v1716
    %1885 = vmatpush1.bf16.msra.mxu0 %v1715
    %1886 = vmatprep.subr.bf16.mxu0 %v1718
    %1887 = vmatpush1.bf16.msra.mxu0 %v1717
    %1888 = vmatprep.subr.bf16.mxu0 %v1720
    %1889 = vmatpush1.bf16.msra.mxu0 %v1719
    %1890 = vmatprep.subr.bf16.mxu0 %v1722
    %1891 = vmatpush1.bf16.msra.mxu0 %v1721
    %1892 = vmatprep.subr.bf16.mxu0 %v1724
    %1893 = vmatpush1.bf16.msra.mxu0 %v1723
    %1894 = vmatprep.subr.bf16.mxu0 %v1726
    %1895 = vmatpush1.bf16.msra.mxu0 %v1725
    %1896 = vmatprep.subr.bf16.mxu0 %v1728
    %1897 = vmatpush1.bf16.msra.mxu0 %v1727
    %1898 = vmatprep.mubr.bf16.mxu0 %v1385
    %1899 = vmatmul.mubr.bf16.gmra.mrb[0].mxu0 %v1384
    %v1900 = vpop.f32.mrb[0].mxu0
    %v1901 = vadd.f32 %v1828, %v1900
    %v1902 = vpop.f32.mrb[0].mxu0
    %v1903 = vadd.f32 %v1830, %v1902
    %v1904 = vpop.f32.mrb[0].mxu0
    %v1905 = vadd.f32 %v1832, %v1904
    %v1906 = vpop.f32.mrb[0].mxu0
    %v1907 = vadd.f32 %v1834, %v1906
    %1908 = vmatprep.mubr.bf16.mxu0 %v1389
    %1909 = vmatmul.mubr.bf16.gmra.mrb[0].mxu0 %v1388
    %v1910 = vpop.f32.mrb[0].mxu0
    %v1911 = vadd.f32 %v1838, %v1910
    %v1912 = vpop.f32.mrb[0].mxu0
    %v1913 = vadd.f32 %v1840, %v1912
    %v1914 = vpop.f32.mrb[0].mxu0
    %v1915 = vadd.f32 %v1842, %v1914
    %v1916 = vpop.f32.mrb[0].mxu0
    %v1917 = vadd.f32 %v1844, %v1916
    %1918 = vmatprep.mubr.bf16.mxu0 %v1393
    %1919 = vmatmul.mubr.bf16.gmra.mrb[0].mxu0 %v1392
    %v1920 = vpop.f32.mrb[0].mxu0
    %v1921 = vadd.f32 %v1848, %v1920
    %v1922 = vpop.f32.mrb[0].mxu0
    %v1923 = vadd.f32 %v1850, %v1922
    %v1924 = vpop.f32.mrb[0].mxu0
    %v1925 = vadd.f32 %v1852, %v1924
    %v1926 = vpop.f32.mrb[0].mxu0
    %v1927 = vadd.f32 %v1854, %v1926
    %1928 = vmatprep.mubr.bf16.mxu0 %v1397
    %1929 = vmatmul.mubr.bf16.gmra.mrb[0].mxu0 %v1396
    %v1930 = vpop.f32.mrb[0].mxu0
    %v1931 = vadd.f32 %v1858, %v1930
    %v1932 = vpop.f32.mrb[0].mxu0
    %v1933 = vadd.f32 %v1860, %v1932
    %v1934 = vpop.f32.mrb[0].mxu0
    %v1935 = vadd.f32 %v1862, %v1934
    %v1936 = vpop.f32.mrb[0].mxu0
    %v1937 = vadd.f32 %v1864, %v1936
    %1938 = vdwg.mxu0
    %1939 = vst [vmem:[%s9] sm:$0xff] %v1901
    %1940 = vst [vmem:[%s9 + $0x8] sm:$0xff] %v1903
    %1941 = vst [vmem:[%s9 + $0x10] sm:$0xff] %v1905
    %1942 = vst [vmem:[%s9 + $0x18] sm:$0xff] %v1907
    %1943 = vst [vmem:[%s9 + $0x20] sm:$0xff] %v1911
    %1944 = vst [vmem:[%s9 + $0x28] sm:$0xff] %v1913
    %1945 = vst [vmem:[%s9 + $0x30] sm:$0xff] %v1915
    %1946 = vst [vmem:[%s9 + $0x38] sm:$0xff] %v1917
    %1947 = vst [vmem:[%s9 + $0x40] sm:$0xff] %v1921
    %1948 = vst [vmem:[%s9 + $0x48] sm:$0xff] %v1923
    %1949 = vst [vmem:[%s9 + $0x50] sm:$0xff] %v1925
    %1950 = vst [vmem:[%s9 + $0x58] sm:$0xff] %v1927
    %1951 = vst [vmem:[%s9 + $0x60] sm:$0xff] %v1931
    %1952 = vst [vmem:[%s9 + $0x68] sm:$0xff] %v1933
    %1953 = vst [vmem:[%s9 + $0x70] sm:$0xff] %v1935
    %1954 = vst [vmem:[%s9 + $0x78] sm:$0xff] %v1937
    %v1955 = vpack.c.bf16 %v1905, %v1901
    %v1956 = vpack.c.bf16 %v1907, %v1903
    %v1957 = vpack.c.bf16 %v1915, %v1911
    %v1958 = vpack.c.bf16 %v1917, %v1913
    %v1959 = vpack.c.bf16 %v1925, %v1921
    %v1960 = vpack.c.bf16 %v1927, %v1923
    %v1961 = vpack.c.bf16 %v1935, %v1931
    %v1962 = vpack.c.bf16 %v1937, %v1933
    %v1963 = vld [vmem:[#allocation7] sm:$0xff]
    %v1964 = vld [vmem:[#allocation7 + $0x8] sm:$0xff]
    %v1965 = vld [vmem:[#allocation7 + $0x10] sm:$0xff]
    %v1966 = vld [vmem:[#allocation7 + $0x18] sm:$0xff]
    %v1967 = vld [vmem:[#allocation7 + $0x20] sm:$0xff]
    %v1968 = vld [vmem:[#allocation7 + $0x28] sm:$0xff]
    %v1969 = vld [vmem:[#allocation7 + $0x30] sm:$0xff]
    %v1970 = vld [vmem:[#allocation7 + $0x38] sm:$0xff]
    %v1971 = vld [vmem:[#allocation7 + $0x40] sm:$0xff]
    %v1972 = vld [vmem:[#allocation7 + $0x48] sm:$0xff]
    %v1973 = vld [vmem:[#allocation7 + $0x50] sm:$0xff]
    %v1974 = vld [vmem:[#allocation7 + $0x58] sm:$0xff]
    %v1975 = vld [vmem:[#allocation7 + $0x60] sm:$0xff]
    %v1976 = vld [vmem:[#allocation7 + $0x68] sm:$0xff]
    %v1977 = vld [vmem:[#allocation7 + $0x70] sm:$0xff]
    %v1978 = vld [vmem:[#allocation7 + $0x78] sm:$0xff]
    %v1979 = vld [vmem:[#allocation7 + $0x80] sm:$0xff]
    %v1980 = vld [vmem:[#allocation7 + $0x88] sm:$0xff]
    %v1981 = vld [vmem:[#allocation7 + $0x90] sm:$0xff]
    %v1982 = vld [vmem:[#allocation7 + $0x98] sm:$0xff]
    %v1983 = vld [vmem:[#allocation7 + $0xa0] sm:$0xff]
    %v1984 = vld [vmem:[#allocation7 + $0xa8] sm:$0xff]
    %v1985 = vld [vmem:[#allocation7 + $0xb0] sm:$0xff]
    %v1986 = vld [vmem:[#allocation7 + $0xb8] sm:$0xff]
    %v1987 = vld [vmem:[#allocation7 + $0xc0] sm:$0xff]
    %v1988 = vld [vmem:[#allocation7 + $0xc8] sm:$0xff]
    %v1989 = vld [vmem:[#allocation7 + $0xd0] sm:$0xff]
    %v1990 = vld [vmem:[#allocation7 + $0xd8] sm:$0xff]
    %v1991 = vld [vmem:[#allocation7 + $0xe0] sm:$0xff]
    %v1992 = vld [vmem:[#allocation7 + $0xe8] sm:$0xff]
    %v1993 = vld [vmem:[#allocation7 + $0xf0] sm:$0xff]
    %v1994 = vld [vmem:[#allocation7 + $0xf8] sm:$0xff]
    %v1995 = vld [vmem:[#allocation7 + $0x100] sm:$0xff]
    %v1996 = vld [vmem:[#allocation7 + $0x108] sm:$0xff]
    %v1997 = vld [vmem:[#allocation7 + $0x110] sm:$0xff]
    %v1998 = vld [vmem:[#allocation7 + $0x118] sm:$0xff]
    %v1999 = vld [vmem:[#allocation7 + $0x120] sm:$0xff]
    %v2000 = vld [vmem:[#allocation7 + $0x128] sm:$0xff]
    %v2001 = vld [vmem:[#allocation7 + $0x130] sm:$0xff]
    %v2002 = vld [vmem:[#allocation7 + $0x138] sm:$0xff]
    %v2003 = vld [vmem:[#allocation7 + $0x140] sm:$0xff]
    %v2004 = vld [vmem:[#allocation7 + $0x148] sm:$0xff]
    %v2005 = vld [vmem:[#allocation7 + $0x150] sm:$0xff]
    %v2006 = vld [vmem:[#allocation7 + $0x158] sm:$0xff]
    %v2007 = vld [vmem:[#allocation7 + $0x160] sm:$0xff]
    %v2008 = vld [vmem:[#allocation7 + $0x168] sm:$0xff]
    %v2009 = vld [vmem:[#allocation7 + $0x170] sm:$0xff]
    %v2010 = vld [vmem:[#allocation7 + $0x178] sm:$0xff]
    %v2011 = vld [vmem:[#allocation7 + $0x180] sm:$0xff]
    %v2012 = vld [vmem:[#allocation7 + $0x188] sm:$0xff]
    %v2013 = vld [vmem:[#allocation7 + $0x190] sm:$0xff]
    %v2014 = vld [vmem:[#allocation7 + $0x198] sm:$0xff]
    %v2015 = vld [vmem:[#allocation7 + $0x1a0] sm:$0xff]
    %v2016 = vld [vmem:[#allocation7 + $0x1a8] sm:$0xff]
    %v2017 = vld [vmem:[#allocation7 + $0x1b0] sm:$0xff]
    %v2018 = vld [vmem:[#allocation7 + $0x1b8] sm:$0xff]
    %v2019 = vld [vmem:[#allocation7 + $0x1c0] sm:$0xff]
    %v2020 = vld [vmem:[#allocation7 + $0x1c8] sm:$0xff]
    %v2021 = vld [vmem:[#allocation7 + $0x1d0] sm:$0xff]
    %v2022 = vld [vmem:[#allocation7 + $0x1d8] sm:$0xff]
    %v2023 = vld [vmem:[#allocation7 + $0x1e0] sm:$0xff]
    %v2024 = vld [vmem:[#allocation7 + $0x1e8] sm:$0xff]
    %v2025 = vld [vmem:[#allocation7 + $0x1f0] sm:$0xff]
    %v2026 = vld [vmem:[#allocation7 + $0x1f8] sm:$0xff]
    %v2091 = vunpack.c.l.b16 %v1963
    %v2092 = vunpack.c.h.b16 %v1963
    %v2093 = vunpack.c.l.b16 %v1964
    %v2094 = vunpack.c.h.b16 %v1964
    %v2095 = vunpack.c.l.b16 %v1965
    %v2096 = vunpack.c.h.b16 %v1965
    %v2097 = vunpack.c.l.b16 %v1966
    %v2098 = vunpack.c.h.b16 %v1966
    %v2099 = vunpack.c.l.b16 %v1967
    %v2100 = vunpack.c.h.b16 %v1967
    %v2101 = vunpack.c.l.b16 %v1968
    %v2102 = vunpack.c.h.b16 %v1968
    %v2103 = vunpack.c.l.b16 %v1969
    %v2104 = vunpack.c.h.b16 %v1969
    %v2105 = vunpack.c.l.b16 %v1970
    %v2106 = vunpack.c.h.b16 %v1970
    %v2107 = vunpack.c.l.b16 %v1971
    %v2108 = vunpack.c.h.b16 %v1971
    %v2109 = vunpack.c.l.b16 %v1972
    %v2110 = vunpack.c.h.b16 %v1972
    %v2111 = vunpack.c.l.b16 %v1973
    %v2112 = vunpack.c.h.b16 %v1973
    %v2113 = vunpack.c.l.b16 %v1974
    %v2114 = vunpack.c.h.b16 %v1974
    %v2115 = vunpack.c.l.b16 %v1975
    %v2116 = vunpack.c.h.b16 %v1975
    %v2117 = vunpack.c.l.b16 %v1976
    %v2118 = vunpack.c.h.b16 %v1976
    %v2119 = vunpack.c.l.b16 %v1977
    %v2120 = vunpack.c.h.b16 %v1977
    %v2121 = vunpack.c.l.b16 %v1978
    %v2122 = vunpack.c.h.b16 %v1978
    %v2123 = vunpack.c.l.b16 %v1979
    %v2124 = vunpack.c.h.b16 %v1979
    %v2125 = vunpack.c.l.b16 %v1980
    %v2126 = vunpack.c.h.b16 %v1980
    %v2127 = vunpack.c.l.b16 %v1981
    %v2128 = vunpack.c.h.b16 %v1981
    %v2129 = vunpack.c.l.b16 %v1982
    %v2130 = vunpack.c.h.b16 %v1982
    %v2131 = vunpack.c.l.b16 %v1983
    %v2132 = vunpack.c.h.b16 %v1983
    %v2133 = vunpack.c.l.b16 %v1984
    %v2134 = vunpack.c.h.b16 %v1984
    %v2135 = vunpack.c.l.b16 %v1985
    %v2136 = vunpack.c.h.b16 %v1985
    %v2137 = vunpack.c.l.b16 %v1986
    %v2138 = vunpack.c.h.b16 %v1986
    %v2139 = vunpack.c.l.b16 %v1987
    %v2140 = vunpack.c.h.b16 %v1987
    %v2141 = vunpack.c.l.b16 %v1988
    %v2142 = vunpack.c.h.b16 %v1988
    %v2143 = vunpack.c.l.b16 %v1989
    %v2144 = vunpack.c.h.b16 %v1989
    %v2145 = vunpack.c.l.b16 %v1990
    %v2146 = vunpack.c.h.b16 %v1990
    %v2147 = vunpack.c.l.b16 %v1991
    %v2148 = vunpack.c.h.b16 %v1991
    %v2149 = vunpack.c.l.b16 %v1992
    %v2150 = vunpack.c.h.b16 %v1992
    %v2151 = vunpack.c.l.b16 %v1993
    %v2152 = vunpack.c.h.b16 %v1993
    %v2153 = vunpack.c.l.b16 %v1994
    %v2154 = vunpack.c.h.b16 %v1994
    %v2155 = vunpack.c.l.b16 %v1995
    %v2156 = vunpack.c.h.b16 %v1995
    %v2157 = vunpack.c.l.b16 %v1996
    %v2158 = vunpack.c.h.b16 %v1996
    %v2159 = vunpack.c.l.b16 %v1997
    %v2160 = vunpack.c.h.b16 %v1997
    %v2161 = vunpack.c.l.b16 %v1998
    %v2162 = vunpack.c.h.b16 %v1998
    %v2163 = vunpack.c.l.b16 %v1999
    %v2164 = vunpack.c.h.b16 %v1999
    %v2165 = vunpack.c.l.b16 %v2000
    %v2166 = vunpack.c.h.b16 %v2000
    %v2167 = vunpack.c.l.b16 %v2001
    %v2168 = vunpack.c.h.b16 %v2001
    %v2169 = vunpack.c.l.b16 %v2002
    %v2170 = vunpack.c.h.b16 %v2002
    %v2171 = vunpack.c.l.b16 %v2003
    %v2172 = vunpack.c.h.b16 %v2003
    %v2173 = vunpack.c.l.b16 %v2004
    %v2174 = vunpack.c.h.b16 %v2004
    %v2175 = vunpack.c.l.b16 %v2005
    %v2176 = vunpack.c.h.b16 %v2005
    %v2177 = vunpack.c.l.b16 %v2006
    %v2178 = vunpack.c.h.b16 %v2006
    %v2179 = vunpack.c.l.b16 %v2007
    %v2180 = vunpack.c.h.b16 %v2007
    %v2181 = vunpack.c.l.b16 %v2008
    %v2182 = vunpack.c.h.b16 %v2008
    %v2183 = vunpack.c.l.b16 %v2009
    %v2184 = vunpack.c.h.b16 %v2009
    %v2185 = vunpack.c.l.b16 %v2010
    %v2186 = vunpack.c.h.b16 %v2010
    %v2187 = vunpack.c.l.b16 %v2011
    %v2188 = vunpack.c.h.b16 %v2011
    %v2189 = vunpack.c.l.b16 %v2012
    %v2190 = vunpack.c.h.b16 %v2012
    %v2191 = vunpack.c.l.b16 %v2013
    %v2192 = vunpack.c.h.b16 %v2013
    %v2193 = vunpack.c.l.b16 %v2014
    %v2194 = vunpack.c.h.b16 %v2014
    %v2195 = vunpack.c.l.b16 %v2015
    %v2196 = vunpack.c.h.b16 %v2015
    %v2197 = vunpack.c.l.b16 %v2016
    %v2198 = vunpack.c.h.b16 %v2016
    %v2199 = vunpack.c.l.b16 %v2017
    %v2200 = vunpack.c.h.b16 %v2017
    %v2201 = vunpack.c.l.b16 %v2018
    %v2202 = vunpack.c.h.b16 %v2018
    %v2203 = vunpack.c.l.b16 %v2019
    %v2204 = vunpack.c.h.b16 %v2019
    %v2205 = vunpack.c.l.b16 %v2020
    %v2206 = vunpack.c.h.b16 %v2020
    %v2207 = vunpack.c.l.b16 %v2021
    %v2208 = vunpack.c.h.b16 %v2021
    %v2209 = vunpack.c.l.b16 %v2022
    %v2210 = vunpack.c.h.b16 %v2022
    %v2211 = vunpack.c.l.b16 %v2023
    %v2212 = vunpack.c.h.b16 %v2023
    %v2213 = vunpack.c.l.b16 %v2024
    %v2214 = vunpack.c.h.b16 %v2024
    %v2215 = vunpack.c.l.b16 %v2025
    %v2216 = vunpack.c.h.b16 %v2025
    %v2217 = vunpack.c.l.b16 %v2026
    %v2218 = vunpack.c.h.b16 %v2026
    %v2219 = vpack.c.b16 %v2095, %v2091
    %v2220 = vpack.c.b16 %v2096, %v2092
    %v2221 = vpack.c.b16 %v2097, %v2093
    %v2222 = vpack.c.b16 %v2098, %v2094
    %v2223 = vpack.c.b16 %v2103, %v2099
    %v2224 = vpack.c.b16 %v2104, %v2100
    %v2225 = vpack.c.b16 %v2105, %v2101
    %v2226 = vpack.c.b16 %v2106, %v2102
    %v2227 = vpack.c.b16 %v2111, %v2107
    %v2228 = vpack.c.b16 %v2112, %v2108
    %v2229 = vpack.c.b16 %v2113, %v2109
    %v2230 = vpack.c.b16 %v2114, %v2110
    %v2231 = vpack.c.b16 %v2119, %v2115
    %v2232 = vpack.c.b16 %v2120, %v2116
    %v2233 = vpack.c.b16 %v2121, %v2117
    %v2234 = vpack.c.b16 %v2122, %v2118
    %v2235 = vpack.c.b16 %v2127, %v2123
    %v2236 = vpack.c.b16 %v2128, %v2124
    %v2237 = vpack.c.b16 %v2129, %v2125
    %v2238 = vpack.c.b16 %v2130, %v2126
    %v2239 = vpack.c.b16 %v2135, %v2131
    %v2240 = vpack.c.b16 %v2136, %v2132
    %v2241 = vpack.c.b16 %v2137, %v2133
    %v2242 = vpack.c.b16 %v2138, %v2134
    %v2243 = vpack.c.b16 %v2143, %v2139
    %v2244 = vpack.c.b16 %v2144, %v2140
    %v2245 = vpack.c.b16 %v2145, %v2141
    %v2246 = vpack.c.b16 %v2146, %v2142
    %v2247 = vpack.c.b16 %v2151, %v2147
    %v2248 = vpack.c.b16 %v2152, %v2148
    %v2249 = vpack.c.b16 %v2153, %v2149
    %v2250 = vpack.c.b16 %v2154, %v2150
    %v2251 = vpack.c.b16 %v2159, %v2155
    %v2252 = vpack.c.b16 %v2160, %v2156
    %v2253 = vpack.c.b16 %v2161, %v2157
    %v2254 = vpack.c.b16 %v2162, %v2158
    %v2255 = vpack.c.b16 %v2167, %v2163
    %v2256 = vpack.c.b16 %v2168, %v2164
    %v2257 = vpack.c.b16 %v2169, %v2165
    %v2258 = vpack.c.b16 %v2170, %v2166
    %v2259 = vpack.c.b16 %v2175, %v2171
    %v2260 = vpack.c.b16 %v2176, %v2172
    %v2261 = vpack.c.b16 %v2177, %v2173
    %v2262 = vpack.c.b16 %v2178, %v2174
    %v2263 = vpack.c.b16 %v2183, %v2179
    %v2264 = vpack.c.b16 %v2184, %v2180
    %v2265 = vpack.c.b16 %v2185, %v2181
    %v2266 = vpack.c.b16 %v2186, %v2182
    %v2267 = vpack.c.b16 %v2191, %v2187
    %v2268 = vpack.c.b16 %v2192, %v2188
    %v2269 = vpack.c.b16 %v2193, %v2189
    %v2270 = vpack.c.b16 %v2194, %v2190
    %v2271 = vpack.c.b16 %v2199, %v2195
    %v2272 = vpack.c.b16 %v2200, %v2196
    %v2273 = vpack.c.b16 %v2201, %v2197
    %v2274 = vpack.c.b16 %v2202, %v2198
    %v2275 = vpack.c.b16 %v2207, %v2203
    %v2276 = vpack.c.b16 %v2208, %v2204
    %v2277 = vpack.c.b16 %v2209, %v2205
    %v2278 = vpack.c.b16 %v2210, %v2206
    %v2279 = vpack.c.b16 %v2215, %v2211
    %v2280 = vpack.c.b16 %v2216, %v2212
    %v2281 = vpack.c.b16 %v2217, %v2213
    %v2282 = vpack.c.b16 %v2218, %v2214
    %2347 = vmatprep.subr.bf16.mxu0 %v2220
    %2348 = vmatpush1.bf16.msra.mxu0 %v2219
    %2349 = vmatprep.subr.bf16.mxu0 %v2224
    %2350 = vmatpush1.bf16.msra.mxu0 %v2223
    %2351 = vmatprep.subr.bf16.mxu0 %v2228
    %2352 = vmatpush1.bf16.msra.mxu0 %v2227
    %2353 = vmatprep.subr.bf16.mxu0 %v2232
    %2354 = vmatpush1.bf16.msra.mxu0 %v2231
    %2355 = vmatprep.subr.bf16.mxu0 %v2236
    %2356 = vmatpush1.bf16.msra.mxu0 %v2235
    %2357 = vmatprep.subr.bf16.mxu0 %v2240
    %2358 = vmatpush1.bf16.msra.mxu0 %v2239
    %2359 = vmatprep.subr.bf16.mxu0 %v2244
    %2360 = vmatpush1.bf16.msra.mxu0 %v2243
    %2361 = vmatprep.subr.bf16.mxu0 %v2248
    %2362 = vmatpush1.bf16.msra.mxu0 %v2247
    %2363 = vmatprep.subr.bf16.mxu0 %v2252
    %2364 = vmatpush1.bf16.msra.mxu0 %v2251
    %2365 = vmatprep.subr.bf16.mxu0 %v2256
    %2366 = vmatpush1.bf16.msra.mxu0 %v2255
    %2367 = vmatprep.subr.bf16.mxu0 %v2260
    %2368 = vmatpush1.bf16.msra.mxu0 %v2259
    %2369 = vmatprep.subr.bf16.mxu0 %v2264
    %2370 = vmatpush1.bf16.msra.mxu0 %v2263
    %2371 = vmatprep.subr.bf16.mxu0 %v2268
    %2372 = vmatpush1.bf16.msra.mxu0 %v2267
    %2373 = vmatprep.subr.bf16.mxu0 %v2272
    %2374 = vmatpush1.bf16.msra.mxu0 %v2271
    %2375 = vmatprep.subr.bf16.mxu0 %v2276
    %2376 = vmatpush1.bf16.msra.mxu0 %v2275
    %2377 = vmatprep.subr.bf16.mxu0 %v2280
    %2378 = vmatpush1.bf16.msra.mxu0 %v2279
    %2379 = vmatprep.mubr.bf16.mxu0 %v1956
    %2380 = vmatmul.mubr.bf16.gmra.mrb[0].mxu0 %v1955
    %v2381 = vpop.f32.mrb[0].mxu0
    %v2382 = vadd.f32 0.0, %v2381
    %v2383 = vpop.f32.mrb[0].mxu0
    %v2384 = vadd.f32 0.0, %v2383
    %v2385 = vpop.f32.mrb[0].mxu0
    %v2386 = vadd.f32 0.0, %v2385
    %v2387 = vpop.f32.mrb[0].mxu0
    %v2388 = vadd.f32 0.0, %v2387
    %2389 = vmatprep.mubr.bf16.mxu0 %v1958
    %2390 = vmatmul.mubr.bf16.gmra.mrb[0].mxu0 %v1957
    %v2391 = vpop.f32.mrb[0].mxu0
    %v2392 = vadd.f32 0.0, %v2391
    %v2393 = vpop.f32.mrb[0].mxu0
    %v2394 = vadd.f32 0.0, %v2393
    %v2395 = vpop.f32.mrb[0].mxu0
    %v2396 = vadd.f32 0.0, %v2395
    %v2397 = vpop.f32.mrb[0].mxu0
    %v2398 = vadd.f32 0.0, %v2397
    %2399 = vmatprep.mubr.bf16.mxu0 %v1960
    %2400 = vmatmul.mubr.bf16.gmra.mrb[0].mxu0 %v1959
    %v2401 = vpop.f32.mrb[0].mxu0
    %v2402 = vadd.f32 0.0, %v2401
    %v2403 = vpop.f32.mrb[0].mxu0
    %v2404 = vadd.f32 0.0, %v2403
    %v2405 = vpop.f32.mrb[0].mxu0
    %v2406 = vadd.f32 0.0, %v2405
    %v2407 = vpop.f32.mrb[0].mxu0
    %v2408 = vadd.f32 0.0, %v2407
    %2409 = vmatprep.mubr.bf16.mxu0 %v1962
    %2410 = vmatmul.mubr.bf16.gmra.mrb[0].mxu0 %v1961
    %v2411 = vpop.f32.mrb[0].mxu0
    %v2412 = vadd.f32 0.0, %v2411
    %v2413 = vpop.f32.mrb[0].mxu0
    %v2414 = vadd.f32 0.0, %v2413
    %v2415 = vpop.f32.mrb[0].mxu0
    %v2416 = vadd.f32 0.0, %v2415
    %v2417 = vpop.f32.mrb[0].mxu0
    %v2418 = vadd.f32 0.0, %v2417
    %2419 = vdwg.mxu0
    %2420 = vmatprep.subr.bf16.mxu0 %v2222
    %2421 = vmatpush1.bf16.msra.mxu0 %v2221
    %2422 = vmatprep.subr.bf16.mxu0 %v2226
    %2423 = vmatpush1.bf16.msra.mxu0 %v2225
    %2424 = vmatprep.subr.bf16.mxu0 %v2230
    %2425 = vmatpush1.bf16.msra.mxu0 %v2229
    %2426 = vmatprep.subr.bf16.mxu0 %v2234
    %2427 = vmatpush1.bf16.msra.mxu0 %v2233
    %2428 = vmatprep.subr.bf16.mxu0 %v2238
    %2429 = vmatpush1.bf16.msra.mxu0 %v2237
    %2430 = vmatprep.subr.bf16.mxu0 %v2242
    %2431 = vmatpush1.bf16.msra.mxu0 %v2241
    %2432 = vmatprep.subr.bf16.mxu0 %v2246
    %2433 = vmatpush1.bf16.msra.mxu0 %v2245
    %2434 = vmatprep.subr.bf16.mxu0 %v2250
    %2435 = vmatpush1.bf16.msra.mxu0 %v2249
    %2436 = vmatprep.subr.bf16.mxu0 %v2254
    %2437 = vmatpush1.bf16.msra.mxu0 %v2253
    %2438 = vmatprep.subr.bf16.mxu0 %v2258
    %2439 = vmatpush1.bf16.msra.mxu0 %v2257
    %2440 = vmatprep.subr.bf16.mxu0 %v2262
    %2441 = vmatpush1.bf16.msra.mxu0 %v2261
    %2442 = vmatprep.subr.bf16.mxu0 %v2266
    %2443 = vmatpush1.bf16.msra.mxu0 %v2265
    %2444 = vmatprep.subr.bf16.mxu0 %v2270
    %2445 = vmatpush1.bf16.msra.mxu0 %v2269
    %2446 = vmatprep.subr.bf16.mxu0 %v2274
    %2447 = vmatpush1.bf16.msra.mxu0 %v2273
    %2448 = vmatprep.subr.bf16.mxu0 %v2278
    %2449 = vmatpush1.bf16.msra.mxu0 %v2277
    %2450 = vmatprep.subr.bf16.mxu0 %v2282
    %2451 = vmatpush1.bf16.msra.mxu0 %v2281
    %2452 = vmatprep.mubr.bf16.mxu0 %v1956
    %2453 = vmatmul.mubr.bf16.gmra.mrb[0].mxu0 %v1955
    %v2454 = vpop.f32.mrb[0].mxu0
    %v2455 = vadd.f32 0.0, %v2454
    %v2456 = vpop.f32.mrb[0].mxu0
    %v2457 = vadd.f32 0.0, %v2456
    %v2458 = vpop.f32.mrb[0].mxu0
    %v2459 = vadd.f32 0.0, %v2458
    %v2460 = vpop.f32.mrb[0].mxu0
    %v2461 = vadd.f32 0.0, %v2460
    %2462 = vmatprep.mubr.bf16.mxu0 %v1958
    %2463 = vmatmul.mubr.bf16.gmra.mrb[0].mxu0 %v1957
    %v2464 = vpop.f32.mrb[0].mxu0
    %v2465 = vadd.f32 0.0, %v2464
    %v2466 = vpop.f32.mrb[0].mxu0
    %v2467 = vadd.f32 0.0, %v2466
    %v2468 = vpop.f32.mrb[0].mxu0
    %v2469 = vadd.f32 0.0, %v2468
    %v2470 = vpop.f32.mrb[0].mxu0
    %v2471 = vadd.f32 0.0, %v2470
    %2472 = vmatprep.mubr.bf16.mxu0 %v1960
    %2473 = vmatmul.mubr.bf16.gmra.mrb[0].mxu0 %v1959
    %v2474 = vpop.f32.mrb[0].mxu0
    %v2475 = vadd.f32 0.0, %v2474
    %v2476 = vpop.f32.mrb[0].mxu0
    %v2477 = vadd.f32 0.0, %v2476
    %v2478 = vpop.f32.mrb[0].mxu0
    %v2479 = vadd.f32 0.0, %v2478
    %v2480 = vpop.f32.mrb[0].mxu0
    %v2481 = vadd.f32 0.0, %v2480
    %2482 = vmatprep.mubr.bf16.mxu0 %v1962
    %2483 = vmatmul.mubr.bf16.gmra.mrb[0].mxu0 %v1961
    %v2484 = vpop.f32.mrb[0].mxu0
    %v2485 = vadd.f32 0.0, %v2484
    %v2486 = vpop.f32.mrb[0].mxu0
    %v2487 = vadd.f32 0.0, %v2486
    %v2488 = vpop.f32.mrb[0].mxu0
    %v2489 = vadd.f32 0.0, %v2488
    %v2490 = vpop.f32.mrb[0].mxu0
    %v2491 = vadd.f32 0.0, %v2490
    %2492 = vdwg.mxu0
    %v2493 = vadd.f32 %v2382, %v2386
    %v2494 = vadd.f32 %v2493, %v2392
    %v2495 = vadd.f32 %v2494, %v2396
    %v2496 = vrot.slane %v2495, 4
    %v2497 = vadd.f32 %v2495, %v2496
    %v2498 = vrot.slane %v2497, 2
    %v2499 = vadd.f32 %v2497, %v2498
    %v2500 = vrot.slane %v2499, 1
    %v2501 = vadd.f32 %v2499, %v2500
    %v2502 = vadd.f32 %v2384, %v2388
    %v2503 = vadd.f32 %v2502, %v2394
    %v2504 = vadd.f32 %v2503, %v2398
    %v2505 = vrot.slane %v2504, 4
    %v2506 = vadd.f32 %v2504, %v2505
    %v2507 = vrot.slane %v2506, 2
    %v2508 = vadd.f32 %v2506, %v2507
    %v2509 = vrot.slane %v2508, 1
    %v2510 = vadd.f32 %v2508, %v2509
    %v2511 = vadd.f32 %v2455, %v2459
    %v2512 = vadd.f32 %v2511, %v2465
    %v2513 = vadd.f32 %v2512, %v2469
    %v2514 = vrot.slane %v2513, 4
    %v2515 = vadd.f32 %v2513, %v2514
    %v2516 = vrot.slane %v2515, 2
    %v2517 = vadd.f32 %v2515, %v2516
    %v2518 = vrot.slane %v2517, 1
    %v2519 = vadd.f32 %v2517, %v2518
    %v2520 = vadd.f32 %v2457, %v2461
    %v2521 = vadd.f32 %v2520, %v2467
    %v2522 = vadd.f32 %v2521, %v2471
    %v2523 = vrot.slane %v2522, 4
    %v2524 = vadd.f32 %v2522, %v2523
    %v2525 = vrot.slane %v2524, 2
    %v2526 = vadd.f32 %v2524, %v2525
    %v2527 = vrot.slane %v2526, 1
    %v2528 = vadd.f32 %v2526, %v2527
    %v2529 = vmul.f32 %v2501, %v967
    %v2530 = vmul.f32 %v2510, %v967
    %v2531 = vmul.f32 %v2519, %v967
    %v2532 = vmul.f32 %v2528, %v967
    %v2533 = vsub.f32 %v2382, %v2529
    %v2534 = vsub.f32 %v2384, %v2530
    %v2535 = vsub.f32 %v2455, %v2531
    %v2536 = vsub.f32 %v2457, %v2532
    %v2537 = vsub.f32 %v2386, %v2529
    %v2538 = vsub.f32 %v2388, %v2530
    %v2539 = vsub.f32 %v2459, %v2531
    %v2540 = vsub.f32 %v2461, %v2532
    %v2541 = vsub.f32 %v2392, %v2529
    %v2542 = vsub.f32 %v2394, %v2530
    %v2543 = vsub.f32 %v2465, %v2531
    %v2544 = vsub.f32 %v2467, %v2532
    %v2545 = vsub.f32 %v2396, %v2529
    %v2546 = vsub.f32 %v2398, %v2530
    %v2547 = vsub.f32 %v2469, %v2531
    %v2548 = vsub.f32 %v2471, %v2532
    %v2549 = vmul.f32 %v2533, %v2533
    %v2550 = vmul.f32 %v2534, %v2534
    %v2551 = vmul.f32 %v2535, %v2535
    %v2552 = vmul.f32 %v2536, %v2536
    %v2553 = vmul.f32 %v2537, %v2537
    %v2554 = vmul.f32 %v2538, %v2538
    %v2555 = vmul.f32 %v2539, %v2539
    %v2556 = vmul.f32 %v2540, %v2540
    %v2557 = vmul.f32 %v2541, %v2541
    %v2558 = vmul.f32 %v2542, %v2542
    %v2559 = vmul.f32 %v2543, %v2543
    %v2560 = vmul.f32 %v2544, %v2544
    %v2561 = vmul.f32 %v2545, %v2545
    %v2562 = vmul.f32 %v2546, %v2546
    %v2563 = vmul.f32 %v2547, %v2547
    %v2564 = vmul.f32 %v2548, %v2548
    %v2565 = vadd.f32 %v2549, %v2553
    %v2566 = vadd.f32 %v2565, %v2557
    %v2567 = vadd.f32 %v2566, %v2561
    %v2568 = vrot.slane %v2567, 4
    %v2569 = vadd.f32 %v2567, %v2568
    %v2570 = vrot.slane %v2569, 2
    %v2571 = vadd.f32 %v2569, %v2570
    %v2572 = vrot.slane %v2571, 1
    %v2573 = vadd.f32 %v2571, %v2572
    %v2574 = vadd.f32 %v2550, %v2554
    %v2575 = vadd.f32 %v2574, %v2558
    %v2576 = vadd.f32 %v2575, %v2562
    %v2577 = vrot.slane %v2576, 4
    %v2578 = vadd.f32 %v2576, %v2577
    %v2579 = vrot.slane %v2578, 2
    %v2580 = vadd.f32 %v2578, %v2579
    %v2581 = vrot.slane %v2580, 1
    %v2582 = vadd.f32 %v2580, %v2581
    %v2583 = vadd.f32 %v2551, %v2555
    %v2584 = vadd.f32 %v2583, %v2559
    %v2585 = vadd.f32 %v2584, %v2563
    %v2586 = vrot.slane %v2585, 4
    %v2587 = vadd.f32 %v2585, %v2586
    %v2588 = vrot.slane %v2587, 2
    %v2589 = vadd.f32 %v2587, %v2588
    %v2590 = vrot.slane %v2589, 1
    %v2591 = vadd.f32 %v2589, %v2590
    %v2592 = vadd.f32 %v2552, %v2556
    %v2593 = vadd.f32 %v2592, %v2560
    %v2594 = vadd.f32 %v2593, %v2564
    %v2595 = vrot.slane %v2594, 4
    %v2596 = vadd.f32 %v2594, %v2595
    %v2597 = vrot.slane %v2596, 2
    %v2598 = vadd.f32 %v2596, %v2597
    %v2599 = vrot.slane %v2598, 1
    %v2600 = vadd.f32 %v2598, %v2599
    %v2601 = vmul.f32 %v2573, %v967
    %v2602 = vmul.f32 %v2582, %v967
    %v2603 = vmul.f32 %v2591, %v967
    %v2604 = vmul.f32 %v2600, %v967
    %v2605 = vadd.f32 %v2601, 1e-05
    %v2606 = vadd.f32 %v2602, 1e-05
    %v2607 = vadd.f32 %v2603, 1e-05
    %v2608 = vadd.f32 %v2604, 1e-05
    %v2609 = vrsqrt.pop %v2605
    %v2610 = vrsqrt.pop %v2606
    %v2611 = vrsqrt.pop %v2607
    %v2612 = vrsqrt.pop %v2608
    %v2614 = vlaneseq
    %v2615 = vshrl.u32 %v2614, 7
    %v2616 = vsub.s32 0, %v2615
    %v2617 = vrot.slane %v90, %v2616
    %v2618 = vlaneseq
    %v2619 = vshrl.u32 %v2618, 7
    %v2620 = vsub.s32 1, %v2619
    %v2621 = vrot.slane %v90, %v2620
    %v2622 = vlaneseq
    %v2623 = vshrl.u32 %v2622, 7
    %v2624 = vsub.s32 2, %v2623
    %v2625 = vrot.slane %v90, %v2624
    %v2626 = vlaneseq
    %v2627 = vshrl.u32 %v2626, 7
    %v2628 = vsub.s32 3, %v2627
    %v2629 = vrot.slane %v90, %v2628
    %v2634 = vmul.f32 %v2609, %v2617
    %v2635 = vmul.f32 %v2610, %v2621
    %v2636 = vmul.f32 %v2611, %v2625
    %v2637 = vmul.f32 %v2612, %v2629
    %v2638 = vlaneseq
    %v2639 = vshrl.u32 %v2638, 7
    %v2640 = vsub.s32 0, %v2639
    %v2641 = vrot.slane %v2634, %v2640
    %v2642 = vlaneseq
    %v2643 = vshrl.u32 %v2642, 7
    %v2644 = vsub.s32 0, %v2643
    %v2645 = vrot.slane %v2635, %v2644
    %v2646 = vlaneseq
    %v2647 = vshrl.u32 %v2646, 7
    %v2648 = vsub.s32 0, %v2647
    %v2649 = vrot.slane %v2636, %v2648
    %v2650 = vlaneseq
    %v2651 = vshrl.u32 %v2650, 7
    %v2652 = vsub.s32 0, %v2651
    %v2653 = vrot.slane %v2637, %v2652
    %v2654 = vmul.f32 %v2533, %v2641
    %v2655 = vmul.f32 %v2534, %v2645
    %v2656 = vmul.f32 %v2535, %v2649
    %v2657 = vmul.f32 %v2536, %v2653
    %v2658 = vmul.f32 %v2537, %v2641
    %v2659 = vmul.f32 %v2538, %v2645
    %v2660 = vmul.f32 %v2539, %v2649
    %v2661 = vmul.f32 %v2540, %v2653
    %v2662 = vmul.f32 %v2541, %v2641
    %v2663 = vmul.f32 %v2542, %v2645
    %v2664 = vmul.f32 %v2543, %v2649
    %v2665 = vmul.f32 %v2544, %v2653
    %v2666 = vmul.f32 %v2545, %v2641
    %v2667 = vmul.f32 %v2546, %v2645
    %v2668 = vmul.f32 %v2547, %v2649
    %v2669 = vmul.f32 %v2548, %v2653
    %v2671 = vlaneseq
    %v2672 = vshrl.u32 %v2671, 7
    %v2673 = vsub.s32 0, %v2672
    %v2674 = vrot.slane %v91, %v2673
    %v2675 = vlaneseq
    %v2676 = vshrl.u32 %v2675, 7
    %v2677 = vsub.s32 1, %v2676
    %v2678 = vrot.slane %v91, %v2677
    %v2679 = vlaneseq
    %v2680 = vshrl.u32 %v2679, 7
    %v2681 = vsub.s32 2, %v2680
    %v2682 = vrot.slane %v91, %v2681
    %v2683 = vlaneseq
    %v2684 = vshrl.u32 %v2683, 7
    %v2685 = vsub.s32 3, %v2684
    %v2686 = vrot.slane %v91, %v2685
    %v2691 = vadd.f32 %v2654, %v2674
    %v2692 = vadd.f32 %v2655, %v2678
    %v2693 = vadd.f32 %v2656, %v2682
    %v2694 = vadd.f32 %v2657, %v2686
    %v2695 = vadd.f32 %v2658, %v2674
    %v2696 = vadd.f32 %v2659, %v2678
    %v2697 = vadd.f32 %v2660, %v2682
    %v2698 = vadd.f32 %v2661, %v2686
    %v2699 = vadd.f32 %v2662, %v2674
    %v2700 = vadd.f32 %v2663, %v2678
    %v2701 = vadd.f32 %v2664, %v2682
    %v2702 = vadd.f32 %v2665, %v2686
    %v2703 = vadd.f32 %v2666, %v2674
    %v2704 = vadd.f32 %v2667, %v2678
    %v2705 = vadd.f32 %v2668, %v2682
    %v2706 = vadd.f32 %v2669, %v2686
    %v2707 = vmax.f32 %v2691, 0.0
    %v2708 = vmax.f32 %v2692, 0.0
    %v2709 = vmax.f32 %v2693, 0.0
    %v2710 = vmax.f32 %v2694, 0.0
    %v2711 = vmax.f32 %v2695, 0.0
    %v2712 = vmax.f32 %v2696, 0.0
    %v2713 = vmax.f32 %v2697, 0.0
    %v2714 = vmax.f32 %v2698, 0.0
    %v2715 = vmax.f32 %v2699, 0.0
    %v2716 = vmax.f32 %v2700, 0.0
    %v2717 = vmax.f32 %v2701, 0.0
    %v2718 = vmax.f32 %v2702, 0.0
    %v2719 = vmax.f32 %v2703, 0.0
    %v2720 = vmax.f32 %v2704, 0.0
    %v2721 = vmax.f32 %v2705, 0.0
    %v2722 = vmax.f32 %v2706, 0.0
    %v2723 = vpack.c.bf16 %v2711, %v2707
    %v2724 = vpack.c.bf16 %v2712, %v2708
    %v2725 = vpack.c.bf16 %v2713, %v2709
    %v2726 = vpack.c.bf16 %v2714, %v2710
    %v2727 = vpack.c.bf16 %v2719, %v2715
    %v2728 = vpack.c.bf16 %v2720, %v2716
    %v2729 = vpack.c.bf16 %v2721, %v2717
    %v2730 = vpack.c.bf16 %v2722, %v2718
    %2731 = vst [vmem:[#allocation2] sm:$0xff] %v2723
    %2732 = vst [vmem:[#allocation2 + $0x8] sm:$0xff] %v2724
    %2733 = vst [vmem:[#allocation2 + $0x10] sm:$0xff] %v2725
    %2734 = vst [vmem:[#allocation2 + $0x18] sm:$0xff] %v2726
    %2735 = vst [vmem:[#allocation2 + $0x20] sm:$0xff] %v2727
    %2736 = vst [vmem:[#allocation2 + $0x28] sm:$0xff] %v2728
    %2737 = vst [vmem:[#allocation2 + $0x30] sm:$0xff] %v2729
    %2738 = vst [vmem:[#allocation2 + $0x38] sm:$0xff] %v2730
    %v2739 = vadd.f32 %v2402, %v2406
    %v2740 = vadd.f32 %v2739, %v2412
    %v2741 = vadd.f32 %v2740, %v2416
    %v2742 = vrot.slane %v2741, 4
    %v2743 = vadd.f32 %v2741, %v2742
    %v2744 = vrot.slane %v2743, 2
    %v2745 = vadd.f32 %v2743, %v2744
    %v2746 = vrot.slane %v2745, 1
    %v2747 = vadd.f32 %v2745, %v2746
    %v2748 = vadd.f32 %v2404, %v2408
    %v2749 = vadd.f32 %v2748, %v2414
    %v2750 = vadd.f32 %v2749, %v2418
    %v2751 = vrot.slane %v2750, 4
    %v2752 = vadd.f32 %v2750, %v2751
    %v2753 = vrot.slane %v2752, 2
    %v2754 = vadd.f32 %v2752, %v2753
    %v2755 = vrot.slane %v2754, 1
    %v2756 = vadd.f32 %v2754, %v2755
    %v2757 = vadd.f32 %v2475, %v2479
    %v2758 = vadd.f32 %v2757, %v2485
    %v2759 = vadd.f32 %v2758, %v2489
    %v2760 = vrot.slane %v2759, 4
    %v2761 = vadd.f32 %v2759, %v2760
    %v2762 = vrot.slane %v2761, 2
    %v2763 = vadd.f32 %v2761, %v2762
    %v2764 = vrot.slane %v2763, 1
    %v2765 = vadd.f32 %v2763, %v2764
    %v2766 = vadd.f32 %v2477, %v2481
    %v2767 = vadd.f32 %v2766, %v2487
    %v2768 = vadd.f32 %v2767, %v2491
    %v2769 = vrot.slane %v2768, 4
    %v2770 = vadd.f32 %v2768, %v2769
    %v2771 = vrot.slane %v2770, 2
    %v2772 = vadd.f32 %v2770, %v2771
    %v2773 = vrot.slane %v2772, 1
    %v2774 = vadd.f32 %v2772, %v2773
    %v2775 = vmul.f32 %v2747, %v967
    %v2776 = vmul.f32 %v2756, %v967
    %v2777 = vmul.f32 %v2765, %v967
    %v2778 = vmul.f32 %v2774, %v967
    %v2779 = vsub.f32 %v2402, %v2775
    %v2780 = vsub.f32 %v2404, %v2776
    %v2781 = vsub.f32 %v2475, %v2777
    %v2782 = vsub.f32 %v2477, %v2778
    %v2783 = vsub.f32 %v2406, %v2775
    %v2784 = vsub.f32 %v2408, %v2776
    %v2785 = vsub.f32 %v2479, %v2777
    %v2786 = vsub.f32 %v2481, %v2778
    %v2787 = vsub.f32 %v2412, %v2775
    %v2788 = vsub.f32 %v2414, %v2776
    %v2789 = vsub.f32 %v2485, %v2777
    %v2790 = vsub.f32 %v2487, %v2778
    %v2791 = vsub.f32 %v2416, %v2775
    %v2792 = vsub.f32 %v2418, %v2776
    %v2793 = vsub.f32 %v2489, %v2777
    %v2794 = vsub.f32 %v2491, %v2778
    %v2795 = vmul.f32 %v2779, %v2779
    %v2796 = vmul.f32 %v2780, %v2780
    %v2797 = vmul.f32 %v2781, %v2781
    %v2798 = vmul.f32 %v2782, %v2782
    %v2799 = vmul.f32 %v2783, %v2783
    %v2800 = vmul.f32 %v2784, %v2784
    %v2801 = vmul.f32 %v2785, %v2785
    %v2802 = vmul.f32 %v2786, %v2786
    %v2803 = vmul.f32 %v2787, %v2787
    %v2804 = vmul.f32 %v2788, %v2788
    %v2805 = vmul.f32 %v2789, %v2789
    %v2806 = vmul.f32 %v2790, %v2790
    %v2807 = vmul.f32 %v2791, %v2791
    %v2808 = vmul.f32 %v2792, %v2792
    %v2809 = vmul.f32 %v2793, %v2793
    %v2810 = vmul.f32 %v2794, %v2794
    %v2811 = vadd.f32 %v2795, %v2799
    %v2812 = vadd.f32 %v2811, %v2803
    %v2813 = vadd.f32 %v2812, %v2807
    %v2814 = vrot.slane %v2813, 4
    %v2815 = vadd.f32 %v2813, %v2814
    %v2816 = vrot.slane %v2815, 2
    %v2817 = vadd.f32 %v2815, %v2816
    %v2818 = vrot.slane %v2817, 1
    %v2819 = vadd.f32 %v2817, %v2818
    %v2820 = vadd.f32 %v2796, %v2800
    %v2821 = vadd.f32 %v2820, %v2804
    %v2822 = vadd.f32 %v2821, %v2808
    %v2823 = vrot.slane %v2822, 4
    %v2824 = vadd.f32 %v2822, %v2823
    %v2825 = vrot.slane %v2824, 2
    %v2826 = vadd.f32 %v2824, %v2825
    %v2827 = vrot.slane %v2826, 1
    %v2828 = vadd.f32 %v2826, %v2827
    %v2829 = vadd.f32 %v2797, %v2801
    %v2830 = vadd.f32 %v2829, %v2805
    %v2831 = vadd.f32 %v2830, %v2809
    %v2832 = vrot.slane %v2831, 4
    %v2833 = vadd.f32 %v2831, %v2832
    %v2834 = vrot.slane %v2833, 2
    %v2835 = vadd.f32 %v2833, %v2834
    %v2836 = vrot.slane %v2835, 1
    %v2837 = vadd.f32 %v2835, %v2836
    %v2838 = vadd.f32 %v2798, %v2802
    %v2839 = vadd.f32 %v2838, %v2806
    %v2840 = vadd.f32 %v2839, %v2810
    %v2841 = vrot.slane %v2840, 4
    %v2842 = vadd.f32 %v2840, %v2841
    %v2843 = vrot.slane %v2842, 2
    %v2844 = vadd.f32 %v2842, %v2843
    %v2845 = vrot.slane %v2844, 1
    %v2846 = vadd.f32 %v2844, %v2845
    %v2847 = vmul.f32 %v2819, %v967
    %v2848 = vmul.f32 %v2828, %v967
    %v2849 = vmul.f32 %v2837, %v967
    %v2850 = vmul.f32 %v2846, %v967
    %v2851 = vadd.f32 %v2847, 1e-05
    %v2852 = vadd.f32 %v2848, 1e-05
    %v2853 = vadd.f32 %v2849, 1e-05
    %v2854 = vadd.f32 %v2850, 1e-05
    %v2855 = vrsqrt.pop %v2851
    %v2856 = vrsqrt.pop %v2852
    %v2857 = vrsqrt.pop %v2853
    %v2858 = vrsqrt.pop %v2854
    %v2859 = vmul.f32 %v2855, %v2617
    %v2860 = vmul.f32 %v2856, %v2621
    %v2861 = vmul.f32 %v2857, %v2625
    %v2862 = vmul.f32 %v2858, %v2629
    %v2863 = vlaneseq
    %v2864 = vshrl.u32 %v2863, 7
    %v2865 = vsub.s32 0, %v2864
    %v2866 = vrot.slane %v2859, %v2865
    %v2867 = vlaneseq
    %v2868 = vshrl.u32 %v2867, 7
    %v2869 = vsub.s32 0, %v2868
    %v2870 = vrot.slane %v2860, %v2869
    %v2871 = vlaneseq
    %v2872 = vshrl.u32 %v2871, 7
    %v2873 = vsub.s32 0, %v2872
    %v2874 = vrot.slane %v2861, %v2873
    %v2875 = vlaneseq
    %v2876 = vshrl.u32 %v2875, 7
    %v2877 = vsub.s32 0, %v2876
    %v2878 = vrot.slane %v2862, %v2877
    %v2879 = vmul.f32 %v2779, %v2866
    %v2880 = vmul.f32 %v2780, %v2870
    %v2881 = vmul.f32 %v2781, %v2874
    %v2882 = vmul.f32 %v2782, %v2878
    %v2883 = vmul.f32 %v2783, %v2866
    %v2884 = vmul.f32 %v2784, %v2870
    %v2885 = vmul.f32 %v2785, %v2874
    %v2886 = vmul.f32 %v2786, %v2878
    %v2887 = vmul.f32 %v2787, %v2866
    %v2888 = vmul.f32 %v2788, %v2870
    %v2889 = vmul.f32 %v2789, %v2874
    %v2890 = vmul.f32 %v2790, %v2878
    %v2891 = vmul.f32 %v2791, %v2866
    %v2892 = vmul.f32 %v2792, %v2870
    %v2893 = vmul.f32 %v2793, %v2874
    %v2894 = vmul.f32 %v2794, %v2878
    %v2895 = vadd.f32 %v2879, %v2674
    %v2896 = vadd.f32 %v2880, %v2678
    %v2897 = vadd.f32 %v2881, %v2682
    %v2898 = vadd.f32 %v2882, %v2686
    %v2899 = vadd.f32 %v2883, %v2674
    %v2900 = vadd.f32 %v2884, %v2678
    %v2901 = vadd.f32 %v2885, %v2682
    %v2902 = vadd.f32 %v2886, %v2686
    %v2903 = vadd.f32 %v2887, %v2674
    %v2904 = vadd.f32 %v2888, %v2678
    %v2905 = vadd.f32 %v2889, %v2682
    %v2906 = vadd.f32 %v2890, %v2686
    %v2907 = vadd.f32 %v2891, %v2674
    %v2908 = vadd.f32 %v2892, %v2678
    %v2909 = vadd.f32 %v2893, %v2682
    %v2910 = vadd.f32 %v2894, %v2686
    %v2911 = vmax.f32 %v2895, 0.0
    %v2912 = vmax.f32 %v2896, 0.0
    %v2913 = vmax.f32 %v2897, 0.0
    %v2914 = vmax.f32 %v2898, 0.0
    %v2915 = vmax.f32 %v2899, 0.0
    %v2916 = vmax.f32 %v2900, 0.0
    %v2917 = vmax.f32 %v2901, 0.0
    %v2918 = vmax.f32 %v2902, 0.0
    %v2919 = vmax.f32 %v2903, 0.0
    %v2920 = vmax.f32 %v2904, 0.0
    %v2921 = vmax.f32 %v2905, 0.0
    %v2922 = vmax.f32 %v2906, 0.0
    %v2923 = vmax.f32 %v2907, 0.0
    %v2924 = vmax.f32 %v2908, 0.0
    %v2925 = vmax.f32 %v2909, 0.0
    %v2926 = vmax.f32 %v2910, 0.0
    %v2927 = vpack.c.bf16 %v2915, %v2911
    %v2928 = vpack.c.bf16 %v2916, %v2912
    %v2929 = vpack.c.bf16 %v2917, %v2913
    %v2930 = vpack.c.bf16 %v2918, %v2914
    %v2931 = vpack.c.bf16 %v2923, %v2919
    %v2932 = vpack.c.bf16 %v2924, %v2920
    %v2933 = vpack.c.bf16 %v2925, %v2921
    %v2934 = vpack.c.bf16 %v2926, %v2922
    %2935 = vst [vmem:[#allocation2 + $0x40] sm:$0xff] %v2927
    %2936 = vst [vmem:[#allocation2 + $0x48] sm:$0xff] %v2928
    %2937 = vst [vmem:[#allocation2 + $0x50] sm:$0xff] %v2929
    %2938 = vst [vmem:[#allocation2 + $0x58] sm:$0xff] %v2930
    %2939 = vst [vmem:[#allocation2 + $0x60] sm:$0xff] %v2931
    %2940 = vst [vmem:[#allocation2 + $0x68] sm:$0xff] %v2932
    %2941 = vst [vmem:[#allocation2 + $0x70] sm:$0xff] %v2933
    %2942 = vst [vmem:[#allocation2 + $0x78] sm:$0xff] %v2934
    %v2943 = vld [vmem:[#allocation2] sm:$0xff]
    %v2944 = vld [vmem:[#allocation2 + $0x8] sm:$0xff]
    %v2945 = vld [vmem:[#allocation2 + $0x10] sm:$0xff]
    %v2946 = vld [vmem:[#allocation2 + $0x18] sm:$0xff]
    %v2947 = vld [vmem:[#allocation2 + $0x20] sm:$0xff]
    %v2948 = vld [vmem:[#allocation2 + $0x28] sm:$0xff]
    %v2949 = vld [vmem:[#allocation2 + $0x30] sm:$0xff]
    %v2950 = vld [vmem:[#allocation2 + $0x38] sm:$0xff]
    %v2951 = vld [vmem:[#allocation2 + $0x40] sm:$0xff]
    %v2952 = vld [vmem:[#allocation2 + $0x48] sm:$0xff]
    %v2953 = vld [vmem:[#allocation2 + $0x50] sm:$0xff]
    %v2954 = vld [vmem:[#allocation2 + $0x58] sm:$0xff]
    %v2955 = vld [vmem:[#allocation2 + $0x60] sm:$0xff]
    %v2956 = vld [vmem:[#allocation2 + $0x68] sm:$0xff]
    %v2957 = vld [vmem:[#allocation2 + $0x70] sm:$0xff]
    %v2958 = vld [vmem:[#allocation2 + $0x78] sm:$0xff]
    %v2959 = vld [vmem:[#allocation8] sm:$0xff]
    %v2960 = vld [vmem:[#allocation8 + $0x8] sm:$0xff]
    %v2961 = vld [vmem:[#allocation8 + $0x10] sm:$0xff]
    %v2962 = vld [vmem:[#allocation8 + $0x18] sm:$0xff]
    %v2963 = vld [vmem:[#allocation8 + $0x20] sm:$0xff]
    %v2964 = vld [vmem:[#allocation8 + $0x28] sm:$0xff]
    %v2965 = vld [vmem:[#allocation8 + $0x30] sm:$0xff]
    %v2966 = vld [vmem:[#allocation8 + $0x38] sm:$0xff]
    %v2967 = vld [vmem:[#allocation8 + $0x40] sm:$0xff]
    %v2968 = vld [vmem:[#allocation8 + $0x48] sm:$0xff]
    %v2969 = vld [vmem:[#allocation8 + $0x50] sm:$0xff]
    %v2970 = vld [vmem:[#allocation8 + $0x58] sm:$0xff]
    %v2971 = vld [vmem:[#allocation8 + $0x60] sm:$0xff]
    %v2972 = vld [vmem:[#allocation8 + $0x68] sm:$0xff]
    %v2973 = vld [vmem:[#allocation8 + $0x70] sm:$0xff]
    %v2974 = vld [vmem:[#allocation8 + $0x78] sm:$0xff]
    %v2975 = vld [vmem:[#allocation8 + $0x80] sm:$0xff]
    %v2976 = vld [vmem:[#allocation8 + $0x88] sm:$0xff]
    %v2977 = vld [vmem:[#allocation8 + $0x90] sm:$0xff]
    %v2978 = vld [vmem:[#allocation8 + $0x98] sm:$0xff]
    %v2979 = vld [vmem:[#allocation8 + $0xa0] sm:$0xff]
    %v2980 = vld [vmem:[#allocation8 + $0xa8] sm:$0xff]
    %v2981 = vld [vmem:[#allocation8 + $0xb0] sm:$0xff]
    %v2982 = vld [vmem:[#allocation8 + $0xb8] sm:$0xff]
    %v2983 = vld [vmem:[#allocation8 + $0xc0] sm:$0xff]
    %v2984 = vld [vmem:[#allocation8 + $0xc8] sm:$0xff]
    %v2985 = vld [vmem:[#allocation8 + $0xd0] sm:$0xff]
    %v2986 = vld [vmem:[#allocation8 + $0xd8] sm:$0xff]
    %v2987 = vld [vmem:[#allocation8 + $0xe0] sm:$0xff]
    %v2988 = vld [vmem:[#allocation8 + $0xe8] sm:$0xff]
    %v2989 = vld [vmem:[#allocation8 + $0xf0] sm:$0xff]
    %v2990 = vld [vmem:[#allocation8 + $0xf8] sm:$0xff]
    %v2991 = vld [vmem:[#allocation8 + $0x100] sm:$0xff]
    %v2992 = vld [vmem:[#allocation8 + $0x108] sm:$0xff]
    %v2993 = vld [vmem:[#allocation8 + $0x110] sm:$0xff]
    %v2994 = vld [vmem:[#allocation8 + $0x118] sm:$0xff]
    %v2995 = vld [vmem:[#allocation8 + $0x120] sm:$0xff]
    %v2996 = vld [vmem:[#allocation8 + $0x128] sm:$0xff]
    %v2997 = vld [vmem:[#allocation8 + $0x130] sm:$0xff]
    %v2998 = vld [vmem:[#allocation8 + $0x138] sm:$0xff]
    %v2999 = vld [vmem:[#allocation8 + $0x140] sm:$0xff]
    %v3000 = vld [vmem:[#allocation8 + $0x148] sm:$0xff]
    %v3001 = vld [vmem:[#allocation8 + $0x150] sm:$0xff]
    %v3002 = vld [vmem:[#allocation8 + $0x158] sm:$0xff]
    %v3003 = vld [vmem:[#allocation8 + $0x160] sm:$0xff]
    %v3004 = vld [vmem:[#allocation8 + $0x168] sm:$0xff]
    %v3005 = vld [vmem:[#allocation8 + $0x170] sm:$0xff]
    %v3006 = vld [vmem:[#allocation8 + $0x178] sm:$0xff]
    %v3007 = vld [vmem:[#allocation8 + $0x180] sm:$0xff]
    %v3008 = vld [vmem:[#allocation8 + $0x188] sm:$0xff]
    %v3009 = vld [vmem:[#allocation8 + $0x190] sm:$0xff]
    %v3010 = vld [vmem:[#allocation8 + $0x198] sm:$0xff]
    %v3011 = vld [vmem:[#allocation8 + $0x1a0] sm:$0xff]
    %v3012 = vld [vmem:[#allocation8 + $0x1a8] sm:$0xff]
    %v3013 = vld [vmem:[#allocation8 + $0x1b0] sm:$0xff]
    %v3014 = vld [vmem:[#allocation8 + $0x1b8] sm:$0xff]
    %v3015 = vld [vmem:[#allocation8 + $0x1c0] sm:$0xff]
    %v3016 = vld [vmem:[#allocation8 + $0x1c8] sm:$0xff]
    %v3017 = vld [vmem:[#allocation8 + $0x1d0] sm:$0xff]
    %v3018 = vld [vmem:[#allocation8 + $0x1d8] sm:$0xff]
    %v3019 = vld [vmem:[#allocation8 + $0x1e0] sm:$0xff]
    %v3020 = vld [vmem:[#allocation8 + $0x1e8] sm:$0xff]
    %v3021 = vld [vmem:[#allocation8 + $0x1f0] sm:$0xff]
    %v3022 = vld [vmem:[#allocation8 + $0x1f8] sm:$0xff]
    %v3024 = vlaneseq
    %v3025 = vshrl.u32 %v3024, 7
    %v3026 = vsub.s32 0, %v3025
    %v3027 = vrot.slane %v92, %v3026
    %v3028 = vlaneseq
    %v3029 = vshrl.u32 %v3028, 7
    %v3030 = vsub.s32 1, %v3029
    %v3031 = vrot.slane %v92, %v3030
    %v3098 = vunpack.c.l.b16 %v2959
    %v3099 = vunpack.c.h.b16 %v2959
    %v3100 = vunpack.c.l.b16 %v2960
    %v3101 = vunpack.c.h.b16 %v2960
    %v3102 = vunpack.c.l.b16 %v2961
    %v3103 = vunpack.c.h.b16 %v2961
    %v3104 = vunpack.c.l.b16 %v2962
    %v3105 = vunpack.c.h.b16 %v2962
    %v3106 = vunpack.c.l.b16 %v2963
    %v3107 = vunpack.c.h.b16 %v2963
    %v3108 = vunpack.c.l.b16 %v2964
    %v3109 = vunpack.c.h.b16 %v2964
    %v3110 = vunpack.c.l.b16 %v2965
    %v3111 = vunpack.c.h.b16 %v2965
    %v3112 = vunpack.c.l.b16 %v2966
    %v3113 = vunpack.c.h.b16 %v2966
    %v3114 = vunpack.c.l.b16 %v2967
    %v3115 = vunpack.c.h.b16 %v2967
    %v3116 = vunpack.c.l.b16 %v2968
    %v3117 = vunpack.c.h.b16 %v2968
    %v3118 = vunpack.c.l.b16 %v2969
    %v3119 = vunpack.c.h.b16 %v2969
    %v3120 = vunpack.c.l.b16 %v2970
    %v3121 = vunpack.c.h.b16 %v2970
    %v3122 = vunpack.c.l.b16 %v2971
    %v3123 = vunpack.c.h.b16 %v2971
    %v3124 = vunpack.c.l.b16 %v2972
    %v3125 = vunpack.c.h.b16 %v2972
    %v3126 = vunpack.c.l.b16 %v2973
    %v3127 = vunpack.c.h.b16 %v2973
    %v3128 = vunpack.c.l.b16 %v2974
    %v3129 = vunpack.c.h.b16 %v2974
    %v3130 = vunpack.c.l.b16 %v2975
    %v3131 = vunpack.c.h.b16 %v2975
    %v3132 = vunpack.c.l.b16 %v2976
    %v3133 = vunpack.c.h.b16 %v2976
    %v3134 = vunpack.c.l.b16 %v2977
    %v3135 = vunpack.c.h.b16 %v2977
    %v3136 = vunpack.c.l.b16 %v2978
    %v3137 = vunpack.c.h.b16 %v2978
    %v3138 = vunpack.c.l.b16 %v2979
    %v3139 = vunpack.c.h.b16 %v2979
    %v3140 = vunpack.c.l.b16 %v2980
    %v3141 = vunpack.c.h.b16 %v2980
    %v3142 = vunpack.c.l.b16 %v2981
    %v3143 = vunpack.c.h.b16 %v2981
    %v3144 = vunpack.c.l.b16 %v2982
    %v3145 = vunpack.c.h.b16 %v2982
    %v3146 = vunpack.c.l.b16 %v2983
    %v3147 = vunpack.c.h.b16 %v2983
    %v3148 = vunpack.c.l.b16 %v2984
    %v3149 = vunpack.c.h.b16 %v2984
    %v3150 = vunpack.c.l.b16 %v2985
    %v3151 = vunpack.c.h.b16 %v2985
    %v3152 = vunpack.c.l.b16 %v2986
    %v3153 = vunpack.c.h.b16 %v2986
    %v3154 = vunpack.c.l.b16 %v2987
    %v3155 = vunpack.c.h.b16 %v2987
    %v3156 = vunpack.c.l.b16 %v2988
    %v3157 = vunpack.c.h.b16 %v2988
    %v3158 = vunpack.c.l.b16 %v2989
    %v3159 = vunpack.c.h.b16 %v2989
    %v3160 = vunpack.c.l.b16 %v2990
    %v3161 = vunpack.c.h.b16 %v2990
    %v3162 = vunpack.c.l.b16 %v2991
    %v3163 = vunpack.c.h.b16 %v2991
    %v3164 = vunpack.c.l.b16 %v2992
    %v3165 = vunpack.c.h.b16 %v2992
    %v3166 = vunpack.c.l.b16 %v2993
    %v3167 = vunpack.c.h.b16 %v2993
    %v3168 = vunpack.c.l.b16 %v2994
    %v3169 = vunpack.c.h.b16 %v2994
    %v3170 = vunpack.c.l.b16 %v2995
    %v3171 = vunpack.c.h.b16 %v2995
    %v3172 = vunpack.c.l.b16 %v2996
    %v3173 = vunpack.c.h.b16 %v2996
    %v3174 = vunpack.c.l.b16 %v2997
    %v3175 = vunpack.c.h.b16 %v2997
    %v3176 = vunpack.c.l.b16 %v2998
    %v3177 = vunpack.c.h.b16 %v2998
    %v3178 = vunpack.c.l.b16 %v2999
    %v3179 = vunpack.c.h.b16 %v2999
    %v3180 = vunpack.c.l.b16 %v3000
    %v3181 = vunpack.c.h.b16 %v3000
    %v3182 = vunpack.c.l.b16 %v3001
    %v3183 = vunpack.c.h.b16 %v3001
    %v3184 = vunpack.c.l.b16 %v3002
    %v3185 = vunpack.c.h.b16 %v3002
    %v3186 = vunpack.c.l.b16 %v3003
    %v3187 = vunpack.c.h.b16 %v3003
    %v3188 = vunpack.c.l.b16 %v3004
    %v3189 = vunpack.c.h.b16 %v3004
    %v3190 = vunpack.c.l.b16 %v3005
    %v3191 = vunpack.c.h.b16 %v3005
    %v3192 = vunpack.c.l.b16 %v3006
    %v3193 = vunpack.c.h.b16 %v3006
    %v3194 = vunpack.c.l.b16 %v3007
    %v3195 = vunpack.c.h.b16 %v3007
    %v3196 = vunpack.c.l.b16 %v3008
    %v3197 = vunpack.c.h.b16 %v3008
    %v3198 = vunpack.c.l.b16 %v3009
    %v3199 = vunpack.c.h.b16 %v3009
    %v3200 = vunpack.c.l.b16 %v3010
    %v3201 = vunpack.c.h.b16 %v3010
    %v3202 = vunpack.c.l.b16 %v3011
    %v3203 = vunpack.c.h.b16 %v3011
    %v3204 = vunpack.c.l.b16 %v3012
    %v3205 = vunpack.c.h.b16 %v3012
    %v3206 = vunpack.c.l.b16 %v3013
    %v3207 = vunpack.c.h.b16 %v3013
    %v3208 = vunpack.c.l.b16 %v3014
    %v3209 = vunpack.c.h.b16 %v3014
    %v3210 = vunpack.c.l.b16 %v3015
    %v3211 = vunpack.c.h.b16 %v3015
    %v3212 = vunpack.c.l.b16 %v3016
    %v3213 = vunpack.c.h.b16 %v3016
    %v3214 = vunpack.c.l.b16 %v3017
    %v3215 = vunpack.c.h.b16 %v3017
    %v3216 = vunpack.c.l.b16 %v3018
    %v3217 = vunpack.c.h.b16 %v3018
    %v3218 = vunpack.c.l.b16 %v3019
    %v3219 = vunpack.c.h.b16 %v3019
    %v3220 = vunpack.c.l.b16 %v3020
    %v3221 = vunpack.c.h.b16 %v3020
    %v3222 = vunpack.c.l.b16 %v3021
    %v3223 = vunpack.c.h.b16 %v3021
    %v3224 = vunpack.c.l.b16 %v3022
    %v3225 = vunpack.c.h.b16 %v3022
    %v3226 = vpack.c.b16 %v3100, %v3098
    %v3227 = vpack.c.b16 %v3101, %v3099
    %v3228 = vpack.c.b16 %v3104, %v3102
    %v3229 = vpack.c.b16 %v3105, %v3103
    %v3230 = vpack.c.b16 %v3108, %v3106
    %v3231 = vpack.c.b16 %v3109, %v3107
    %v3232 = vpack.c.b16 %v3112, %v3110
    %v3233 = vpack.c.b16 %v3113, %v3111
    %v3234 = vpack.c.b16 %v3116, %v3114
    %v3235 = vpack.c.b16 %v3117, %v3115
    %v3236 = vpack.c.b16 %v3120, %v3118
    %v3237 = vpack.c.b16 %v3121, %v3119
    %v3238 = vpack.c.b16 %v3124, %v3122
    %v3239 = vpack.c.b16 %v3125, %v3123
    %v3240 = vpack.c.b16 %v3128, %v3126
    %v3241 = vpack.c.b16 %v3129, %v3127
    %v3242 = vpack.c.b16 %v3132, %v3130
    %v3243 = vpack.c.b16 %v3133, %v3131
    %v3244 = vpack.c.b16 %v3136, %v3134
    %v3245 = vpack.c.b16 %v3137, %v3135
    %v3246 = vpack.c.b16 %v3140, %v3138
    %v3247 = vpack.c.b16 %v3141, %v3139
    %v3248 = vpack.c.b16 %v3144, %v3142
    %v3249 = vpack.c.b16 %v3145, %v3143
    %v3250 = vpack.c.b16 %v3148, %v3146
    %v3251 = vpack.c.b16 %v3149, %v3147
    %v3252 = vpack.c.b16 %v3152, %v3150
    %v3253 = vpack.c.b16 %v3153, %v3151
    %v3254 = vpack.c.b16 %v3156, %v3154
    %v3255 = vpack.c.b16 %v3157, %v3155
    %v3256 = vpack.c.b16 %v3160, %v3158
    %v3257 = vpack.c.b16 %v3161, %v3159
    %v3258 = vpack.c.b16 %v3164, %v3162
    %v3259 = vpack.c.b16 %v3165, %v3163
    %v3260 = vpack.c.b16 %v3168, %v3166
    %v3261 = vpack.c.b16 %v3169, %v3167
    %v3262 = vpack.c.b16 %v3172, %v3170
    %v3263 = vpack.c.b16 %v3173, %v3171
    %v3264 = vpack.c.b16 %v3176, %v3174
    %v3265 = vpack.c.b16 %v3177, %v3175
    %v3266 = vpack.c.b16 %v3180, %v3178
    %v3267 = vpack.c.b16 %v3181, %v3179
    %v3268 = vpack.c.b16 %v3184, %v3182
    %v3269 = vpack.c.b16 %v3185, %v3183
    %v3270 = vpack.c.b16 %v3188, %v3186
    %v3271 = vpack.c.b16 %v3189, %v3187
    %v3272 = vpack.c.b16 %v3192, %v3190
    %v3273 = vpack.c.b16 %v3193, %v3191
    %v3274 = vpack.c.b16 %v3196, %v3194
    %v3275 = vpack.c.b16 %v3197, %v3195
    %v3276 = vpack.c.b16 %v3200, %v3198
    %v3277 = vpack.c.b16 %v3201, %v3199
    %v3278 = vpack.c.b16 %v3204, %v3202
    %v3279 = vpack.c.b16 %v3205, %v3203
    %v3280 = vpack.c.b16 %v3208, %v3206
    %v3281 = vpack.c.b16 %v3209, %v3207
    %v3282 = vpack.c.b16 %v3212, %v3210
    %v3283 = vpack.c.b16 %v3213, %v3211
    %v3284 = vpack.c.b16 %v3216, %v3214
    %v3285 = vpack.c.b16 %v3217, %v3215
    %v3286 = vpack.c.b16 %v3220, %v3218
    %v3287 = vpack.c.b16 %v3221, %v3219
    %v3288 = vpack.c.b16 %v3224, %v3222
    %v3289 = vpack.c.b16 %v3225, %v3223
    %3354 = vmatprep.subr.bf16.mxu0 %v3227
    %3355 = vmatpush1.bf16.msra.mxu0 %v3226
    %3356 = vmatprep.subr.bf16.mxu0 %v3229
    %3357 = vmatpush1.bf16.msra.mxu0 %v3228
    %3358 = vmatprep.subr.bf16.mxu0 %v3231
    %3359 = vmatpush1.bf16.msra.mxu0 %v3230
    %3360 = vmatprep.subr.bf16.mxu0 %v3233
    %3361 = vmatpush1.bf16.msra.mxu0 %v3232
    %3362 = vmatprep.subr.bf16.mxu0 %v3235
    %3363 = vmatpush1.bf16.msra.mxu0 %v3234
    %3364 = vmatprep.subr.bf16.mxu0 %v3237
    %3365 = vmatpush1.bf16.msra.mxu0 %v3236
    %3366 = vmatprep.subr.bf16.mxu0 %v3239
    %3367 = vmatpush1.bf16.msra.mxu0 %v3238
    %3368 = vmatprep.subr.bf16.mxu0 %v3241
    %3369 = vmatpush1.bf16.msra.mxu0 %v3240
    %3370 = vmatprep.subr.bf16.mxu0 %v3243
    %3371 = vmatpush1.bf16.msra.mxu0 %v3242
    %3372 = vmatprep.subr.bf16.mxu0 %v3245
    %3373 = vmatpush1.bf16.msra.mxu0 %v3244
    %3374 = vmatprep.subr.bf16.mxu0 %v3247
    %3375 = vmatpush1.bf16.msra.mxu0 %v3246
    %3376 = vmatprep.subr.bf16.mxu0 %v3249
    %3377 = vmatpush1.bf16.msra.mxu0 %v3248
    %3378 = vmatprep.subr.bf16.mxu0 %v3251
    %3379 = vmatpush1.bf16.msra.mxu0 %v3250
    %3380 = vmatprep.subr.bf16.mxu0 %v3253
    %3381 = vmatpush1.bf16.msra.mxu0 %v3252
    %3382 = vmatprep.subr.bf16.mxu0 %v3255
    %3383 = vmatpush1.bf16.msra.mxu0 %v3254
    %3384 = vmatprep.subr.bf16.mxu0 %v3257
    %3385 = vmatpush1.bf16.msra.mxu0 %v3256
    %3386 = vmatprep.mubr.bf16.mxu0 %v2944
    %3387 = vmatmul.mubr.bf16.gmra.mrb[0].mxu0 %v2943
    %v3388 = vpop.f32.mrb[0].mxu0
    %v3389 = vadd.f32 %v3027, %v3388
    %v3390 = vpop.f32.mrb[0].mxu0
    %v3391 = vadd.f32 %v3031, %v3390
    %v3392 = vpop.f32.mrb[0].mxu0
    %v3393 = vadd.f32 %v3027, %v3392
    %v3394 = vpop.f32.mrb[0].mxu0
    %v3395 = vadd.f32 %v3031, %v3394
    %3396 = vmatprep.mubr.bf16.mxu0 %v2948
    %3397 = vmatmul.mubr.bf16.gmra.mrb[0].mxu0 %v2947
    %v3398 = vpop.f32.mrb[0].mxu0
    %v3399 = vadd.f32 %v3027, %v3398
    %v3400 = vpop.f32.mrb[0].mxu0
    %v3401 = vadd.f32 %v3031, %v3400
    %v3402 = vpop.f32.mrb[0].mxu0
    %v3403 = vadd.f32 %v3027, %v3402
    %v3404 = vpop.f32.mrb[0].mxu0
    %v3405 = vadd.f32 %v3031, %v3404
    %3406 = vmatprep.mubr.bf16.mxu0 %v2952
    %3407 = vmatmul.mubr.bf16.gmra.mrb[0].mxu0 %v2951
    %v3408 = vpop.f32.mrb[0].mxu0
    %v3409 = vadd.f32 %v3027, %v3408
    %v3410 = vpop.f32.mrb[0].mxu0
    %v3411 = vadd.f32 %v3031, %v3410
    %v3412 = vpop.f32.mrb[0].mxu0
    %v3413 = vadd.f32 %v3027, %v3412
    %v3414 = vpop.f32.mrb[0].mxu0
    %v3415 = vadd.f32 %v3031, %v3414
    %3416 = vmatprep.mubr.bf16.mxu0 %v2956
    %3417 = vmatmul.mubr.bf16.gmra.mrb[0].mxu0 %v2955
    %v3418 = vpop.f32.mrb[0].mxu0
    %v3419 = vadd.f32 %v3027, %v3418
    %v3420 = vpop.f32.mrb[0].mxu0
    %v3421 = vadd.f32 %v3031, %v3420
    %v3422 = vpop.f32.mrb[0].mxu0
    %v3423 = vadd.f32 %v3027, %v3422
    %v3424 = vpop.f32.mrb[0].mxu0
    %v3425 = vadd.f32 %v3031, %v3424
    %3426 = vdwg.mxu0
    %3427 = vmatprep.subr.bf16.mxu0 %v3259
    %3428 = vmatpush1.bf16.msra.mxu0 %v3258
    %3429 = vmatprep.subr.bf16.mxu0 %v3261
    %3430 = vmatpush1.bf16.msra.mxu0 %v3260
    %3431 = vmatprep.subr.bf16.mxu0 %v3263
    %3432 = vmatpush1.bf16.msra.mxu0 %v3262
    %3433 = vmatprep.subr.bf16.mxu0 %v3265
    %3434 = vmatpush1.bf16.msra.mxu0 %v3264
    %3435 = vmatprep.subr.bf16.mxu0 %v3267
    %3436 = vmatpush1.bf16.msra.mxu0 %v3266
    %3437 = vmatprep.subr.bf16.mxu0 %v3269
    %3438 = vmatpush1.bf16.msra.mxu0 %v3268
    %3439 = vmatprep.subr.bf16.mxu0 %v3271
    %3440 = vmatpush1.bf16.msra.mxu0 %v3270
    %3441 = vmatprep.subr.bf16.mxu0 %v3273
    %3442 = vmatpush1.bf16.msra.mxu0 %v3272
    %3443 = vmatprep.subr.bf16.mxu0 %v3275
    %3444 = vmatpush1.bf16.msra.mxu0 %v3274
    %3445 = vmatprep.subr.bf16.mxu0 %v3277
    %3446 = vmatpush1.bf16.msra.mxu0 %v3276
    %3447 = vmatprep.subr.bf16.mxu0 %v3279
    %3448 = vmatpush1.bf16.msra.mxu0 %v3278
    %3449 = vmatprep.subr.bf16.mxu0 %v3281
    %3450 = vmatpush1.bf16.msra.mxu0 %v3280
    %3451 = vmatprep.subr.bf16.mxu0 %v3283
    %3452 = vmatpush1.bf16.msra.mxu0 %v3282
    %3453 = vmatprep.subr.bf16.mxu0 %v3285
    %3454 = vmatpush1.bf16.msra.mxu0 %v3284
    %3455 = vmatprep.subr.bf16.mxu0 %v3287
    %3456 = vmatpush1.bf16.msra.mxu0 %v3286
    %3457 = vmatprep.subr.bf16.mxu0 %v3289
    %3458 = vmatpush1.bf16.msra.mxu0 %v3288
    %3459 = vmatprep.mubr.bf16.mxu0 %v2946
    %3460 = vmatmul.mubr.bf16.gmra.mrb[0].mxu0 %v2945
    %v3461 = vpop.f32.mrb[0].mxu0
    %v3462 = vadd.f32 %v3389, %v3461
    %v3463 = vpop.f32.mrb[0].mxu0
    %v3464 = vadd.f32 %v3391, %v3463
    %v3465 = vpop.f32.mrb[0].mxu0
    %v3466 = vadd.f32 %v3393, %v3465
    %v3467 = vpop.f32.mrb[0].mxu0
    %v3468 = vadd.f32 %v3395, %v3467
    %3469 = vmatprep.mubr.bf16.mxu0 %v2950
    %3470 = vmatmul.mubr.bf16.gmra.mrb[0].mxu0 %v2949
    %v3471 = vpop.f32.mrb[0].mxu0
    %v3472 = vadd.f32 %v3399, %v3471
    %v3473 = vpop.f32.mrb[0].mxu0
    %v3474 = vadd.f32 %v3401, %v3473
    %v3475 = vpop.f32.mrb[0].mxu0
    %v3476 = vadd.f32 %v3403, %v3475
    %v3477 = vpop.f32.mrb[0].mxu0
    %v3478 = vadd.f32 %v3405, %v3477
    %3479 = vmatprep.mubr.bf16.mxu0 %v2954
    %3480 = vmatmul.mubr.bf16.gmra.mrb[0].mxu0 %v2953
    %v3481 = vpop.f32.mrb[0].mxu0
    %v3482 = vadd.f32 %v3409, %v3481
    %v3483 = vpop.f32.mrb[0].mxu0
    %v3484 = vadd.f32 %v3411, %v3483
    %v3485 = vpop.f32.mrb[0].mxu0
    %v3486 = vadd.f32 %v3413, %v3485
    %v3487 = vpop.f32.mrb[0].mxu0
    %v3488 = vadd.f32 %v3415, %v3487
    %3489 = vmatprep.mubr.bf16.mxu0 %v2958
    %3490 = vmatmul.mubr.bf16.gmra.mrb[0].mxu0 %v2957
    %v3491 = vpop.f32.mrb[0].mxu0
    %v3492 = vadd.f32 %v3419, %v3491
    %v3493 = vpop.f32.mrb[0].mxu0
    %v3494 = vadd.f32 %v3421, %v3493
    %v3495 = vpop.f32.mrb[0].mxu0
    %v3496 = vadd.f32 %v3423, %v3495
    %v3497 = vpop.f32.mrb[0].mxu0
    %v3498 = vadd.f32 %v3425, %v3497
    %3499 = vdwg.mxu0
    %3500 = vst [vmem:[%s8] sm:$0xff] %v3462
    %3501 = vst [vmem:[%s8 + $0x8] sm:$0xff] %v3464
    %3502 = vst [vmem:[%s8 + $0x10] sm:$0xff] %v3466
    %3503 = vst [vmem:[%s8 + $0x18] sm:$0xff] %v3468
    %3504 = vst [vmem:[%s8 + $0x20] sm:$0xff] %v3472
    %3505 = vst [vmem:[%s8 + $0x28] sm:$0xff] %v3474
    %3506 = vst [vmem:[%s8 + $0x30] sm:$0xff] %v3476
    %3507 = vst [vmem:[%s8 + $0x38] sm:$0xff] %v3478
    %3508 = vst [vmem:[%s8 + $0x40] sm:$0xff] %v3482
    %3509 = vst [vmem:[%s8 + $0x48] sm:$0xff] %v3484
    %3510 = vst [vmem:[%s8 + $0x50] sm:$0xff] %v3486
    %3511 = vst [vmem:[%s8 + $0x58] sm:$0xff] %v3488
    %3512 = vst [vmem:[%s8 + $0x60] sm:$0xff] %v3492
    %3513 = vst [vmem:[%s8 + $0x68] sm:$0xff] %v3494
    %3514 = vst [vmem:[%s8 + $0x70] sm:$0xff] %v3496
    %3515 = vst [vmem:[%s8 + $0x78] sm:$0xff] %v3498
    // Predicated region
    $region50: #{simsiam_forward.1} parent=1 // pred_check
      _
    $region51: #{simsiam_forward.1} parent=1 // pred_check_branch
      %3517 = sbr.rel (0) target = $region53
    $region52: #{simsiam_forward.1} parent=1 // pred_region
      _
    $region53: #{simsiam_forward.1} parent=1 // pred_fallthru
      _
    // Predicated region
    $region54: #{simsiam_forward.1} parent=1 // pred_check
      _
    $region55: #{simsiam_forward.1} parent=1 // pred_check_branch
      %3519 = sbr.rel (0) target = $region57
    $region56: #{simsiam_forward.1} parent=1 // pred_region
      _
    $region57: #{simsiam_forward.1} parent=1 // pred_fallthru
      _
    // Predicated region
    $region58: #{simsiam_forward.1} parent=1 // pred_check
      _
    $region59: #{simsiam_forward.1} parent=1 // pred_check_branch
      %3521 = sbr.rel (0) target = $region61
    $region60: #{simsiam_forward.1} parent=1 // pred_region
      _
    $region61: #{simsiam_forward.1} parent=1 // pred_fallthru
      _
    // Predicated region
    $region62: #{simsiam_forward.1} parent=1 // pred_check
      _
    $region63: #{simsiam_forward.1} parent=1 // pred_check_branch
      %3523 = sbr.rel (0) target = $region65
    $region64: #{simsiam_forward.1} parent=1 // pred_region
      _
    $region65: #{simsiam_forward.1} parent=1 // pred_fallthru
      _
    %3524 = vsyncpa [#allocation4], 1
    %3525 = vsyncpa [#allocation6], 1
    %3526 = vsyncpa [#allocation9], 1

</llo_original>
